<compile_context>
chip_gen: v5e
topology: v5e:2x2
jax: 0.10.0
libtpu: 0.0.40
codegen_flags: <defaults>
</compile_context>

<pallas_src>
import jax
import jax.numpy as jnp
from jax.experimental import pallas as pl
from jax.experimental.pallas import tpu as pltpu
import numpy as np

INPUT_SIZE = 128
HIDDEN = 128
FC1 = 64
OUT = 2
OUT_PAD = 128          # lane-dense output width; real logits live in [:, :OUT]


def lstm_kernel(x_ref,                       # (T, Bp, I)   f32
                w_ih0_ref,                   # (I, 4H)      bf16, gate cols [i,f,o,g]
                b0_ref,                      # (1, 4H)      f32, b_ih0 + b_hh0
                w_rec_hbm,                   # (3, H, 4H)   bf16 in HBM: [w_hh0, w_ih1, w_hh1]
                b1_ref,                      # (1, 4H)      f32, b_ih1 + b_hh1
                fc1_w_ref, fc1_b_ref,        # (H, 64) bf16, (1, 64) f32
                fc2_w_ref, fc2_b_ref,        # (64, OUT_PAD) bf16, (1, OUT_PAD) f32
                out_ref,                     # (Bp, OUT_PAD) f32
                gx_scr,                      # (T, Bp, 4H)  f32 scratch
                w_rec_scr,                   # (3, H, 4H)   bf16 scratch
                dma_sem):
    T, Bp, I = x_ref.shape
    H = HIDDEN

    # ---- start streaming the recurrent weights HBM -> VMEM; hide it behind the
    # hoisted input projection below ----
    w_cp = pltpu.make_async_copy(w_rec_hbm, w_rec_scr, dma_sem)
    w_cp.start()

    # ---- hoisted layer-0 input projection (bias folded in): one big MXU op ----
    x_all = x_ref[...].reshape(T * Bp, I).astype(jnp.bfloat16)       # (T*Bp, I)
    gx = jnp.dot(x_all, w_ih0_ref[...],
                 preferred_element_type=jnp.float32) + b0_ref[...]
    gx_scr[...] = gx.reshape(T, Bp, 4 * H)

    # hoisted broadcast of the layer-1 bias (keep it out of the unrolled loop)
    b1_full = jnp.broadcast_to(b1_ref[...], (Bp, 4 * H))

    # recurrent weights must be resident before the wavefront starts
    w_cp.wait()
    w_hh0 = w_rec_scr[0]                                             # (H, 4H) bf16
    w_ih1 = w_rec_scr[1]
    w_hh1 = w_rec_scr[2]

    def cell(gates, c_prev):
        # gate columns are [i, f, o, g]: one wide sigmoid + one tanh (EUP)
        sig = jax.nn.sigmoid(gates[:, :3 * H])
        g_g = jnp.tanh(gates[:, 3 * H:])
        i_g = sig[:, :H]
        f_g = sig[:, H:2 * H]
        o_g = sig[:, 2 * H:3 * H]
        c_new = f_g * c_prev + i_g * g_g
        h_new = o_g * jnp.tanh(c_new)
        return h_new, c_new

    h0 = jnp.zeros((Bp, H), jnp.float32)
    c0 = jnp.zeros((Bp, H), jnp.float32)
    h1 = jnp.zeros((Bp, H), jnp.float32)
    c1 = jnp.zeros((Bp, H), jnp.float32)

    # ---- fused two-layer wavefront, fully unrolled over the (static) T steps ----
    for t in range(T):
        # layer-1 recurrent term depends only on h1_{t-1}: off the serial path,
        # the scheduler can overlap it with layer-0's matmul + cell for step t.
        r1 = jnp.dot(h1.astype(jnp.bfloat16), w_hh1,
                     preferred_element_type=jnp.float32)

        # layer 0: input projection precomputed, only the recurrent matmul remains
        g0 = gx_scr[t] + jnp.dot(h0.astype(jnp.bfloat16), w_hh0,
                                 preferred_element_type=jnp.float32)
        h0, c0 = cell(g0, c0)

        # layer 1
        g1 = r1 + jnp.dot(h0.astype(jnp.bfloat16), w_ih1,
                          preferred_element_type=jnp.float32) + b1_full
        h1, c1 = cell(g1, c1)

    # ---- fc1 -> ReLU -> fc2 on the final layer-1 hidden state ----
    z = jnp.dot(h1.astype(jnp.bfloat16), fc1_w_ref[...],
                preferred_element_type=jnp.float32) + fc1_b_ref[...]
    z = jnp.maximum(z, 0.0)
    out_ref[...] = (jnp.dot(z.astype(jnp.bfloat16), fc2_w_ref[...],
                            preferred_element_type=jnp.float32) + fc2_b_ref[...])


def prepare_params(params):
    """One-time weight prep: transpose, fold biases, permute gates to [i,f,o,g],
    cast matmul weights to bf16, stack the three recurrent matrices, pad fc2 to
    a lane-dense 128-wide output."""
    (w_ih0, w_hh0, b_ih0, b_hh0,
     w_ih1, w_hh1, b_ih1, b_hh1,
     fc1_w, fc1_b, fc2_w, fc2_b) = params

    def reorder_cols(w_t):                      # (in, 4H): [i,f,g,o] -> [i,f,o,g]
        i, f, g, o = jnp.split(w_t, 4, axis=-1)
        return jnp.concatenate([i, f, o, g], axis=-1)

    def reorder_bias(b):
        i, f, g, o = jnp.split(b, 4)
        return jnp.concatenate([i, f, o, g]).reshape(1, -1)

    bf16 = jnp.bfloat16

    w_ih0_t = reorder_cols(jnp.transpose(w_ih0)).astype(bf16)            # (I, 4H)
    b0 = reorder_bias(b_ih0 + b_hh0)                                     # (1, 4H) f32
    w_rec = jnp.stack([reorder_cols(jnp.transpose(w_hh0)),               # (3, H, 4H)
                       reorder_cols(jnp.transpose(w_ih1)),
                       reorder_cols(jnp.transpose(w_hh1))]).astype(bf16)
    b1 = reorder_bias(b_ih1 + b_hh1)                                     # (1, 4H) f32

    fc1_w_t = jnp.transpose(fc1_w).astype(bf16)                          # (H, 64)
    fc1_b_r = fc1_b.reshape(1, -1)                                       # (1, 64) f32
    fc2_w_p = (jnp.zeros((FC1, OUT_PAD), jnp.float32)
               .at[:, :OUT].set(jnp.transpose(fc2_w)).astype(bf16))      # (64, 128)
    fc2_b_p = jnp.zeros((1, OUT_PAD), jnp.float32).at[0, :OUT].set(fc2_b)

    return (w_ih0_t, b0, w_rec, b1, fc1_w_t, fc1_b_r, fc2_w_p, fc2_b_p)


def _forward_impl(x, prepared):
    """x: (B, 1, INPUT_SIZE, T) float32 — mirrors the PyTorch module's input."""
    B = x.shape[0]
    T = x.shape[-1]
    Bp = ((B + 7) // 8) * 8                                  # sublane granule

    # squeeze(1) + permute(0,2,1) -> (B, T, I); kernel wants time-major (T, Bp, I)
    x_tbi = jnp.transpose(x[:, 0, :, :], (2, 0, 1)).astype(jnp.float32)
    if Bp != B:
        x_tbi = jnp.pad(x_tbi, ((0, 0), (0, Bp - B), (0, 0)))

    vmem = pl.BlockSpec(memory_space=pltpu.MemorySpace.VMEM)
    hbm = pl.BlockSpec(memory_space=pl.ANY)                  # w_rec: DMA'd manually
    in_specs = [vmem,                                        # x
                vmem, vmem,                                  # w_ih0, b0
                hbm,                                         # w_rec (3,H,4H)
                vmem,                                        # b1
                vmem, vmem,                                  # fc1_w, fc1_b
                vmem, vmem]                                  # fc2_w, fc2_b

    out = pl.pallas_call(
        lstm_kernel,
        out_shape=jax.ShapeDtypeStruct((Bp, OUT_PAD), jnp.float32),
        in_specs=in_specs,
        out_specs=vmem,
        scratch_shapes=[
            pltpu.VMEM((T, Bp, 4 * HIDDEN), jnp.float32),    # hoisted input projection
            pltpu.VMEM((3, HIDDEN, 4 * HIDDEN), jnp.bfloat16),  # recurrent weights
            pltpu.SemaphoreType.DMA,
        ],
    )(x_tbi, *prepared)
    return out[:B, :OUT]


lstm_forward = jax.jit(_forward_impl)


def ref_forward(x, params):
    """Pure-JAX reference matching nn.LSTM + fc semantics (original gate order)."""
    (w_ih0, w_hh0, b_ih0, b_hh0,
     w_ih1, w_hh1, b_ih1, b_hh1,
     fc1_w, fc1_b, fc2_w, fc2_b) = params
    xs = jnp.transpose(x[:, 0], (0, 2, 1))              # (B, T, I)
    H = HIDDEN

    def layer(seq, w_ih, w_hh, b_ih, b_hh):
        B, T, _ = seq.shape
        h = jnp.zeros((B, H), jnp.float32)
        c = jnp.zeros((B, H), jnp.float32)
        outs = []
        for t in range(T):
            g = seq[:, t] @ w_ih.T + b_ih + h @ w_hh.T + b_hh
            i_g = jax.nn.sigmoid(g[:, :H])
            f_g = jax.nn.sigmoid(g[:, H:2 * H])
            g_g = jnp.tanh(g[:, 2 * H:3 * H])
            o_g = jax.nn.sigmoid(g[:, 3 * H:])
            c = f_g * c + i_g * g_g
            h = o_g * jnp.tanh(c)
            outs.append(h)
        return jnp.stack(outs, axis=1)

    h1 = layer(xs, w_ih0, w_hh0, b_ih0, b_hh0)
    h2 = layer(h1, w_ih1, w_hh1, b_ih1, b_hh1)
    z = jnp.maximum(h2[:, -1] @ fc1_w.T + fc1_b, 0.0)
    return z @ fc2_w.T + fc2_b


def init_params(key):
    ks = jax.random.split(key, 12)
    k_lstm = 1.0 / np.sqrt(HIDDEN)
    k_fc1 = 1.0 / np.sqrt(HIDDEN)
    k_fc2 = 1.0 / np.sqrt(FC1)
    u = lambda k, shape, bound: jax.random.uniform(k, shape, jnp.float32, -bound, bound)
    return (
        u(ks[0], (4 * HIDDEN, INPUT_SIZE), k_lstm),   # weight_ih_l0
        u(ks[1], (4 * HIDDEN, HIDDEN), k_lstm),       # weight_hh_l0
        u(ks[2], (4 * HIDDEN,), k_lstm),              # bias_ih_l0
        u(ks[3], (4 * HIDDEN,), k_lstm),              # bias_hh_l0
        u(ks[4], (4 * HIDDEN, HIDDEN), k_lstm),       # weight_ih_l1
        u(ks[5], (4 * HIDDEN, HIDDEN), k_lstm),       # weight_hh_l1
        u(ks[6], (4 * HIDDEN,), k_lstm),              # bias_ih_l1
        u(ks[7], (4 * HIDDEN,), k_lstm),              # bias_hh_l1
        u(ks[8], (FC1, HIDDEN), k_fc1),               # fc1.weight
        u(ks[9], (FC1,), k_fc1),                      # fc1.bias
        u(ks[10], (OUT, FC1), k_fc2),                 # fc2.weight
        u(ks[11], (OUT,), k_fc2),                     # fc2.bias
    )


if __name__ == "__main__":
    B, T = 4, 8
    key = jax.random.PRNGKey(0)
    k_x, k_p = jax.random.split(key)
    x = jax.random.normal(k_x, (B, 1, INPUT_SIZE, T), jnp.float32)
    params = init_params(k_p)

    prepared = jax.tree_util.tree_map(jax.block_until_ready, prepare_params(params))

    out = jax.block_until_ready(lstm_forward(x, prepared))

    with jax.default_matmul_precision("highest"):
        ref = jax.block_until_ready(ref_forward(x, params))

    assert out.shape == (B, OUT), out.shape
    np.testing.assert_allclose(np.asarray(out), np.asarray(ref), rtol=5e-3, atol=5e-3)
    print("KERNEL_OK")
</pallas_src>

<mosaic_0001>
module attributes {stable_mosaic.version = 11 : i64} {
  func.func @lstm_kernel(%arg0: memref<8x8x128xf32, #tpu.memory_space<vmem>>, %arg1: memref<128x512xbf16, #tpu.memory_space<vmem>>, %arg2: memref<1x512xf32, #tpu.memory_space<vmem>>, %arg3: memref<3x128x512xbf16, #tpu.memory_space<any>>, %arg4: memref<1x512xf32, #tpu.memory_space<vmem>>, %arg5: memref<128x64xbf16, #tpu.memory_space<vmem>>, %arg6: memref<1x64xf32, #tpu.memory_space<vmem>>, %arg7: memref<64x128xbf16, #tpu.memory_space<vmem>>, %arg8: memref<1x128xf32, #tpu.memory_space<vmem>>, %arg9: memref<8x128xf32, #tpu.memory_space<vmem>>, %arg10: memref<8x8x512xf32, #tpu.memory_space<vmem>>, %arg11: memref<3x128x512xbf16, #tpu.memory_space<vmem>>, %arg12: memref<!tpu.dma_semaphore, #tpu.memory_space<semaphore_mem>>) attributes {dimension_semantics = [], scalar_prefetch = 0 : i64, scratch_operands = 3 : i64, tpu.core_type = #tpu.core_type<tc>} {
    tpu.enqueue_dma source(%arg3 : memref<3x128x512xbf16, #tpu.memory_space<any>>) target(%arg11 : memref<3x128x512xbf16, #tpu.memory_space<vmem>>) target_semaphore(%arg12 : memref<!tpu.dma_semaphore, #tpu.memory_space<semaphore_mem>>)
    %c0 = arith.constant 0 : index
    %c0_0 = arith.constant 0 : index
    %c0_1 = arith.constant 0 : index
    %0 = vector.load %arg0[%c0, %c0_0, %c0_1] : memref<8x8x128xf32, #tpu.memory_space<vmem>>, vector<8x8x128xf32>
    %1 = vector.shape_cast %0 : vector<8x8x128xf32> to vector<64x128xf32>
    %2 = arith.truncf %1 : vector<64x128xf32> to vector<64x128xbf16>
    %c0_2 = arith.constant 0 : index
    %c0_3 = arith.constant 0 : index
    %3 = vector.load %arg1[%c0_2, %c0_3] : memref<128x512xbf16, #tpu.memory_space<vmem>>, vector<128x512xbf16>
    %cst = arith.constant dense<0.000000e+00> : vector<64x512xf32>
    %4 = tpu.matmul %2, %3, %cst {dimension_numbers = #tpu.dot_dimension_numbers<[1], [0], [0], [1], [0, 0, 1, 1], [], []>} : vector<64x128xbf16>, vector<128x512xbf16>, vector<64x512xf32> -> vector<64x512xf32>
    %c0_4 = arith.constant 0 : index
    %c0_5 = arith.constant 0 : index
    %5 = vector.load %arg2[%c0_4, %c0_5] : memref<1x512xf32, #tpu.memory_space<vmem>>, vector<1x512xf32>
    %6 = vector.broadcast %5 : vector<1x512xf32> to vector<64x512xf32>
    %7 = arith.addf %4, %6 : vector<64x512xf32>
    %8 = vector.shape_cast %7 : vector<64x512xf32> to vector<8x8x512xf32>
    %c0_6 = arith.constant 0 : index
    %c0_7 = arith.constant 0 : index
    %c0_8 = arith.constant 0 : index
    %9 = vector.load %arg10[%c0_6, %c0_7, %c0_8] : memref<8x8x512xf32, #tpu.memory_space<vmem>>, vector<8x8x512xf32>
    tpu.vector_store %arg10[%c0_6, %c0_7, %c0_8], %8 {strides = array<i32>} : memref<8x8x512xf32, #tpu.memory_space<vmem>>, vector<8x8x512xf32>,
    %c0_9 = arith.constant 0 : index
    %c0_10 = arith.constant 0 : index
    %10 = vector.load %arg4[%c0_9, %c0_10] : memref<1x512xf32, #tpu.memory_space<vmem>>, vector<1x512xf32>
    %11 = vector.shape_cast %10 : vector<1x512xf32> to vector<1x512xf32>
    %12 = vector.broadcast %11 : vector<1x512xf32> to vector<8x512xf32>
    tpu.wait_dma2 semaphore(%arg12 : memref<!tpu.dma_semaphore, #tpu.memory_space<semaphore_mem>>) src(%arg3 : memref<3x128x512xbf16, #tpu.memory_space<any>>) dst(%arg11 : memref<3x128x512xbf16, #tpu.memory_space<vmem>>)
    %c0_11 = arith.constant 0 : index
    %c0_12 = arith.constant 0 : index
    %c0_13 = arith.constant 0 : index
    %13 = vector.load %arg11[%c0_11, %c0_12, %c0_13] : memref<3x128x512xbf16, #tpu.memory_space<vmem>>, vector<1x128x512xbf16>
    %14 = vector.shape_cast %13 : vector<1x128x512xbf16> to vector<128x512xbf16>
    %c1 = arith.constant 1 : index
    %c0_14 = arith.constant 0 : index
    %c0_15 = arith.constant 0 : index
    %15 = vector.load %arg11[%c1, %c0_14, %c0_15] : memref<3x128x512xbf16, #tpu.memory_space<vmem>>, vector<1x128x512xbf16>
    %16 = vector.shape_cast %15 : vector<1x128x512xbf16> to vector<128x512xbf16>
    %c2 = arith.constant 2 : index
    %c0_16 = arith.constant 0 : index
    %c0_17 = arith.constant 0 : index
    %17 = vector.load %arg11[%c2, %c0_16, %c0_17] : memref<3x128x512xbf16, #tpu.memory_space<vmem>>, vector<1x128x512xbf16>
    %18 = vector.shape_cast %17 : vector<1x128x512xbf16> to vector<128x512xbf16>
    %cst_18 = arith.constant 0.000000e+00 : f32
    %19 = vector.broadcast %cst_18 : f32 to vector<8x128xf32>
    %cst_19 = arith.constant 0.000000e+00 : f32
    %20 = vector.broadcast %cst_19 : f32 to vector<8x128xf32>
    %cst_20 = arith.constant 0.000000e+00 : f32
    %21 = vector.broadcast %cst_20 : f32 to vector<8x128xf32>
    %cst_21 = arith.constant 0.000000e+00 : f32
    %22 = vector.broadcast %cst_21 : f32 to vector<8x128xf32>
    %23 = arith.truncf %21 : vector<8x128xf32> to vector<8x128xbf16>
    %cst_22 = arith.constant dense<0.000000e+00> : vector<8x512xf32>
    %24 = tpu.matmul %23, %18, %cst_22 {dimension_numbers = #tpu.dot_dimension_numbers<[1], [0], [0], [1], [0, 0, 1, 1], [], []>} : vector<8x128xbf16>, vector<128x512xbf16>, vector<8x512xf32> -> vector<8x512xf32>
    %c0_23 = arith.constant 0 : index
    %c0_24 = arith.constant 0 : index
    %c0_25 = arith.constant 0 : index
    %25 = vector.load %arg10[%c0_23, %c0_24, %c0_25] : memref<8x8x512xf32, #tpu.memory_space<vmem>>, vector<1x8x512xf32>
    %26 = vector.shape_cast %25 : vector<1x8x512xf32> to vector<8x512xf32>
    %27 = arith.truncf %19 : vector<8x128xf32> to vector<8x128xbf16>
    %cst_26 = arith.constant dense<0.000000e+00> : vector<8x512xf32>
    %28 = tpu.matmul %27, %14, %cst_26 {dimension_numbers = #tpu.dot_dimension_numbers<[1], [0], [0], [1], [0, 0, 1, 1], [], []>} : vector<8x128xbf16>, vector<128x512xbf16>, vector<8x512xf32> -> vector<8x512xf32>
    %29 = arith.addf %26, %28 : vector<8x512xf32>
    %30 = vector.extract_strided_slice %29 {offsets = [0, 0], sizes = [8, 384], strides = [1, 1]} : vector<8x512xf32> to vector<8x384xf32>
    %31 = arith.negf %30 : vector<8x384xf32>
    %32 = math.exp %31 : vector<8x384xf32>
    %cst_27 = arith.constant 1.000000e+00 : f32
    %33 = vector.broadcast %cst_27 : f32 to vector<8x384xf32>
    %34 = arith.addf %33, %32 : vector<8x384xf32>
    %35 = arith.divf %33, %34 : vector<8x384xf32>
    %36 = vector.extract_strided_slice %29 {offsets = [0, 384], sizes = [8, 128], strides = [1, 1]} : vector<8x512xf32> to vector<8x128xf32>
    %37 = math.tanh %36 : vector<8x128xf32>
    %38 = vector.extract_strided_slice %35 {offsets = [0, 0], sizes = [8, 128], strides = [1, 1]} : vector<8x384xf32> to vector<8x128xf32>
    %39 = vector.extract_strided_slice %35 {offsets = [0, 128], sizes = [8, 128], strides = [1, 1]} : vector<8x384xf32> to vector<8x128xf32>
    %40 = vector.extract_strided_slice %35 {offsets = [0, 256], sizes = [8, 128], strides = [1, 1]} : vector<8x384xf32> to vector<8x128xf32>
    %41 = arith.mulf %39, %20 : vector<8x128xf32>
    %42 = arith.mulf %38, %37 : vector<8x128xf32>
    %43 = arith.addf %41, %42 : vector<8x128xf32>
    %44 = math.tanh %43 : vector<8x128xf32>
    %45 = arith.mulf %40, %44 : vector<8x128xf32>
    %46 = arith.truncf %45 : vector<8x128xf32> to vector<8x128xbf16>
    %cst_28 = arith.constant dense<0.000000e+00> : vector<8x512xf32>
    %47 = tpu.matmul %46, %16, %cst_28 {dimension_numbers = #tpu.dot_dimension_numbers<[1], [0], [0], [1], [0, 0, 1, 1], [], []>} : vector<8x128xbf16>, vector<128x512xbf16>, vector<8x512xf32> -> vector<8x512xf32>
    %48 = arith.addf %24, %47 : vector<8x512xf32>
    %49 = arith.addf %48, %12 : vector<8x512xf32>
    %50 = vector.extract_strided_slice %49 {offsets = [0, 0], sizes = [8, 384], strides = [1, 1]} : vector<8x512xf32> to vector<8x384xf32>
    %51 = arith.negf %50 : vector<8x384xf32>
    %52 = math.exp %51 : vector<8x384xf32>
    %cst_29 = arith.constant 1.000000e+00 : f32
    %53 = vector.broadcast %cst_29 : f32 to vector<8x384xf32>
    %54 = arith.addf %53, %52 : vector<8x384xf32>
    %55 = arith.divf %53, %54 : vector<8x384xf32>
    %56 = vector.extract_strided_slice %49 {offsets = [0, 384], sizes = [8, 128], strides = [1, 1]} : vector<8x512xf32> to vector<8x128xf32>
    %57 = math.tanh %56 : vector<8x128xf32>
    %58 = vector.extract_strided_slice %55 {offsets = [0, 0], sizes = [8, 128], strides = [1, 1]} : vector<8x384xf32> to vector<8x128xf32>
    %59 = vector.extract_strided_slice %55 {offsets = [0, 128], sizes = [8, 128], strides = [1, 1]} : vector<8x384xf32> to vector<8x128xf32>
    %60 = vector.extract_strided_slice %55 {offsets = [0, 256], sizes = [8, 128], strides = [1, 1]} : vector<8x384xf32> to vector<8x128xf32>
    %61 = arith.mulf %59, %22 : vector<8x128xf32>
    %62 = arith.mulf %58, %57 : vector<8x128xf32>
    %63 = arith.addf %61, %62 : vector<8x128xf32>
    %64 = math.tanh %63 : vector<8x128xf32>
    %65 = arith.mulf %60, %64 : vector<8x128xf32>
    %66 = arith.truncf %65 : vector<8x128xf32> to vector<8x128xbf16>
    %cst_30 = arith.constant dense<0.000000e+00> : vector<8x512xf32>
    %67 = tpu.matmul %66, %18, %cst_30 {dimension_numbers = #tpu.dot_dimension_numbers<[1], [0], [0], [1], [0, 0, 1, 1], [], []>} : vector<8x128xbf16>, vector<128x512xbf16>, vector<8x512xf32> -> vector<8x512xf32>
    %c1_31 = arith.constant 1 : index
    %c0_32 = arith.constant 0 : index
    %c0_33 = arith.constant 0 : index
    %68 = vector.load %arg10[%c1_31, %c0_32, %c0_33] : memref<8x8x512xf32, #tpu.memory_space<vmem>>, vector<1x8x512xf32>
    %69 = vector.shape_cast %68 : vector<1x8x512xf32> to vector<8x512xf32>
    %70 = arith.truncf %45 : vector<8x128xf32> to vector<8x128xbf16>
    %cst_34 = arith.constant dense<0.000000e+00> : vector<8x512xf32>
    %71 = tpu.matmul %70, %14, %cst_34 {dimension_numbers = #tpu.dot_dimension_numbers<[1], [0], [0], [1], [0, 0, 1, 1], [], []>} : vector<8x128xbf16>, vector<128x512xbf16>, vector<8x512xf32> -> vector<8x512xf32>
    %72 = arith.addf %69, %71 : vector<8x512xf32>
    %73 = vector.extract_strided_slice %72 {offsets = [0, 0], sizes = [8, 384], strides = [1, 1]} : vector<8x512xf32> to vector<8x384xf32>
    %74 = arith.negf %73 : vector<8x384xf32>
    %75 = math.exp %74 : vector<8x384xf32>
    %cst_35 = arith.constant 1.000000e+00 : f32
    %76 = vector.broadcast %cst_35 : f32 to vector<8x384xf32>
    %77 = arith.addf %76, %75 : vector<8x384xf32>
    %78 = arith.divf %76, %77 : vector<8x384xf32>
    %79 = vector.extract_strided_slice %72 {offsets = [0, 384], sizes = [8, 128], strides = [1, 1]} : vector<8x512xf32> to vector<8x128xf32>
    %80 = math.tanh %79 : vector<8x128xf32>
    %81 = vector.extract_strided_slice %78 {offsets = [0, 0], sizes = [8, 128], strides = [1, 1]} : vector<8x384xf32> to vector<8x128xf32>
    %82 = vector.extract_strided_slice %78 {offsets = [0, 128], sizes = [8, 128], strides = [1, 1]} : vector<8x384xf32> to vector<8x128xf32>
    %83 = vector.extract_strided_slice %78 {offsets = [0, 256], sizes = [8, 128], strides = [1, 1]} : vector<8x384xf32> to vector<8x128xf32>
    %84 = arith.mulf %82, %43 : vector<8x128xf32>
    %85 = arith.mulf %81, %80 : vector<8x128xf32>
    %86 = arith.addf %84, %85 : vector<8x128xf32>
    %87 = math.tanh %86 : vector<8x128xf32>
    %88 = arith.mulf %83, %87 : vector<8x128xf32>
    %89 = arith.truncf %88 : vector<8x128xf32> to vector<8x128xbf16>
    %cst_36 = arith.constant dense<0.000000e+00> : vector<8x512xf32>
    %90 = tpu.matmul %89, %16, %cst_36 {dimension_numbers = #tpu.dot_dimension_numbers<[1], [0], [0], [1], [0, 0, 1, 1], [], []>} : vector<8x128xbf16>, vector<128x512xbf16>, vector<8x512xf32> -> vector<8x512xf32>
    %91 = arith.addf %67, %90 : vector<8x512xf32>
    %92 = arith.addf %91, %12 : vector<8x512xf32>
    %93 = vector.extract_strided_slice %92 {offsets = [0, 0], sizes = [8, 384], strides = [1, 1]} : vector<8x512xf32> to vector<8x384xf32>
    %94 = arith.negf %93 : vector<8x384xf32>
    %95 = math.exp %94 : vector<8x384xf32>
    %cst_37 = arith.constant 1.000000e+00 : f32
    %96 = vector.broadcast %cst_37 : f32 to vector<8x384xf32>
    %97 = arith.addf %96, %95 : vector<8x384xf32>
    %98 = arith.divf %96, %97 : vector<8x384xf32>
    %99 = vector.extract_strided_slice %92 {offsets = [0, 384], sizes = [8, 128], strides = [1, 1]} : vector<8x512xf32> to vector<8x128xf32>
    %100 = math.tanh %99 : vector<8x128xf32>
    %101 = vector.extract_strided_slice %98 {offsets = [0, 0], sizes = [8, 128], strides = [1, 1]} : vector<8x384xf32> to vector<8x128xf32>
    %102 = vector.extract_strided_slice %98 {offsets = [0, 128], sizes = [8, 128], strides = [1, 1]} : vector<8x384xf32> to vector<8x128xf32>
    %103 = vector.extract_strided_slice %98 {offsets = [0, 256], sizes = [8, 128], strides = [1, 1]} : vector<8x384xf32> to vector<8x128xf32>
    %104 = arith.mulf %102, %63 : vector<8x128xf32>
    %105 = arith.mulf %101, %100 : vector<8x128xf32>
    %106 = arith.addf %104, %105 : vector<8x128xf32>
    %107 = math.tanh %106 : vector<8x128xf32>
    %108 = arith.mulf %103, %107 : vector<8x128xf32>
    %109 = arith.truncf %108 : vector<8x128xf32> to vector<8x128xbf16>
    %cst_38 = arith.constant dense<0.000000e+00> : vector<8x512xf32>
    %110 = tpu.matmul %109, %18, %cst_38 {dimension_numbers = #tpu.dot_dimension_numbers<[1], [0], [0], [1], [0, 0, 1, 1], [], []>} : vector<8x128xbf16>, vector<128x512xbf16>, vector<8x512xf32> -> vector<8x512xf32>
    %c2_39 = arith.constant 2 : index
    %c0_40 = arith.constant 0 : index
    %c0_41 = arith.constant 0 : index
    %111 = vector.load %arg10[%c2_39, %c0_40, %c0_41] : memref<8x8x512xf32, #tpu.memory_space<vmem>>, vector<1x8x512xf32>
    %112 = vector.shape_cast %111 : vector<1x8x512xf32> to vector<8x512xf32>
    %113 = arith.truncf %88 : vector<8x128xf32> to vector<8x128xbf16>
    %cst_42 = arith.constant dense<0.000000e+00> : vector<8x512xf32>
    %114 = tpu.matmul %113, %14, %cst_42 {dimension_numbers = #tpu.dot_dimension_numbers<[1], [0], [0], [1], [0, 0, 1, 1], [], []>} : vector<8x128xbf16>, vector<128x512xbf16>, vector<8x512xf32> -> vector<8x512xf32>
    %115 = arith.addf %112, %114 : vector<8x512xf32>
    %116 = vector.extract_strided_slice %115 {offsets = [0, 0], sizes = [8, 384], strides = [1, 1]} : vector<8x512xf32> to vector<8x384xf32>
    %117 = arith.negf %116 : vector<8x384xf32>
    %118 = math.exp %117 : vector<8x384xf32>
    %cst_43 = arith.constant 1.000000e+00 : f32
    %119 = vector.broadcast %cst_43 : f32 to vector<8x384xf32>
    %120 = arith.addf %119, %118 : vector<8x384xf32>
    %121 = arith.divf %119, %120 : vector<8x384xf32>
    %122 = vector.extract_strided_slice %115 {offsets = [0, 384], sizes = [8, 128], strides = [1, 1]} : vector<8x512xf32> to vector<8x128xf32>
    %123 = math.tanh %122 : vector<8x128xf32>
    %124 = vector.extract_strided_slice %121 {offsets = [0, 0], sizes = [8, 128], strides = [1, 1]} : vector<8x384xf32> to vector<8x128xf32>
    %125 = vector.extract_strided_slice %121 {offsets = [0, 128], sizes = [8, 128], strides = [1, 1]} : vector<8x384xf32> to vector<8x128xf32>
    %126 = vector.extract_strided_slice %121 {offsets = [0, 256], sizes = [8, 128], strides = [1, 1]} : vector<8x384xf32> to vector<8x128xf32>
    %127 = arith.mulf %125, %86 : vector<8x128xf32>
    %128 = arith.mulf %124, %123 : vector<8x128xf32>
    %129 = arith.addf %127, %128 : vector<8x128xf32>
    %130 = math.tanh %129 : vector<8x128xf32>
    %131 = arith.mulf %126, %130 : vector<8x128xf32>
    %132 = arith.truncf %131 : vector<8x128xf32> to vector<8x128xbf16>
    %cst_44 = arith.constant dense<0.000000e+00> : vector<8x512xf32>
    %133 = tpu.matmul %132, %16, %cst_44 {dimension_numbers = #tpu.dot_dimension_numbers<[1], [0], [0], [1], [0, 0, 1, 1], [], []>} : vector<8x128xbf16>, vector<128x512xbf16>, vector<8x512xf32> -> vector<8x512xf32>
    %134 = arith.addf %110, %133 : vector<8x512xf32>
    %135 = arith.addf %134, %12 : vector<8x512xf32>
    %136 = vector.extract_strided_slice %135 {offsets = [0, 0], sizes = [8, 384], strides = [1, 1]} : vector<8x512xf32> to vector<8x384xf32>
    %137 = arith.negf %136 : vector<8x384xf32>
    %138 = math.exp %137 : vector<8x384xf32>
    %cst_45 = arith.constant 1.000000e+00 : f32
    %139 = vector.broadcast %cst_45 : f32 to vector<8x384xf32>
    %140 = arith.addf %139, %138 : vector<8x384xf32>
    %141 = arith.divf %139, %140 : vector<8x384xf32>
    %142 = vector.extract_strided_slice %135 {offsets = [0, 384], sizes = [8, 128], strides = [1, 1]} : vector<8x512xf32> to vector<8x128xf32>
    %143 = math.tanh %142 : vector<8x128xf32>
    %144 = vector.extract_strided_slice %141 {offsets = [0, 0], sizes = [8, 128], strides = [1, 1]} : vector<8x384xf32> to vector<8x128xf32>
    %145 = vector.extract_strided_slice %141 {offsets = [0, 128], sizes = [8, 128], strides = [1, 1]} : vector<8x384xf32> to vector<8x128xf32>
    %146 = vector.extract_strided_slice %141 {offsets = [0, 256], sizes = [8, 128], strides = [1, 1]} : vector<8x384xf32> to vector<8x128xf32>
    %147 = arith.mulf %145, %106 : vector<8x128xf32>
    %148 = arith.mulf %144, %143 : vector<8x128xf32>
    %149 = arith.addf %147, %148 : vector<8x128xf32>
    %150 = math.tanh %149 : vector<8x128xf32>
    %151 = arith.mulf %146, %150 : vector<8x128xf32>
    %152 = arith.truncf %151 : vector<8x128xf32> to vector<8x128xbf16>
    %cst_46 = arith.constant dense<0.000000e+00> : vector<8x512xf32>
    %153 = tpu.matmul %152, %18, %cst_46 {dimension_numbers = #tpu.dot_dimension_numbers<[1], [0], [0], [1], [0, 0, 1, 1], [], []>} : vector<8x128xbf16>, vector<128x512xbf16>, vector<8x512xf32> -> vector<8x512xf32>
    %c3 = arith.constant 3 : index
    %c0_47 = arith.constant 0 : index
    %c0_48 = arith.constant 0 : index
    %154 = vector.load %arg10[%c3, %c0_47, %c0_48] : memref<8x8x512xf32, #tpu.memory_space<vmem>>, vector<1x8x512xf32>
    %155 = vector.shape_cast %154 : vector<1x8x512xf32> to vector<8x512xf32>
    %156 = arith.truncf %131 : vector<8x128xf32> to vector<8x128xbf16>
    %cst_49 = arith.constant dense<0.000000e+00> : vector<8x512xf32>
    %157 = tpu.matmul %156, %14, %cst_49 {dimension_numbers = #tpu.dot_dimension_numbers<[1], [0], [0], [1], [0, 0, 1, 1], [], []>} : vector<8x128xbf16>, vector<128x512xbf16>, vector<8x512xf32> -> vector<8x512xf32>
    %158 = arith.addf %155, %157 : vector<8x512xf32>
    %159 = vector.extract_strided_slice %158 {offsets = [0, 0], sizes = [8, 384], strides = [1, 1]} : vector<8x512xf32> to vector<8x384xf32>
    %160 = arith.negf %159 : vector<8x384xf32>
    %161 = math.exp %160 : vector<8x384xf32>
    %cst_50 = arith.constant 1.000000e+00 : f32
    %162 = vector.broadcast %cst_50 : f32 to vector<8x384xf32>
    %163 = arith.addf %162, %161 : vector<8x384xf32>
    %164 = arith.divf %162, %163 : vector<8x384xf32>
    %165 = vector.extract_strided_slice %158 {offsets = [0, 384], sizes = [8, 128], strides = [1, 1]} : vector<8x512xf32> to vector<8x128xf32>
    %166 = math.tanh %165 : vector<8x128xf32>
    %167 = vector.extract_strided_slice %164 {offsets = [0, 0], sizes = [8, 128], strides = [1, 1]} : vector<8x384xf32> to vector<8x128xf32>
    %168 = vector.extract_strided_slice %164 {offsets = [0, 128], sizes = [8, 128], strides = [1, 1]} : vector<8x384xf32> to vector<8x128xf32>
    %169 = vector.extract_strided_slice %164 {offsets = [0, 256], sizes = [8, 128], strides = [1, 1]} : vector<8x384xf32> to vector<8x128xf32>
    %170 = arith.mulf %168, %129 : vector<8x128xf32>
    %171 = arith.mulf %167, %166 : vector<8x128xf32>
    %172 = arith.addf %170, %171 : vector<8x128xf32>
    %173 = math.tanh %172 : vector<8x128xf32>
    %174 = arith.mulf %169, %173 : vector<8x128xf32>
    %175 = arith.truncf %174 : vector<8x128xf32> to vector<8x128xbf16>
    %cst_51 = arith.constant dense<0.000000e+00> : vector<8x512xf32>
    %176 = tpu.matmul %175, %16, %cst_51 {dimension_numbers = #tpu.dot_dimension_numbers<[1], [0], [0], [1], [0, 0, 1, 1], [], []>} : vector<8x128xbf16>, vector<128x512xbf16>, vector<8x512xf32> -> vector<8x512xf32>
    %177 = arith.addf %153, %176 : vector<8x512xf32>
    %178 = arith.addf %177, %12 : vector<8x512xf32>
    %179 = vector.extract_strided_slice %178 {offsets = [0, 0], sizes = [8, 384], strides = [1, 1]} : vector<8x512xf32> to vector<8x384xf32>
    %180 = arith.negf %179 : vector<8x384xf32>
    %181 = math.exp %180 : vector<8x384xf32>
    %cst_52 = arith.constant 1.000000e+00 : f32
    %182 = vector.broadcast %cst_52 : f32 to vector<8x384xf32>
    %183 = arith.addf %182, %181 : vector<8x384xf32>
    %184 = arith.divf %182, %183 : vector<8x384xf32>
    %185 = vector.extract_strided_slice %178 {offsets = [0, 384], sizes = [8, 128], strides = [1, 1]} : vector<8x512xf32> to vector<8x128xf32>
    %186 = math.tanh %185 : vector<8x128xf32>
    %187 = vector.extract_strided_slice %184 {offsets = [0, 0], sizes = [8, 128], strides = [1, 1]} : vector<8x384xf32> to vector<8x128xf32>
    %188 = vector.extract_strided_slice %184 {offsets = [0, 128], sizes = [8, 128], strides = [1, 1]} : vector<8x384xf32> to vector<8x128xf32>
    %189 = vector.extract_strided_slice %184 {offsets = [0, 256], sizes = [8, 128], strides = [1, 1]} : vector<8x384xf32> to vector<8x128xf32>
    %190 = arith.mulf %188, %149 : vector<8x128xf32>
    %191 = arith.mulf %187, %186 : vector<8x128xf32>
    %192 = arith.addf %190, %191 : vector<8x128xf32>
    %193 = math.tanh %192 : vector<8x128xf32>
    %194 = arith.mulf %189, %193 : vector<8x128xf32>
    %195 = arith.truncf %194 : vector<8x128xf32> to vector<8x128xbf16>
    %cst_53 = arith.constant dense<0.000000e+00> : vector<8x512xf32>
    %196 = tpu.matmul %195, %18, %cst_53 {dimension_numbers = #tpu.dot_dimension_numbers<[1], [0], [0], [1], [0, 0, 1, 1], [], []>} : vector<8x128xbf16>, vector<128x512xbf16>, vector<8x512xf32> -> vector<8x512xf32>
    %c4 = arith.constant 4 : index
    %c0_54 = arith.constant 0 : index
    %c0_55 = arith.constant 0 : index
    %197 = vector.load %arg10[%c4, %c0_54, %c0_55] : memref<8x8x512xf32, #tpu.memory_space<vmem>>, vector<1x8x512xf32>
    %198 = vector.shape_cast %197 : vector<1x8x512xf32> to vector<8x512xf32>
    %199 = arith.truncf %174 : vector<8x128xf32> to vector<8x128xbf16>
    %cst_56 = arith.constant dense<0.000000e+00> : vector<8x512xf32>
    %200 = tpu.matmul %199, %14, %cst_56 {dimension_numbers = #tpu.dot_dimension_numbers<[1], [0], [0], [1], [0, 0, 1, 1], [], []>} : vector<8x128xbf16>, vector<128x512xbf16>, vector<8x512xf32> -> vector<8x512xf32>
    %201 = arith.addf %198, %200 : vector<8x512xf32>
    %202 = vector.extract_strided_slice %201 {offsets = [0, 0], sizes = [8, 384], strides = [1, 1]} : vector<8x512xf32> to vector<8x384xf32>
    %203 = arith.negf %202 : vector<8x384xf32>
    %204 = math.exp %203 : vector<8x384xf32>
    %cst_57 = arith.constant 1.000000e+00 : f32
    %205 = vector.broadcast %cst_57 : f32 to vector<8x384xf32>
    %206 = arith.addf %205, %204 : vector<8x384xf32>
    %207 = arith.divf %205, %206 : vector<8x384xf32>
    %208 = vector.extract_strided_slice %201 {offsets = [0, 384], sizes = [8, 128], strides = [1, 1]} : vector<8x512xf32> to vector<8x128xf32>
    %209 = math.tanh %208 : vector<8x128xf32>
    %210 = vector.extract_strided_slice %207 {offsets = [0, 0], sizes = [8, 128], strides = [1, 1]} : vector<8x384xf32> to vector<8x128xf32>
    %211 = vector.extract_strided_slice %207 {offsets = [0, 128], sizes = [8, 128], strides = [1, 1]} : vector<8x384xf32> to vector<8x128xf32>
    %212 = vector.extract_strided_slice %207 {offsets = [0, 256], sizes = [8, 128], strides = [1, 1]} : vector<8x384xf32> to vector<8x128xf32>
    %213 = arith.mulf %211, %172 : vector<8x128xf32>
    %214 = arith.mulf %210, %209 : vector<8x128xf32>
    %215 = arith.addf %213, %214 : vector<8x128xf32>
    %216 = math.tanh %215 : vector<8x128xf32>
    %217 = arith.mulf %212, %216 : vector<8x128xf32>
    %218 = arith.truncf %217 : vector<8x128xf32> to vector<8x128xbf16>
    %cst_58 = arith.constant dense<0.000000e+00> : vector<8x512xf32>
    %219 = tpu.matmul %218, %16, %cst_58 {dimension_numbers = #tpu.dot_dimension_numbers<[1], [0], [0], [1], [0, 0, 1, 1], [], []>} : vector<8x128xbf16>, vector<128x512xbf16>, vector<8x512xf32> -> vector<8x512xf32>
    %220 = arith.addf %196, %219 : vector<8x512xf32>
    %221 = arith.addf %220, %12 : vector<8x512xf32>
    %222 = vector.extract_strided_slice %221 {offsets = [0, 0], sizes = [8, 384], strides = [1, 1]} : vector<8x512xf32> to vector<8x384xf32>
    %223 = arith.negf %222 : vector<8x384xf32>
    %224 = math.exp %223 : vector<8x384xf32>
    %cst_59 = arith.constant 1.000000e+00 : f32
    %225 = vector.broadcast %cst_59 : f32 to vector<8x384xf32>
    %226 = arith.addf %225, %224 : vector<8x384xf32>
    %227 = arith.divf %225, %226 : vector<8x384xf32>
    %228 = vector.extract_strided_slice %221 {offsets = [0, 384], sizes = [8, 128], strides = [1, 1]} : vector<8x512xf32> to vector<8x128xf32>
    %229 = math.tanh %228 : vector<8x128xf32>
    %230 = vector.extract_strided_slice %227 {offsets = [0, 0], sizes = [8, 128], strides = [1, 1]} : vector<8x384xf32> to vector<8x128xf32>
    %231 = vector.extract_strided_slice %227 {offsets = [0, 128], sizes = [8, 128], strides = [1, 1]} : vector<8x384xf32> to vector<8x128xf32>
    %232 = vector.extract_strided_slice %227 {offsets = [0, 256], sizes = [8, 128], strides = [1, 1]} : vector<8x384xf32> to vector<8x128xf32>
    %233 = arith.mulf %231, %192 : vector<8x128xf32>
    %234 = arith.mulf %230, %229 : vector<8x128xf32>
    %235 = arith.addf %233, %234 : vector<8x128xf32>
    %236 = math.tanh %235 : vector<8x128xf32>
    %237 = arith.mulf %232, %236 : vector<8x128xf32>
    %238 = arith.truncf %237 : vector<8x128xf32> to vector<8x128xbf16>
    %cst_60 = arith.constant dense<0.000000e+00> : vector<8x512xf32>
    %239 = tpu.matmul %238, %18, %cst_60 {dimension_numbers = #tpu.dot_dimension_numbers<[1], [0], [0], [1], [0, 0, 1, 1], [], []>} : vector<8x128xbf16>, vector<128x512xbf16>, vector<8x512xf32> -> vector<8x512xf32>
    %c5 = arith.constant 5 : index
    %c0_61 = arith.constant 0 : index
    %c0_62 = arith.constant 0 : index
    %240 = vector.load %arg10[%c5, %c0_61, %c0_62] : memref<8x8x512xf32, #tpu.memory_space<vmem>>, vector<1x8x512xf32>
    %241 = vector.shape_cast %240 : vector<1x8x512xf32> to vector<8x512xf32>
    %242 = arith.truncf %217 : vector<8x128xf32> to vector<8x128xbf16>
    %cst_63 = arith.constant dense<0.000000e+00> : vector<8x512xf32>
    %243 = tpu.matmul %242, %14, %cst_63 {dimension_numbers = #tpu.dot_dimension_numbers<[1], [0], [0], [1], [0, 0, 1, 1], [], []>} : vector<8x128xbf16>, vector<128x512xbf16>, vector<8x512xf32> -> vector<8x512xf32>
    %244 = arith.addf %241, %243 : vector<8x512xf32>
    %245 = vector.extract_strided_slice %244 {offsets = [0, 0], sizes = [8, 384], strides = [1, 1]} : vector<8x512xf32> to vector<8x384xf32>
    %246 = arith.negf %245 : vector<8x384xf32>
    %247 = math.exp %246 : vector<8x384xf32>
    %cst_64 = arith.constant 1.000000e+00 : f32
    %248 = vector.broadcast %cst_64 : f32 to vector<8x384xf32>
    %249 = arith.addf %248, %247 : vector<8x384xf32>
    %250 = arith.divf %248, %249 : vector<8x384xf32>
    %251 = vector.extract_strided_slice %244 {offsets = [0, 384], sizes = [8, 128], strides = [1, 1]} : vector<8x512xf32> to vector<8x128xf32>
    %252 = math.tanh %251 : vector<8x128xf32>
    %253 = vector.extract_strided_slice %250 {offsets = [0, 0], sizes = [8, 128], strides = [1, 1]} : vector<8x384xf32> to vector<8x128xf32>
    %254 = vector.extract_strided_slice %250 {offsets = [0, 128], sizes = [8, 128], strides = [1, 1]} : vector<8x384xf32> to vector<8x128xf32>
    %255 = vector.extract_strided_slice %250 {offsets = [0, 256], sizes = [8, 128], strides = [1, 1]} : vector<8x384xf32> to vector<8x128xf32>
    %256 = arith.mulf %254, %215 : vector<8x128xf32>
    %257 = arith.mulf %253, %252 : vector<8x128xf32>
    %258 = arith.addf %256, %257 : vector<8x128xf32>
    %259 = math.tanh %258 : vector<8x128xf32>
    %260 = arith.mulf %255, %259 : vector<8x128xf32>
    %261 = arith.truncf %260 : vector<8x128xf32> to vector<8x128xbf16>
    %cst_65 = arith.constant dense<0.000000e+00> : vector<8x512xf32>
    %262 = tpu.matmul %261, %16, %cst_65 {dimension_numbers = #tpu.dot_dimension_numbers<[1], [0], [0], [1], [0, 0, 1, 1], [], []>} : vector<8x128xbf16>, vector<128x512xbf16>, vector<8x512xf32> -> vector<8x512xf32>
    %263 = arith.addf %239, %262 : vector<8x512xf32>
    %264 = arith.addf %263, %12 : vector<8x512xf32>
    %265 = vector.extract_strided_slice %264 {offsets = [0, 0], sizes = [8, 384], strides = [1, 1]} : vector<8x512xf32> to vector<8x384xf32>
    %266 = arith.negf %265 : vector<8x384xf32>
    %267 = math.exp %266 : vector<8x384xf32>
    %cst_66 = arith.constant 1.000000e+00 : f32
    %268 = vector.broadcast %cst_66 : f32 to vector<8x384xf32>
    %269 = arith.addf %268, %267 : vector<8x384xf32>
    %270 = arith.divf %268, %269 : vector<8x384xf32>
    %271 = vector.extract_strided_slice %264 {offsets = [0, 384], sizes = [8, 128], strides = [1, 1]} : vector<8x512xf32> to vector<8x128xf32>
    %272 = math.tanh %271 : vector<8x128xf32>
    %273 = vector.extract_strided_slice %270 {offsets = [0, 0], sizes = [8, 128], strides = [1, 1]} : vector<8x384xf32> to vector<8x128xf32>
    %274 = vector.extract_strided_slice %270 {offsets = [0, 128], sizes = [8, 128], strides = [1, 1]} : vector<8x384xf32> to vector<8x128xf32>
    %275 = vector.extract_strided_slice %270 {offsets = [0, 256], sizes = [8, 128], strides = [1, 1]} : vector<8x384xf32> to vector<8x128xf32>
    %276 = arith.mulf %274, %235 : vector<8x128xf32>
    %277 = arith.mulf %273, %272 : vector<8x128xf32>
    %278 = arith.addf %276, %277 : vector<8x128xf32>
    %279 = math.tanh %278 : vector<8x128xf32>
    %280 = arith.mulf %275, %279 : vector<8x128xf32>
    %281 = arith.truncf %280 : vector<8x128xf32> to vector<8x128xbf16>
    %cst_67 = arith.constant dense<0.000000e+00> : vector<8x512xf32>
    %282 = tpu.matmul %281, %18, %cst_67 {dimension_numbers = #tpu.dot_dimension_numbers<[1], [0], [0], [1], [0, 0, 1, 1], [], []>} : vector<8x128xbf16>, vector<128x512xbf16>, vector<8x512xf32> -> vector<8x512xf32>
    %c6 = arith.constant 6 : index
    %c0_68 = arith.constant 0 : index
    %c0_69 = arith.constant 0 : index
    %283 = vector.load %arg10[%c6, %c0_68, %c0_69] : memref<8x8x512xf32, #tpu.memory_space<vmem>>, vector<1x8x512xf32>
    %284 = vector.shape_cast %283 : vector<1x8x512xf32> to vector<8x512xf32>
    %285 = arith.truncf %260 : vector<8x128xf32> to vector<8x128xbf16>
    %cst_70 = arith.constant dense<0.000000e+00> : vector<8x512xf32>
    %286 = tpu.matmul %285, %14, %cst_70 {dimension_numbers = #tpu.dot_dimension_numbers<[1], [0], [0], [1], [0, 0, 1, 1], [], []>} : vector<8x128xbf16>, vector<128x512xbf16>, vector<8x512xf32> -> vector<8x512xf32>
    %287 = arith.addf %284, %286 : vector<8x512xf32>
    %288 = vector.extract_strided_slice %287 {offsets = [0, 0], sizes = [8, 384], strides = [1, 1]} : vector<8x512xf32> to vector<8x384xf32>
    %289 = arith.negf %288 : vector<8x384xf32>
    %290 = math.exp %289 : vector<8x384xf32>
    %cst_71 = arith.constant 1.000000e+00 : f32
    %291 = vector.broadcast %cst_71 : f32 to vector<8x384xf32>
    %292 = arith.addf %291, %290 : vector<8x384xf32>
    %293 = arith.divf %291, %292 : vector<8x384xf32>
    %294 = vector.extract_strided_slice %287 {offsets = [0, 384], sizes = [8, 128], strides = [1, 1]} : vector<8x512xf32> to vector<8x128xf32>
    %295 = math.tanh %294 : vector<8x128xf32>
    %296 = vector.extract_strided_slice %293 {offsets = [0, 0], sizes = [8, 128], strides = [1, 1]} : vector<8x384xf32> to vector<8x128xf32>
    %297 = vector.extract_strided_slice %293 {offsets = [0, 128], sizes = [8, 128], strides = [1, 1]} : vector<8x384xf32> to vector<8x128xf32>
    %298 = vector.extract_strided_slice %293 {offsets = [0, 256], sizes = [8, 128], strides = [1, 1]} : vector<8x384xf32> to vector<8x128xf32>
    %299 = arith.mulf %297, %258 : vector<8x128xf32>
    %300 = arith.mulf %296, %295 : vector<8x128xf32>
    %301 = arith.addf %299, %300 : vector<8x128xf32>
    %302 = math.tanh %301 : vector<8x128xf32>
    %303 = arith.mulf %298, %302 : vector<8x128xf32>
    %304 = arith.truncf %303 : vector<8x128xf32> to vector<8x128xbf16>
    %cst_72 = arith.constant dense<0.000000e+00> : vector<8x512xf32>
    %305 = tpu.matmul %304, %16, %cst_72 {dimension_numbers = #tpu.dot_dimension_numbers<[1], [0], [0], [1], [0, 0, 1, 1], [], []>} : vector<8x128xbf16>, vector<128x512xbf16>, vector<8x512xf32> -> vector<8x512xf32>
    %306 = arith.addf %282, %305 : vector<8x512xf32>
    %307 = arith.addf %306, %12 : vector<8x512xf32>
    %308 = vector.extract_strided_slice %307 {offsets = [0, 0], sizes = [8, 384], strides = [1, 1]} : vector<8x512xf32> to vector<8x384xf32>
    %309 = arith.negf %308 : vector<8x384xf32>
    %310 = math.exp %309 : vector<8x384xf32>
    %cst_73 = arith.constant 1.000000e+00 : f32
    %311 = vector.broadcast %cst_73 : f32 to vector<8x384xf32>
    %312 = arith.addf %311, %310 : vector<8x384xf32>
    %313 = arith.divf %311, %312 : vector<8x384xf32>
    %314 = vector.extract_strided_slice %307 {offsets = [0, 384], sizes = [8, 128], strides = [1, 1]} : vector<8x512xf32> to vector<8x128xf32>
    %315 = math.tanh %314 : vector<8x128xf32>
    %316 = vector.extract_strided_slice %313 {offsets = [0, 0], sizes = [8, 128], strides = [1, 1]} : vector<8x384xf32> to vector<8x128xf32>
    %317 = vector.extract_strided_slice %313 {offsets = [0, 128], sizes = [8, 128], strides = [1, 1]} : vector<8x384xf32> to vector<8x128xf32>
    %318 = vector.extract_strided_slice %313 {offsets = [0, 256], sizes = [8, 128], strides = [1, 1]} : vector<8x384xf32> to vector<8x128xf32>
    %319 = arith.mulf %317, %278 : vector<8x128xf32>
    %320 = arith.mulf %316, %315 : vector<8x128xf32>
    %321 = arith.addf %319, %320 : vector<8x128xf32>
    %322 = math.tanh %321 : vector<8x128xf32>
    %323 = arith.mulf %318, %322 : vector<8x128xf32>
    %324 = arith.truncf %323 : vector<8x128xf32> to vector<8x128xbf16>
    %cst_74 = arith.constant dense<0.000000e+00> : vector<8x512xf32>
    %325 = tpu.matmul %324, %18, %cst_74 {dimension_numbers = #tpu.dot_dimension_numbers<[1], [0], [0], [1], [0, 0, 1, 1], [], []>} : vector<8x128xbf16>, vector<128x512xbf16>, vector<8x512xf32> -> vector<8x512xf32>
    %c7 = arith.constant 7 : index
    %c0_75 = arith.constant 0 : index
    %c0_76 = arith.constant 0 : index
    %326 = vector.load %arg10[%c7, %c0_75, %c0_76] : memref<8x8x512xf32, #tpu.memory_space<vmem>>, vector<1x8x512xf32>
    %327 = vector.shape_cast %326 : vector<1x8x512xf32> to vector<8x512xf32>
    %328 = arith.truncf %303 : vector<8x128xf32> to vector<8x128xbf16>
    %cst_77 = arith.constant dense<0.000000e+00> : vector<8x512xf32>
    %329 = tpu.matmul %328, %14, %cst_77 {dimension_numbers = #tpu.dot_dimension_numbers<[1], [0], [0], [1], [0, 0, 1, 1], [], []>} : vector<8x128xbf16>, vector<128x512xbf16>, vector<8x512xf32> -> vector<8x512xf32>
    %330 = arith.addf %327, %329 : vector<8x512xf32>
    %331 = vector.extract_strided_slice %330 {offsets = [0, 0], sizes = [8, 384], strides = [1, 1]} : vector<8x512xf32> to vector<8x384xf32>
    %332 = arith.negf %331 : vector<8x384xf32>
    %333 = math.exp %332 : vector<8x384xf32>
    %cst_78 = arith.constant 1.000000e+00 : f32
    %334 = vector.broadcast %cst_78 : f32 to vector<8x384xf32>
    %335 = arith.addf %334, %333 : vector<8x384xf32>
    %336 = arith.divf %334, %335 : vector<8x384xf32>
    %337 = vector.extract_strided_slice %330 {offsets = [0, 384], sizes = [8, 128], strides = [1, 1]} : vector<8x512xf32> to vector<8x128xf32>
    %338 = math.tanh %337 : vector<8x128xf32>
    %339 = vector.extract_strided_slice %336 {offsets = [0, 0], sizes = [8, 128], strides = [1, 1]} : vector<8x384xf32> to vector<8x128xf32>
    %340 = vector.extract_strided_slice %336 {offsets = [0, 128], sizes = [8, 128], strides = [1, 1]} : vector<8x384xf32> to vector<8x128xf32>
    %341 = vector.extract_strided_slice %336 {offsets = [0, 256], sizes = [8, 128], strides = [1, 1]} : vector<8x384xf32> to vector<8x128xf32>
    %342 = arith.mulf %340, %301 : vector<8x128xf32>
    %343 = arith.mulf %339, %338 : vector<8x128xf32>
    %344 = arith.addf %342, %343 : vector<8x128xf32>
    %345 = math.tanh %344 : vector<8x128xf32>
    %346 = arith.mulf %341, %345 : vector<8x128xf32>
    %347 = arith.truncf %346 : vector<8x128xf32> to vector<8x128xbf16>
    %cst_79 = arith.constant dense<0.000000e+00> : vector<8x512xf32>
    %348 = tpu.matmul %347, %16, %cst_79 {dimension_numbers = #tpu.dot_dimension_numbers<[1], [0], [0], [1], [0, 0, 1, 1], [], []>} : vector<8x128xbf16>, vector<128x512xbf16>, vector<8x512xf32> -> vector<8x512xf32>
    %349 = arith.addf %325, %348 : vector<8x512xf32>
    %350 = arith.addf %349, %12 : vector<8x512xf32>
    %351 = vector.extract_strided_slice %350 {offsets = [0, 0], sizes = [8, 384], strides = [1, 1]} : vector<8x512xf32> to vector<8x384xf32>
    %352 = arith.negf %351 : vector<8x384xf32>
    %353 = math.exp %352 : vector<8x384xf32>
    %cst_80 = arith.constant 1.000000e+00 : f32
    %354 = vector.broadcast %cst_80 : f32 to vector<8x384xf32>
    %355 = arith.addf %354, %353 : vector<8x384xf32>
    %356 = arith.divf %354, %355 : vector<8x384xf32>
    %357 = vector.extract_strided_slice %350 {offsets = [0, 384], sizes = [8, 128], strides = [1, 1]} : vector<8x512xf32> to vector<8x128xf32>
    %358 = math.tanh %357 : vector<8x128xf32>
    %359 = vector.extract_strided_slice %356 {offsets = [0, 0], sizes = [8, 128], strides = [1, 1]} : vector<8x384xf32> to vector<8x128xf32>
    %360 = vector.extract_strided_slice %356 {offsets = [0, 128], sizes = [8, 128], strides = [1, 1]} : vector<8x384xf32> to vector<8x128xf32>
    %361 = vector.extract_strided_slice %356 {offsets = [0, 256], sizes = [8, 128], strides = [1, 1]} : vector<8x384xf32> to vector<8x128xf32>
    %362 = arith.mulf %360, %321 : vector<8x128xf32>
    %363 = arith.mulf %359, %358 : vector<8x128xf32>
    %364 = arith.addf %362, %363 : vector<8x128xf32>
    %365 = math.tanh %364 : vector<8x128xf32>
    %366 = arith.mulf %361, %365 : vector<8x128xf32>
    %367 = arith.truncf %366 : vector<8x128xf32> to vector<8x128xbf16>
    %c0_81 = arith.constant 0 : index
    %c0_82 = arith.constant 0 : index
    %368 = vector.load %arg5[%c0_81, %c0_82] : memref<128x64xbf16, #tpu.memory_space<vmem>>, vector<128x64xbf16>
    %cst_83 = arith.constant dense<0.000000e+00> : vector<8x64xf32>
    %369 = tpu.matmul %367, %368, %cst_83 {dimension_numbers = #tpu.dot_dimension_numbers<[1], [0], [0], [1], [0, 0, 1, 1], [], []>} : vector<8x128xbf16>, vector<128x64xbf16>, vector<8x64xf32> -> vector<8x64xf32>
    %c0_84 = arith.constant 0 : index
    %c0_85 = arith.constant 0 : index
    %370 = vector.load %arg6[%c0_84, %c0_85] : memref<1x64xf32, #tpu.memory_space<vmem>>, vector<1x64xf32>
    %371 = vector.broadcast %370 : vector<1x64xf32> to vector<8x64xf32>
    %372 = arith.addf %369, %371 : vector<8x64xf32>
    %cst_86 = arith.constant 0.000000e+00 : f32
    %373 = vector.broadcast %cst_86 : f32 to vector<8x64xf32>
    %374 = arith.maximumf %372, %373 : vector<8x64xf32>
    %375 = arith.truncf %374 : vector<8x64xf32> to vector<8x64xbf16>
    %c0_87 = arith.constant 0 : index
    %c0_88 = arith.constant 0 : index
    %376 = vector.load %arg7[%c0_87, %c0_88] : memref<64x128xbf16, #tpu.memory_space<vmem>>, vector<64x128xbf16>
    %cst_89 = arith.constant dense<0.000000e+00> : vector<8x128xf32>
    %377 = tpu.matmul %375, %376, %cst_89 {dimension_numbers = #tpu.dot_dimension_numbers<[1], [0], [0], [1], [0, 0, 1, 1], [], []>} : vector<8x64xbf16>, vector<64x128xbf16>, vector<8x128xf32> -> vector<8x128xf32>
    %c0_90 = arith.constant 0 : index
    %c0_91 = arith.constant 0 : index
    %378 = vector.load %arg8[%c0_90, %c0_91] : memref<1x128xf32, #tpu.memory_space<vmem>>, vector<1x128xf32>
    %379 = vector.broadcast %378 : vector<1x128xf32> to vector<8x128xf32>
    %380 = arith.addf %377, %379 : vector<8x128xf32>
    %c0_92 = arith.constant 0 : index
    %c0_93 = arith.constant 0 : index
    %381 = vector.load %arg9[%c0_92, %c0_93] : memref<8x128xf32, #tpu.memory_space<vmem>>, vector<8x128xf32>
    tpu.vector_store %arg9[%c0_92, %c0_93], %380 {strides = array<i32>} : memref<8x128xf32, #tpu.memory_space<vmem>>, vector<8x128xf32>,
    return
  }
}

</mosaic_0001>

<llo_original>
// kernel: _forward_impl.1
$region0: #{_forward_impl.1}
  #allocation0 [shape = 'u32[]', space=smem, size = 0x4, offset = 0x4, fixed_abs, tag = 'smem constant byte address 0x4 - core index']
  #allocation1 [shape = 'u32[72,128]{1,0:T(1,128)}', space=vmem, size = 0x9000, scoped, tag = 'internal scratch']
  #allocation2 [shape = 'f32[8,8,512]{2,1,0:T(8,128)}', space=vmem, size = 0x20000, scoped, tag = 'scratch operand']
  #allocation3 [shape = 'bf16[3,128,512]{2,1,0:T(8,128)(2,1)}', space=vmem, size = 0x60000, scoped, tag = 'scratch operand']
  #allocation4 [shape = 's32[1]{0}', space=sflag, size = 0x4, scoped, tag = 'scratch operand']
  #allocation7 [shape = 's32[]', space=sflag, size = 0x4, offset = 0, fixed_abs, tag = 'sflag constant byte address 0x0 - dummy sync flag']
  #allocation8 [shape = 's32[]', space=sflag, size = 0x4, offset = 0, fixed_abs, tag = 'sflag constant byte address 0x0 - dummy sync flag']
  #allocation9 [shape = 'u32[]', space=smem, size = 0x4, offset = 0x44, fixed_abs, tag = 'smem constant byte address 0x44 - assertion arg 0']
  #allocation10 [shape = 'u32[]', space=smem, size = 0x4, offset = 0x48, fixed_abs, tag = 'smem constant byte address 0x48 - assertion arg 1']
  %s0 = inlined_call_operand.vmem [shape: f32[8,8,128], index: 0, kind: input, shape index: {}]
  %s1 = inlined_call_operand.hbm [shape: bf16[128,512], index: 1, kind: input, shape index: {}]
  %s2 = inlined_call_operand.vmem [shape: f32[1,512], index: 2, kind: input, shape index: {}]
  %s3 = inlined_call_operand.hbm [shape: bf16[3,128,512], index: 3, kind: input, shape index: {}]
  %s4 = inlined_call_operand.vmem [shape: f32[1,512], index: 4, kind: input, shape index: {}]
  %s5 = inlined_call_operand.vmem [shape: bf16[128,64], index: 5, kind: input, shape index: {}]
  %s6 = inlined_call_operand.vmem [shape: f32[1,64], index: 6, kind: input, shape index: {}]
  %s7 = inlined_call_operand.vmem [shape: bf16[64,128], index: 7, kind: input, shape index: {}]
  %s8 = inlined_call_operand.vmem [shape: f32[1,128], index: 8, kind: input, shape index: {}]
  %s9 = inlined_call_operand.vmem [shape: f32[8,128], index: 9, kind: output, shape index: {}]
  %s10 = sld [smem:[#allocation0]]
  $region50: #{_forward_impl.1} parent=0
    _
  %s12 = ssub.s32 1, %s10
  %s13 = scalar_select 0, %s12, %s10
  $region1: #{_forward_impl.1} parent=0
    #allocation5 [shape = 'u8[131072]{0}', space=vmem, size = 0x20000, scoped, tag = 'input window, operand 1, single buffered']
    #allocation6 [shape = 's32[1]{0}', space=sflag, size = 0x4, scoped, tag = 'scoped memory for _forward_impl.1']
    %14 = vsyncpa [#allocation6], 0
    // Predicated region
    $region2: #{_forward_impl.1} parent=1 // pred_check
      _
    $region3: #{_forward_impl.1} parent=1 // pred_check_branch
      %16 = sbr.rel (0) target = $region5
    $region4: #{_forward_impl.1} parent=1 // pred_region
      _
    $region5: #{_forward_impl.1} parent=1 // pred_fallthru
      _
    // Predicated region
    $region6: #{_forward_impl.1} parent=1 // pred_check
      _
    $region7: #{_forward_impl.1} parent=1 // pred_check_branch
      %18 = sbr.rel (0) target = $region9
    $region8: #{_forward_impl.1} parent=1 // pred_region
      %20 = vsyncadd [#allocation6], 0
      %s21 = sshll.u32 %s1, 4
      %s22 = int_to_ptr.hbm [resolvable:$true] %s21
      %s23 = sshll.u32 [#allocation5], 4
      %s24 = int_to_ptr.vmem [resolvable:$true] %s23
      %29 = dma.hbm_to_vmem [thread:$0]  %s22, 4096, %s24, [#allocation6], 256, 256, 16
    $region9: #{_forward_impl.1} parent=1 // pred_fallthru
      _
    // Predicated region
    $region10: #{_forward_impl.1} parent=1 // pred_check
      _
    $region11: #{_forward_impl.1} parent=1 // pred_check_branch
      %31 = sbr.rel (0) target = $region13
    $region12: #{_forward_impl.1} parent=1 // pred_region
      _
    $region13: #{_forward_impl.1} parent=1 // pred_fallthru
      _
    // Predicated region
    $region14: #{_forward_impl.1} parent=1 // pred_check
      _
    $region15: #{_forward_impl.1} parent=1 // pred_check_branch
      %33 = sbr.rel (0) target = $region17
    $region16: #{_forward_impl.1} parent=1 // pred_region
      _
    $region17: #{_forward_impl.1} parent=1 // pred_fallthru
      _
    // Predicated region
    $region18: #{_forward_impl.1} parent=1 // pred_check
      _
    $region19: #{_forward_impl.1} parent=1 // pred_check_branch
      %35 = sbr.rel (0) target = $region21
    $region20: #{_forward_impl.1} parent=1 // pred_region
      _
    $region21: #{_forward_impl.1} parent=1 // pred_fallthru
      _
    // Predicated region
    $region22: #{_forward_impl.1} parent=1 // pred_check
      _
    $region23: #{_forward_impl.1} parent=1 // pred_check_branch
      %37 = sbr.rel (0) target = $region25
    $region24: #{_forward_impl.1} parent=1 // pred_region
      _
    $region25: #{_forward_impl.1} parent=1 // pred_fallthru
      _
    // Predicated region
    $region26: #{_forward_impl.1} parent=1 // pred_check
      _
    $region27: #{_forward_impl.1} parent=1 // pred_check_branch
      %39 = sbr.rel (0) target = $region29
    $region28: #{_forward_impl.1} parent=1 // pred_region
      _
    $region29: #{_forward_impl.1} parent=1 // pred_fallthru
      _
    // Predicated region
    $region30: #{_forward_impl.1} parent=1 // pred_check
      _
    $region31: #{_forward_impl.1} parent=1 // pred_check_branch
      %41 = sbr.rel (0) target = $region33
    $region32: #{_forward_impl.1} parent=1 // pred_region
      _
    $region33: #{_forward_impl.1} parent=1 // pred_fallthru
      _
    // Predicated region
    $region34: #{_forward_impl.1} parent=1 // pred_check
      _
    $region35: #{_forward_impl.1} parent=1 // pred_check_branch
      %43 = sbr.rel (0) target = $region37
    $region36: #{_forward_impl.1} parent=1 // pred_region
      %45 = dma.done [#allocation6], 4096
    $region37: #{_forward_impl.1} parent=1 // pred_fallthru
      _
    // Predicated region
    $region38: #{_forward_impl.1} parent=1 // pred_check
      _
    $region39: #{_forward_impl.1} parent=1 // pred_check_branch
      %48 = sbr.rel target = $region41
    $region40: #{_forward_impl.1} parent=1 // pred_region
      %49 = sst [smem:[#allocation9]] [#allocation8]
      %50 = sst [smem:[#allocation10]] [#allocation7]
    $region41: #{_forward_impl.1} parent=1 // pred_fallthru
      _
    %52 = shalt.err (0)
    %s54 = sshll.u32 %s3, 4
    %s55 = int_to_ptr.hbm [resolvable:$true] %s54
    %s56 = sshll.u32 [#allocation3], 4
    %s57 = int_to_ptr.vmem [resolvable:$true] %s56
    %59 = dma.hbm_to_vmem [thread:$0]  %s55, 12288, %s57, [#allocation4]
    %v60 = vld [vmem:[%s0] sm:$0xff]
    %v61 = vld [vmem:[%s0 + $0x8] sm:$0xff]
    %v62 = vld [vmem:[%s0 + $0x10] sm:$0xff]
    %v63 = vld [vmem:[%s0 + $0x18] sm:$0xff]
    %v64 = vld [vmem:[%s0 + $0x20] sm:$0xff]
    %v65 = vld [vmem:[%s0 + $0x28] sm:$0xff]
    %v66 = vld [vmem:[%s0 + $0x30] sm:$0xff]
    %v67 = vld [vmem:[%s0 + $0x38] sm:$0xff]
    %v68 = vpack.c.bf16 %v61, %v60
    %v69 = vpack.c.bf16 %v63, %v62
    %v70 = vpack.c.bf16 %v65, %v64
    %v71 = vpack.c.bf16 %v67, %v66
    %v72 = vld [vmem:[#allocation5] sm:$0xff]
    %v73 = vld [vmem:[#allocation5 + $0x8] sm:$0xff]
    %v74 = vld [vmem:[#allocation5 + $0x10] sm:$0xff]
    %v75 = vld [vmem:[#allocation5 + $0x18] sm:$0xff]
    %v76 = vld [vmem:[#allocation5 + $0x20] sm:$0xff]
    %v77 = vld [vmem:[#allocation5 + $0x28] sm:$0xff]
    %v78 = vld [vmem:[#allocation5 + $0x30] sm:$0xff]
    %v79 = vld [vmem:[#allocation5 + $0x38] sm:$0xff]
    %v80 = vld [vmem:[#allocation5 + $0x40] sm:$0xff]
    %v81 = vld [vmem:[#allocation5 + $0x48] sm:$0xff]
    %v82 = vld [vmem:[#allocation5 + $0x50] sm:$0xff]
    %v83 = vld [vmem:[#allocation5 + $0x58] sm:$0xff]
    %v84 = vld [vmem:[#allocation5 + $0x60] sm:$0xff]
    %v85 = vld [vmem:[#allocation5 + $0x68] sm:$0xff]
    %v86 = vld [vmem:[#allocation5 + $0x70] sm:$0xff]
    %v87 = vld [vmem:[#allocation5 + $0x78] sm:$0xff]
    %v88 = vld [vmem:[#allocation5 + $0x80] sm:$0xff]
    %v89 = vld [vmem:[#allocation5 + $0x88] sm:$0xff]
    %v90 = vld [vmem:[#allocation5 + $0x90] sm:$0xff]
    %v91 = vld [vmem:[#allocation5 + $0x98] sm:$0xff]
    %v92 = vld [vmem:[#allocation5 + $0xa0] sm:$0xff]
    %v93 = vld [vmem:[#allocation5 + $0xa8] sm:$0xff]
    %v94 = vld [vmem:[#allocation5 + $0xb0] sm:$0xff]
    %v95 = vld [vmem:[#allocation5 + $0xb8] sm:$0xff]
    %v96 = vld [vmem:[#allocation5 + $0xc0] sm:$0xff]
    %v97 = vld [vmem:[#allocation5 + $0xc8] sm:$0xff]
    %v98 = vld [vmem:[#allocation5 + $0xd0] sm:$0xff]
    %v99 = vld [vmem:[#allocation5 + $0xd8] sm:$0xff]
    %v100 = vld [vmem:[#allocation5 + $0xe0] sm:$0xff]
    %v101 = vld [vmem:[#allocation5 + $0xe8] sm:$0xff]
    %v102 = vld [vmem:[#allocation5 + $0xf0] sm:$0xff]
    %v103 = vld [vmem:[#allocation5 + $0xf8] sm:$0xff]
    %v104 = vld [vmem:[%s2] sm:$0xf]
    %v106 = vperm.slane %v104, 0
    %v107 = vperm.slane %v104, 1
    %v108 = vperm.slane %v104, 2
    %v109 = vperm.slane %v104, 3
    %v146 = vunpack.c.l.b16 %v72
    %v147 = vunpack.c.h.b16 %v72
    %v148 = vunpack.c.l.b16 %v73
    %v149 = vunpack.c.h.b16 %v73
    %v150 = vunpack.c.l.b16 %v74
    %v151 = vunpack.c.h.b16 %v74
    %v152 = vunpack.c.l.b16 %v75
    %v153 = vunpack.c.h.b16 %v75
    %v154 = vunpack.c.l.b16 %v76
    %v155 = vunpack.c.h.b16 %v76
    %v156 = vunpack.c.l.b16 %v77
    %v157 = vunpack.c.h.b16 %v77
    %v158 = vunpack.c.l.b16 %v78
    %v159 = vunpack.c.h.b16 %v78
    %v160 = vunpack.c.l.b16 %v79
    %v161 = vunpack.c.h.b16 %v79
    %v162 = vunpack.c.l.b16 %v80
    %v163 = vunpack.c.h.b16 %v80
    %v164 = vunpack.c.l.b16 %v81
    %v165 = vunpack.c.h.b16 %v81
    %v166 = vunpack.c.l.b16 %v82
    %v167 = vunpack.c.h.b16 %v82
    %v168 = vunpack.c.l.b16 %v83
    %v169 = vunpack.c.h.b16 %v83
    %v170 = vunpack.c.l.b16 %v84
    %v171 = vunpack.c.h.b16 %v84
    %v172 = vunpack.c.l.b16 %v85
    %v173 = vunpack.c.h.b16 %v85
    %v174 = vunpack.c.l.b16 %v86
    %v175 = vunpack.c.h.b16 %v86
    %v176 = vunpack.c.l.b16 %v87
    %v177 = vunpack.c.h.b16 %v87
    %v178 = vunpack.c.l.b16 %v88
    %v179 = vunpack.c.h.b16 %v88
    %v180 = vunpack.c.l.b16 %v89
    %v181 = vunpack.c.h.b16 %v89
    %v182 = vunpack.c.l.b16 %v90
    %v183 = vunpack.c.h.b16 %v90
    %v184 = vunpack.c.l.b16 %v91
    %v185 = vunpack.c.h.b16 %v91
    %v186 = vunpack.c.l.b16 %v92
    %v187 = vunpack.c.h.b16 %v92
    %v188 = vunpack.c.l.b16 %v93
    %v189 = vunpack.c.h.b16 %v93
    %v190 = vunpack.c.l.b16 %v94
    %v191 = vunpack.c.h.b16 %v94
    %v192 = vunpack.c.l.b16 %v95
    %v193 = vunpack.c.h.b16 %v95
    %v194 = vunpack.c.l.b16 %v96
    %v195 = vunpack.c.h.b16 %v96
    %v196 = vunpack.c.l.b16 %v97
    %v197 = vunpack.c.h.b16 %v97
    %v198 = vunpack.c.l.b16 %v98
    %v199 = vunpack.c.h.b16 %v98
    %v200 = vunpack.c.l.b16 %v99
    %v201 = vunpack.c.h.b16 %v99
    %v202 = vunpack.c.l.b16 %v100
    %v203 = vunpack.c.h.b16 %v100
    %v204 = vunpack.c.l.b16 %v101
    %v205 = vunpack.c.h.b16 %v101
    %v206 = vunpack.c.l.b16 %v102
    %v207 = vunpack.c.h.b16 %v102
    %v208 = vunpack.c.l.b16 %v103
    %v209 = vunpack.c.h.b16 %v103
    %v210 = vpack.c.b16 %v150, %v146
    %v211 = vpack.c.b16 %v151, %v147
    %v212 = vpack.c.b16 %v152, %v148
    %v213 = vpack.c.b16 %v153, %v149
    %v214 = vpack.c.b16 %v158, %v154
    %v215 = vpack.c.b16 %v159, %v155
    %v216 = vpack.c.b16 %v160, %v156
    %v217 = vpack.c.b16 %v161, %v157
    %v218 = vpack.c.b16 %v166, %v162
    %v219 = vpack.c.b16 %v167, %v163
    %v220 = vpack.c.b16 %v168, %v164
    %v221 = vpack.c.b16 %v169, %v165
    %v222 = vpack.c.b16 %v174, %v170
    %v223 = vpack.c.b16 %v175, %v171
    %v224 = vpack.c.b16 %v176, %v172
    %v225 = vpack.c.b16 %v177, %v173
    %v226 = vpack.c.b16 %v182, %v178
    %v227 = vpack.c.b16 %v183, %v179
    %v228 = vpack.c.b16 %v184, %v180
    %v229 = vpack.c.b16 %v185, %v181
    %v230 = vpack.c.b16 %v190, %v186
    %v231 = vpack.c.b16 %v191, %v187
    %v232 = vpack.c.b16 %v192, %v188
    %v233 = vpack.c.b16 %v193, %v189
    %v234 = vpack.c.b16 %v198, %v194
    %v235 = vpack.c.b16 %v199, %v195
    %v236 = vpack.c.b16 %v200, %v196
    %v237 = vpack.c.b16 %v201, %v197
    %v238 = vpack.c.b16 %v206, %v202
    %v239 = vpack.c.b16 %v207, %v203
    %v240 = vpack.c.b16 %v208, %v204
    %v241 = vpack.c.b16 %v209, %v205
    %274 = vmatpush.bf16.msra.mxu0 %v238
    %275 = vmatpush.bf16.msra.mxu0 %v234
    %276 = vmatpush.bf16.msra.mxu0 %v230
    %277 = vmatpush.bf16.msra.mxu0 %v226
    %278 = vmatpush.bf16.msra.mxu0 %v222
    %279 = vmatpush.bf16.msra.mxu0 %v218
    %280 = vmatpush.bf16.msra.mxu0 %v214
    %281 = vmatpush.bf16.msra.mxu0 %v210
    %282 = vmatmul.bf16.gmra.mxu0 %v68
    %v283 = vpop.f32.mrf.mxu0
    %v284 = vadd.f32 %v106, %v283
    %v285 = vpop.f32.mrf.mxu0
    %v286 = vadd.f32 %v106, %v285
    %287 = vmatmul.bf16.gmra.mxu0 %v69
    %v288 = vpop.f32.mrf.mxu0
    %v289 = vadd.f32 %v106, %v288
    %v290 = vpop.f32.mrf.mxu0
    %v291 = vadd.f32 %v106, %v290
    %292 = vmatmul.bf16.gmra.mxu0 %v70
    %v293 = vpop.f32.mrf.mxu0
    %v294 = vadd.f32 %v106, %v293
    %v295 = vpop.f32.mrf.mxu0
    %v296 = vadd.f32 %v106, %v295
    %297 = vmatmul.bf16.gmra.mxu0 %v71
    %v298 = vpop.f32.mrf.mxu0
    %v299 = vadd.f32 %v106, %v298
    %v300 = vpop.f32.mrf.mxu0
    %v301 = vadd.f32 %v106, %v300
    %302 = vdwg.mxu0
    %303 = vmatpush.bf16.msra.mxu0 %v239
    %304 = vmatpush.bf16.msra.mxu0 %v235
    %305 = vmatpush.bf16.msra.mxu0 %v231
    %306 = vmatpush.bf16.msra.mxu0 %v227
    %307 = vmatpush.bf16.msra.mxu0 %v223
    %308 = vmatpush.bf16.msra.mxu0 %v219
    %309 = vmatpush.bf16.msra.mxu0 %v215
    %310 = vmatpush.bf16.msra.mxu0 %v211
    %311 = vmatmul.bf16.gmra.mxu0 %v68
    %v312 = vpop.f32.mrf.mxu0
    %v313 = vadd.f32 %v107, %v312
    %v314 = vpop.f32.mrf.mxu0
    %v315 = vadd.f32 %v107, %v314
    %316 = vmatmul.bf16.gmra.mxu0 %v69
    %v317 = vpop.f32.mrf.mxu0
    %v318 = vadd.f32 %v107, %v317
    %v319 = vpop.f32.mrf.mxu0
    %v320 = vadd.f32 %v107, %v319
    %321 = vmatmul.bf16.gmra.mxu0 %v70
    %v322 = vpop.f32.mrf.mxu0
    %v323 = vadd.f32 %v107, %v322
    %v324 = vpop.f32.mrf.mxu0
    %v325 = vadd.f32 %v107, %v324
    %326 = vmatmul.bf16.gmra.mxu0 %v71
    %v327 = vpop.f32.mrf.mxu0
    %v328 = vadd.f32 %v107, %v327
    %v329 = vpop.f32.mrf.mxu0
    %v330 = vadd.f32 %v107, %v329
    %331 = vdwg.mxu0
    %332 = vmatpush.bf16.msra.mxu0 %v240
    %333 = vmatpush.bf16.msra.mxu0 %v236
    %334 = vmatpush.bf16.msra.mxu0 %v232
    %335 = vmatpush.bf16.msra.mxu0 %v228
    %336 = vmatpush.bf16.msra.mxu0 %v224
    %337 = vmatpush.bf16.msra.mxu0 %v220
    %338 = vmatpush.bf16.msra.mxu0 %v216
    %339 = vmatpush.bf16.msra.mxu0 %v212
    %340 = vmatmul.bf16.gmra.mxu0 %v68
    %v341 = vpop.f32.mrf.mxu0
    %v342 = vadd.f32 %v108, %v341
    %v343 = vpop.f32.mrf.mxu0
    %v344 = vadd.f32 %v108, %v343
    %345 = vmatmul.bf16.gmra.mxu0 %v69
    %v346 = vpop.f32.mrf.mxu0
    %v347 = vadd.f32 %v108, %v346
    %v348 = vpop.f32.mrf.mxu0
    %v349 = vadd.f32 %v108, %v348
    %350 = vmatmul.bf16.gmra.mxu0 %v70
    %v351 = vpop.f32.mrf.mxu0
    %v352 = vadd.f32 %v108, %v351
    %v353 = vpop.f32.mrf.mxu0
    %v354 = vadd.f32 %v108, %v353
    %355 = vmatmul.bf16.gmra.mxu0 %v71
    %v356 = vpop.f32.mrf.mxu0
    %v357 = vadd.f32 %v108, %v356
    %v358 = vpop.f32.mrf.mxu0
    %v359 = vadd.f32 %v108, %v358
    %360 = vdwg.mxu0
    %361 = vmatpush.bf16.msra.mxu0 %v241
    %362 = vmatpush.bf16.msra.mxu0 %v237
    %363 = vmatpush.bf16.msra.mxu0 %v233
    %364 = vmatpush.bf16.msra.mxu0 %v229
    %365 = vmatpush.bf16.msra.mxu0 %v225
    %366 = vmatpush.bf16.msra.mxu0 %v221
    %367 = vmatpush.bf16.msra.mxu0 %v217
    %368 = vmatpush.bf16.msra.mxu0 %v213
    %369 = vmatmul.bf16.gmra.mxu0 %v68
    %v370 = vpop.f32.mrf.mxu0
    %v371 = vadd.f32 %v109, %v370
    %v372 = vpop.f32.mrf.mxu0
    %v373 = vadd.f32 %v109, %v372
    %374 = vmatmul.bf16.gmra.mxu0 %v69
    %v375 = vpop.f32.mrf.mxu0
    %v376 = vadd.f32 %v109, %v375
    %v377 = vpop.f32.mrf.mxu0
    %v378 = vadd.f32 %v109, %v377
    %379 = vmatmul.bf16.gmra.mxu0 %v70
    %v380 = vpop.f32.mrf.mxu0
    %v381 = vadd.f32 %v109, %v380
    %v382 = vpop.f32.mrf.mxu0
    %v383 = vadd.f32 %v109, %v382
    %384 = vmatmul.bf16.gmra.mxu0 %v71
    %v385 = vpop.f32.mrf.mxu0
    %v386 = vadd.f32 %v109, %v385
    %v387 = vpop.f32.mrf.mxu0
    %v388 = vadd.f32 %v109, %v387
    %389 = vdwg.mxu0
    %390 = vst [vmem:[#allocation2] sm:$0xff] %v284
    %391 = vst [vmem:[#allocation2 + $0x8] sm:$0xff] %v313
    %392 = vst [vmem:[#allocation2 + $0x10] sm:$0xff] %v342
    %393 = vst [vmem:[#allocation2 + $0x18] sm:$0xff] %v371
    %394 = vst [vmem:[#allocation2 + $0x20] sm:$0xff] %v286
    %395 = vst [vmem:[#allocation2 + $0x28] sm:$0xff] %v315
    %396 = vst [vmem:[#allocation2 + $0x30] sm:$0xff] %v344
    %397 = vst [vmem:[#allocation2 + $0x38] sm:$0xff] %v373
    %398 = vst [vmem:[#allocation2 + $0x40] sm:$0xff] %v289
    %399 = vst [vmem:[#allocation2 + $0x48] sm:$0xff] %v318
    %400 = vst [vmem:[#allocation2 + $0x50] sm:$0xff] %v347
    %401 = vst [vmem:[#allocation2 + $0x58] sm:$0xff] %v376
    %402 = vst [vmem:[#allocation2 + $0x60] sm:$0xff] %v291
    %403 = vst [vmem:[#allocation2 + $0x68] sm:$0xff] %v320
    %404 = vst [vmem:[#allocation2 + $0x70] sm:$0xff] %v349
    %405 = vst [vmem:[#allocation2 + $0x78] sm:$0xff] %v378
    %406 = vst [vmem:[#allocation2 + $0x80] sm:$0xff] %v294
    %407 = vst [vmem:[#allocation2 + $0x88] sm:$0xff] %v323
    %408 = vst [vmem:[#allocation2 + $0x90] sm:$0xff] %v352
    %409 = vst [vmem:[#allocation2 + $0x98] sm:$0xff] %v381
    %410 = vst [vmem:[#allocation2 + $0xa0] sm:$0xff] %v296
    %411 = vst [vmem:[#allocation2 + $0xa8] sm:$0xff] %v325
    %412 = vst [vmem:[#allocation2 + $0xb0] sm:$0xff] %v354
    %413 = vst [vmem:[#allocation2 + $0xb8] sm:$0xff] %v383
    %414 = vst [vmem:[#allocation2 + $0xc0] sm:$0xff] %v299
    %415 = vst [vmem:[#allocation2 + $0xc8] sm:$0xff] %v328
    %416 = vst [vmem:[#allocation2 + $0xd0] sm:$0xff] %v357
    %417 = vst [vmem:[#allocation2 + $0xd8] sm:$0xff] %v386
    %418 = vst [vmem:[#allocation2 + $0xe0] sm:$0xff] %v301
    %419 = vst [vmem:[#allocation2 + $0xe8] sm:$0xff] %v330
    %420 = vst [vmem:[#allocation2 + $0xf0] sm:$0xff] %v359
    %421 = vst [vmem:[#allocation2 + $0xf8] sm:$0xff] %v388
    %v422 = vld [vmem:[%s4] sm:$0xf]
    %v424 = vperm.slane %v422, 0
    %v425 = vperm.slane %v422, 1
    %v426 = vperm.slane %v422, 2
    %v427 = vperm.slane %v422, 3
    %s432 = smul.u32 4, 3
    %s433 = smul.u32 %s432, 16
    %s434 = smul.u32 %s433, 4
    %s435 = sshll.u32 %s434, 4
    %436 = dma.done [#allocation4], %s435
    %v437 = vld [vmem:[#allocation3] sm:$0xff]
    %v438 = vld [vmem:[#allocation3 + $0x8] sm:$0xff]
    %v439 = vld [vmem:[#allocation3 + $0x10] sm:$0xff]
    %v440 = vld [vmem:[#allocation3 + $0x18] sm:$0xff]
    %v441 = vld [vmem:[#allocation3 + $0x20] sm:$0xff]
    %v442 = vld [vmem:[#allocation3 + $0x28] sm:$0xff]
    %v443 = vld [vmem:[#allocation3 + $0x30] sm:$0xff]
    %v444 = vld [vmem:[#allocation3 + $0x38] sm:$0xff]
    %v445 = vld [vmem:[#allocation3 + $0x40] sm:$0xff]
    %v446 = vld [vmem:[#allocation3 + $0x48] sm:$0xff]
    %v447 = vld [vmem:[#allocation3 + $0x50] sm:$0xff]
    %v448 = vld [vmem:[#allocation3 + $0x58] sm:$0xff]
    %v449 = vld [vmem:[#allocation3 + $0x60] sm:$0xff]
    %v450 = vld [vmem:[#allocation3 + $0x68] sm:$0xff]
    %v451 = vld [vmem:[#allocation3 + $0x70] sm:$0xff]
    %v452 = vld [vmem:[#allocation3 + $0x78] sm:$0xff]
    %v453 = vld [vmem:[#allocation3 + $0x80] sm:$0xff]
    %v454 = vld [vmem:[#allocation3 + $0x88] sm:$0xff]
    %v455 = vld [vmem:[#allocation3 + $0x90] sm:$0xff]
    %v456 = vld [vmem:[#allocation3 + $0x98] sm:$0xff]
    %v457 = vld [vmem:[#allocation3 + $0xa0] sm:$0xff]
    %v458 = vld [vmem:[#allocation3 + $0xa8] sm:$0xff]
    %v459 = vld [vmem:[#allocation3 + $0xb0] sm:$0xff]
    %v460 = vld [vmem:[#allocation3 + $0xb8] sm:$0xff]
    %v461 = vld [vmem:[#allocation3 + $0xc0] sm:$0xff]
    %v462 = vld [vmem:[#allocation3 + $0xc8] sm:$0xff]
    %v463 = vld [vmem:[#allocation3 + $0xd0] sm:$0xff]
    %v464 = vld [vmem:[#allocation3 + $0xd8] sm:$0xff]
    %v465 = vld [vmem:[#allocation3 + $0xe0] sm:$0xff]
    %v466 = vld [vmem:[#allocation3 + $0xe8] sm:$0xff]
    %v467 = vld [vmem:[#allocation3 + $0xf0] sm:$0xff]
    %v468 = vld [vmem:[#allocation3 + $0xf8] sm:$0xff]
    %s469 = scalar_lea.vmem [#allocation3], 256
    %v470 = vld [vmem:[%s469] sm:$0xff]
    %v471 = vld [vmem:[%s469 + $0x8] sm:$0xff]
    %v472 = vld [vmem:[%s469 + $0x10] sm:$0xff]
    %v473 = vld [vmem:[%s469 + $0x18] sm:$0xff]
    %v474 = vld [vmem:[%s469 + $0x20] sm:$0xff]
    %v475 = vld [vmem:[%s469 + $0x28] sm:$0xff]
    %v476 = vld [vmem:[%s469 + $0x30] sm:$0xff]
    %v477 = vld [vmem:[%s469 + $0x38] sm:$0xff]
    %v478 = vld [vmem:[%s469 + $0x40] sm:$0xff]
    %v479 = vld [vmem:[%s469 + $0x48] sm:$0xff]
    %v480 = vld [vmem:[%s469 + $0x50] sm:$0xff]
    %v481 = vld [vmem:[%s469 + $0x58] sm:$0xff]
    %v482 = vld [vmem:[%s469 + $0x60] sm:$0xff]
    %v483 = vld [vmem:[%s469 + $0x68] sm:$0xff]
    %v484 = vld [vmem:[%s469 + $0x70] sm:$0xff]
    %v485 = vld [vmem:[%s469 + $0x78] sm:$0xff]
    %v486 = vld [vmem:[%s469 + $0x80] sm:$0xff]
    %v487 = vld [vmem:[%s469 + $0x88] sm:$0xff]
    %v488 = vld [vmem:[%s469 + $0x90] sm:$0xff]
    %v489 = vld [vmem:[%s469 + $0x98] sm:$0xff]
    %v490 = vld [vmem:[%s469 + $0xa0] sm:$0xff]
    %v491 = vld [vmem:[%s469 + $0xa8] sm:$0xff]
    %v492 = vld [vmem:[%s469 + $0xb0] sm:$0xff]
    %v493 = vld [vmem:[%s469 + $0xb8] sm:$0xff]
    %v494 = vld [vmem:[%s469 + $0xc0] sm:$0xff]
    %v495 = vld [vmem:[%s469 + $0xc8] sm:$0xff]
    %v496 = vld [vmem:[%s469 + $0xd0] sm:$0xff]
    %v497 = vld [vmem:[%s469 + $0xd8] sm:$0xff]
    %v498 = vld [vmem:[%s469 + $0xe0] sm:$0xff]
    %v499 = vld [vmem:[%s469 + $0xe8] sm:$0xff]
    %v500 = vld [vmem:[%s469 + $0xf0] sm:$0xff]
    %v501 = vld [vmem:[%s469 + $0xf8] sm:$0xff]
    %s502 = scalar_lea.vmem [#allocation3], 512
    %v503 = vld [vmem:[%s502] sm:$0xff]
    %v504 = vld [vmem:[%s502 + $0x8] sm:$0xff]
    %v505 = vld [vmem:[%s502 + $0x10] sm:$0xff]
    %v506 = vld [vmem:[%s502 + $0x18] sm:$0xff]
    %v507 = vld [vmem:[%s502 + $0x20] sm:$0xff]
    %v508 = vld [vmem:[%s502 + $0x28] sm:$0xff]
    %v509 = vld [vmem:[%s502 + $0x30] sm:$0xff]
    %v510 = vld [vmem:[%s502 + $0x38] sm:$0xff]
    %v511 = vld [vmem:[%s502 + $0x40] sm:$0xff]
    %v512 = vld [vmem:[%s502 + $0x48] sm:$0xff]
    %v513 = vld [vmem:[%s502 + $0x50] sm:$0xff]
    %v514 = vld [vmem:[%s502 + $0x58] sm:$0xff]
    %v515 = vld [vmem:[%s502 + $0x60] sm:$0xff]
    %v516 = vld [vmem:[%s502 + $0x68] sm:$0xff]
    %v517 = vld [vmem:[%s502 + $0x70] sm:$0xff]
    %v518 = vld [vmem:[%s502 + $0x78] sm:$0xff]
    %v519 = vld [vmem:[%s502 + $0x80] sm:$0xff]
    %v520 = vld [vmem:[%s502 + $0x88] sm:$0xff]
    %v521 = vld [vmem:[%s502 + $0x90] sm:$0xff]
    %v522 = vld [vmem:[%s502 + $0x98] sm:$0xff]
    %v523 = vld [vmem:[%s502 + $0xa0] sm:$0xff]
    %v524 = vld [vmem:[%s502 + $0xa8] sm:$0xff]
    %v525 = vld [vmem:[%s502 + $0xb0] sm:$0xff]
    %v526 = vld [vmem:[%s502 + $0xb8] sm:$0xff]
    %v527 = vld [vmem:[%s502 + $0xc0] sm:$0xff]
    %v528 = vld [vmem:[%s502 + $0xc8] sm:$0xff]
    %v529 = vld [vmem:[%s502 + $0xd0] sm:$0xff]
    %v530 = vld [vmem:[%s502 + $0xd8] sm:$0xff]
    %v531 = vld [vmem:[%s502 + $0xe0] sm:$0xff]
    %v532 = vld [vmem:[%s502 + $0xe8] sm:$0xff]
    %v533 = vld [vmem:[%s502 + $0xf0] sm:$0xff]
    %v534 = vld [vmem:[%s502 + $0xf8] sm:$0xff]
    %v535 = vld [vmem:[#allocation2] sm:$0xff]
    %v536 = vld [vmem:[#allocation2 + $0x8] sm:$0xff]
    %v537 = vld [vmem:[#allocation2 + $0x10] sm:$0xff]
    %v538 = vld [vmem:[#allocation2 + $0x18] sm:$0xff]
    %v571 = vunpack.c.l.b16 %v437
    %v572 = vunpack.c.h.b16 %v437
    %v573 = vunpack.c.l.b16 %v438
    %v574 = vunpack.c.h.b16 %v438
    %v575 = vunpack.c.l.b16 %v439
    %v576 = vunpack.c.h.b16 %v439
    %v577 = vunpack.c.l.b16 %v440
    %v578 = vunpack.c.h.b16 %v440
    %v579 = vunpack.c.l.b16 %v441
    %v580 = vunpack.c.h.b16 %v441
    %v581 = vunpack.c.l.b16 %v442
    %v582 = vunpack.c.h.b16 %v442
    %v583 = vunpack.c.l.b16 %v443
    %v584 = vunpack.c.h.b16 %v443
    %v585 = vunpack.c.l.b16 %v444
    %v586 = vunpack.c.h.b16 %v444
    %v587 = vunpack.c.l.b16 %v445
    %v588 = vunpack.c.h.b16 %v445
    %v589 = vunpack.c.l.b16 %v446
    %v590 = vunpack.c.h.b16 %v446
    %v591 = vunpack.c.l.b16 %v447
    %v592 = vunpack.c.h.b16 %v447
    %v593 = vunpack.c.l.b16 %v448
    %v594 = vunpack.c.h.b16 %v448
    %v595 = vunpack.c.l.b16 %v449
    %v596 = vunpack.c.h.b16 %v449
    %v597 = vunpack.c.l.b16 %v450
    %v598 = vunpack.c.h.b16 %v450
    %v599 = vunpack.c.l.b16 %v451
    %v600 = vunpack.c.h.b16 %v451
    %v601 = vunpack.c.l.b16 %v452
    %v602 = vunpack.c.h.b16 %v452
    %v603 = vunpack.c.l.b16 %v453
    %v604 = vunpack.c.h.b16 %v453
    %v605 = vunpack.c.l.b16 %v454
    %v606 = vunpack.c.h.b16 %v454
    %v607 = vunpack.c.l.b16 %v455
    %v608 = vunpack.c.h.b16 %v455
    %v609 = vunpack.c.l.b16 %v456
    %v610 = vunpack.c.h.b16 %v456
    %v611 = vunpack.c.l.b16 %v457
    %v612 = vunpack.c.h.b16 %v457
    %v613 = vunpack.c.l.b16 %v458
    %v614 = vunpack.c.h.b16 %v458
    %v615 = vunpack.c.l.b16 %v459
    %v616 = vunpack.c.h.b16 %v459
    %v617 = vunpack.c.l.b16 %v460
    %v618 = vunpack.c.h.b16 %v460
    %v619 = vunpack.c.l.b16 %v461
    %v620 = vunpack.c.h.b16 %v461
    %v621 = vunpack.c.l.b16 %v462
    %v622 = vunpack.c.h.b16 %v462
    %v623 = vunpack.c.l.b16 %v463
    %v624 = vunpack.c.h.b16 %v463
    %v625 = vunpack.c.l.b16 %v464
    %v626 = vunpack.c.h.b16 %v464
    %v627 = vunpack.c.l.b16 %v465
    %v628 = vunpack.c.h.b16 %v465
    %v629 = vunpack.c.l.b16 %v466
    %v630 = vunpack.c.h.b16 %v466
    %v631 = vunpack.c.l.b16 %v467
    %v632 = vunpack.c.h.b16 %v467
    %v633 = vunpack.c.l.b16 %v468
    %v634 = vunpack.c.h.b16 %v468
    %v635 = vpack.c.b16 %v575, %v571
    %v636 = vpack.c.b16 %v576, %v572
    %v637 = vpack.c.b16 %v577, %v573
    %v638 = vpack.c.b16 %v578, %v574
    %v639 = vpack.c.b16 %v583, %v579
    %v640 = vpack.c.b16 %v584, %v580
    %v641 = vpack.c.b16 %v585, %v581
    %v642 = vpack.c.b16 %v586, %v582
    %v643 = vpack.c.b16 %v591, %v587
    %v644 = vpack.c.b16 %v592, %v588
    %v645 = vpack.c.b16 %v593, %v589
    %v646 = vpack.c.b16 %v594, %v590
    %v647 = vpack.c.b16 %v599, %v595
    %v648 = vpack.c.b16 %v600, %v596
    %v649 = vpack.c.b16 %v601, %v597
    %v650 = vpack.c.b16 %v602, %v598
    %v651 = vpack.c.b16 %v607, %v603
    %v652 = vpack.c.b16 %v608, %v604
    %v653 = vpack.c.b16 %v609, %v605
    %v654 = vpack.c.b16 %v610, %v606
    %v655 = vpack.c.b16 %v615, %v611
    %v656 = vpack.c.b16 %v616, %v612
    %v657 = vpack.c.b16 %v617, %v613
    %v658 = vpack.c.b16 %v618, %v614
    %v659 = vpack.c.b16 %v623, %v619
    %v660 = vpack.c.b16 %v624, %v620
    %v661 = vpack.c.b16 %v625, %v621
    %v662 = vpack.c.b16 %v626, %v622
    %v663 = vpack.c.b16 %v631, %v627
    %v664 = vpack.c.b16 %v632, %v628
    %v665 = vpack.c.b16 %v633, %v629
    %v666 = vpack.c.b16 %v634, %v630
    %699 = vmatpush.bf16.msra.mxu0 %v663
    %700 = vmatpush.bf16.msra.mxu0 %v659
    %701 = vmatpush.bf16.msra.mxu0 %v655
    %702 = vmatpush.bf16.msra.mxu0 %v651
    %703 = vmatpush.bf16.msra.mxu0 %v647
    %704 = vmatpush.bf16.msra.mxu0 %v643
    %705 = vmatpush.bf16.msra.mxu0 %v639
    %706 = vmatpush.bf16.msra.mxu0 %v635
    %707 = vmatmul.bf16.gmra.mxu0 0
    %v708 = vpop.f32.mrf.mxu0
    %v709 = vadd.f32 0.0, %v708
    %v710 = vpop.f32.mrf.mxu0
    %711 = vdwg.mxu0
    %712 = vmatpush.bf16.msra.mxu0 %v664
    %713 = vmatpush.bf16.msra.mxu0 %v660
    %714 = vmatpush.bf16.msra.mxu0 %v656
    %715 = vmatpush.bf16.msra.mxu0 %v652
    %716 = vmatpush.bf16.msra.mxu0 %v648
    %717 = vmatpush.bf16.msra.mxu0 %v644
    %718 = vmatpush.bf16.msra.mxu0 %v640
    %719 = vmatpush.bf16.msra.mxu0 %v636
    %720 = vmatmul.bf16.gmra.mxu0 0
    %v721 = vpop.f32.mrf.mxu0
    %v722 = vadd.f32 0.0, %v721
    %v723 = vpop.f32.mrf.mxu0
    %724 = vdwg.mxu0
    %725 = vmatpush.bf16.msra.mxu0 %v665
    %726 = vmatpush.bf16.msra.mxu0 %v661
    %727 = vmatpush.bf16.msra.mxu0 %v657
    %728 = vmatpush.bf16.msra.mxu0 %v653
    %729 = vmatpush.bf16.msra.mxu0 %v649
    %730 = vmatpush.bf16.msra.mxu0 %v645
    %731 = vmatpush.bf16.msra.mxu0 %v641
    %732 = vmatpush.bf16.msra.mxu0 %v637
    %733 = vmatmul.bf16.gmra.mxu0 0
    %v734 = vpop.f32.mrf.mxu0
    %v735 = vadd.f32 0.0, %v734
    %v736 = vpop.f32.mrf.mxu0
    %737 = vdwg.mxu0
    %738 = vmatpush.bf16.msra.mxu0 %v666
    %739 = vmatpush.bf16.msra.mxu0 %v662
    %740 = vmatpush.bf16.msra.mxu0 %v658
    %741 = vmatpush.bf16.msra.mxu0 %v654
    %742 = vmatpush.bf16.msra.mxu0 %v650
    %743 = vmatpush.bf16.msra.mxu0 %v646
    %744 = vmatpush.bf16.msra.mxu0 %v642
    %745 = vmatpush.bf16.msra.mxu0 %v638
    %746 = vmatmul.bf16.gmra.mxu0 0
    %v747 = vpop.f32.mrf.mxu0
    %v748 = vadd.f32 0.0, %v747
    %v749 = vpop.f32.mrf.mxu0
    %750 = vdwg.mxu0
    %v751 = vadd.f32 %v535, %v709
    %v752 = vadd.f32 %v536, %v722
    %v753 = vadd.f32 %v537, %v735
    %v754 = vadd.f32 %v538, %v748
    %v755 = vxor.u32 %v751, 2147483648
    %v756 = vxor.u32 %v752, 2147483648
    %v757 = vxor.u32 %v753, 2147483648
    %v758 = vmul.f32 %v755, 1.442695
    %v759 = vpow.pop %v758
    %v760 = vmul.f32 %v756, 1.442695
    %v761 = vpow.pop %v760
    %v762 = vmul.f32 %v757, 1.442695
    %v763 = vpow.pop %v762
    %v764 = vadd.f32 %v759, 1.0
    %v765 = vadd.f32 %v761, 1.0
    %v766 = vadd.f32 %v763, 1.0
    %v767 = vrcp.pop %v764
    %v768 = vmul.f32 %v764, %v767
    %v769 = vsub.f32 1.0, %v768
    %v770 = vmul.f32 %v767, %v769
    %v771 = vadd.f32 %v767, %v770
    %vm772 = vweird.f32 %v764
    %vm773 = vweird.f32 %v767
    %vm774 = vmor %vm772, %vm773
    %v775 = vsel %vm774, %v767, %v771
    %v776 = vand.u32 2147483647, %v764
    %vm777 = vcmp.eq.f32.partialorder %v776, 8.507059e+37
    %v778 = vand.u32 %v764, 2147483648
    %v779 = vor.u32 1.1754944e-38, %v778
    %v780 = vsel %vm777, %v779, %v775
    %v781 = vmul.f32 1.0, %v780
    %v782 = vrcp.pop %v765
    %v783 = vmul.f32 %v765, %v782
    %v784 = vsub.f32 1.0, %v783
    %v785 = vmul.f32 %v782, %v784
    %v786 = vadd.f32 %v782, %v785
    %vm787 = vweird.f32 %v765
    %vm788 = vweird.f32 %v782
    %vm789 = vmor %vm787, %vm788
    %v790 = vsel %vm789, %v782, %v786
    %v791 = vand.u32 2147483647, %v765
    %vm792 = vcmp.eq.f32.partialorder %v791, 8.507059e+37
    %v793 = vand.u32 %v765, 2147483648
    %v794 = vor.u32 1.1754944e-38, %v793
    %v795 = vsel %vm792, %v794, %v790
    %v796 = vmul.f32 1.0, %v795
    %v797 = vrcp.pop %v766
    %v798 = vmul.f32 %v766, %v797
    %v799 = vsub.f32 1.0, %v798
    %v800 = vmul.f32 %v797, %v799
    %v801 = vadd.f32 %v797, %v800
    %vm802 = vweird.f32 %v766
    %vm803 = vweird.f32 %v797
    %vm804 = vmor %vm802, %vm803
    %v805 = vsel %vm804, %v797, %v801
    %v806 = vand.u32 2147483647, %v766
    %vm807 = vcmp.eq.f32.partialorder %v806, 8.507059e+37
    %v808 = vand.u32 %v766, 2147483648
    %v809 = vor.u32 1.1754944e-38, %v808
    %v810 = vsel %vm807, %v809, %v805
    %v811 = vmul.f32 1.0, %v810
    %v812 = vtanh.pop %v754
    %v813 = vmul.f32 %v796, 0.0
    %v814 = vmul.f32 %v781, %v812
    %v815 = vadd.f32 %v813, %v814
    %v816 = vtanh.pop %v815
    %v817 = vmul.f32 %v811, %v816
    %v818 = vpack.c.bf16 %v817, %v817
    %v851 = vunpack.c.l.b16 %v470
    %v852 = vunpack.c.h.b16 %v470
    %v853 = vunpack.c.l.b16 %v471
    %v854 = vunpack.c.h.b16 %v471
    %v855 = vunpack.c.l.b16 %v472
    %v856 = vunpack.c.h.b16 %v472
    %v857 = vunpack.c.l.b16 %v473
    %v858 = vunpack.c.h.b16 %v473
    %v859 = vunpack.c.l.b16 %v474
    %v860 = vunpack.c.h.b16 %v474
    %v861 = vunpack.c.l.b16 %v475
    %v862 = vunpack.c.h.b16 %v475
    %v863 = vunpack.c.l.b16 %v476
    %v864 = vunpack.c.h.b16 %v476
    %v865 = vunpack.c.l.b16 %v477
    %v866 = vunpack.c.h.b16 %v477
    %v867 = vunpack.c.l.b16 %v478
    %v868 = vunpack.c.h.b16 %v478
    %v869 = vunpack.c.l.b16 %v479
    %v870 = vunpack.c.h.b16 %v479
    %v871 = vunpack.c.l.b16 %v480
    %v872 = vunpack.c.h.b16 %v480
    %v873 = vunpack.c.l.b16 %v481
    %v874 = vunpack.c.h.b16 %v481
    %v875 = vunpack.c.l.b16 %v482
    %v876 = vunpack.c.h.b16 %v482
    %v877 = vunpack.c.l.b16 %v483
    %v878 = vunpack.c.h.b16 %v483
    %v879 = vunpack.c.l.b16 %v484
    %v880 = vunpack.c.h.b16 %v484
    %v881 = vunpack.c.l.b16 %v485
    %v882 = vunpack.c.h.b16 %v485
    %v883 = vunpack.c.l.b16 %v486
    %v884 = vunpack.c.h.b16 %v486
    %v885 = vunpack.c.l.b16 %v487
    %v886 = vunpack.c.h.b16 %v487
    %v887 = vunpack.c.l.b16 %v488
    %v888 = vunpack.c.h.b16 %v488
    %v889 = vunpack.c.l.b16 %v489
    %v890 = vunpack.c.h.b16 %v489
    %v891 = vunpack.c.l.b16 %v490
    %v892 = vunpack.c.h.b16 %v490
    %v893 = vunpack.c.l.b16 %v491
    %v894 = vunpack.c.h.b16 %v491
    %v895 = vunpack.c.l.b16 %v492
    %v896 = vunpack.c.h.b16 %v492
    %v897 = vunpack.c.l.b16 %v493
    %v898 = vunpack.c.h.b16 %v493
    %v899 = vunpack.c.l.b16 %v494
    %v900 = vunpack.c.h.b16 %v494
    %v901 = vunpack.c.l.b16 %v495
    %v902 = vunpack.c.h.b16 %v495
    %v903 = vunpack.c.l.b16 %v496
    %v904 = vunpack.c.h.b16 %v496
    %v905 = vunpack.c.l.b16 %v497
    %v906 = vunpack.c.h.b16 %v497
    %v907 = vunpack.c.l.b16 %v498
    %v908 = vunpack.c.h.b16 %v498
    %v909 = vunpack.c.l.b16 %v499
    %v910 = vunpack.c.h.b16 %v499
    %v911 = vunpack.c.l.b16 %v500
    %v912 = vunpack.c.h.b16 %v500
    %v913 = vunpack.c.l.b16 %v501
    %v914 = vunpack.c.h.b16 %v501
    %v915 = vpack.c.b16 %v855, %v851
    %v916 = vpack.c.b16 %v856, %v852
    %v917 = vpack.c.b16 %v857, %v853
    %v918 = vpack.c.b16 %v858, %v854
    %v919 = vpack.c.b16 %v863, %v859
    %v920 = vpack.c.b16 %v864, %v860
    %v921 = vpack.c.b16 %v865, %v861
    %v922 = vpack.c.b16 %v866, %v862
    %v923 = vpack.c.b16 %v871, %v867
    %v924 = vpack.c.b16 %v872, %v868
    %v925 = vpack.c.b16 %v873, %v869
    %v926 = vpack.c.b16 %v874, %v870
    %v927 = vpack.c.b16 %v879, %v875
    %v928 = vpack.c.b16 %v880, %v876
    %v929 = vpack.c.b16 %v881, %v877
    %v930 = vpack.c.b16 %v882, %v878
    %v931 = vpack.c.b16 %v887, %v883
    %v932 = vpack.c.b16 %v888, %v884
    %v933 = vpack.c.b16 %v889, %v885
    %v934 = vpack.c.b16 %v890, %v886
    %v935 = vpack.c.b16 %v895, %v891
    %v936 = vpack.c.b16 %v896, %v892
    %v937 = vpack.c.b16 %v897, %v893
    %v938 = vpack.c.b16 %v898, %v894
    %v939 = vpack.c.b16 %v903, %v899
    %v940 = vpack.c.b16 %v904, %v900
    %v941 = vpack.c.b16 %v905, %v901
    %v942 = vpack.c.b16 %v906, %v902
    %v943 = vpack.c.b16 %v911, %v907
    %v944 = vpack.c.b16 %v912, %v908
    %v945 = vpack.c.b16 %v913, %v909
    %v946 = vpack.c.b16 %v914, %v910
    %979 = vmatpush.bf16.msra.mxu0 %v943
    %980 = vmatpush.bf16.msra.mxu0 %v939
    %981 = vmatpush.bf16.msra.mxu0 %v935
    %982 = vmatpush.bf16.msra.mxu0 %v931
    %983 = vmatpush.bf16.msra.mxu0 %v927
    %984 = vmatpush.bf16.msra.mxu0 %v923
    %985 = vmatpush.bf16.msra.mxu0 %v919
    %986 = vmatpush.bf16.msra.mxu0 %v915
    %987 = vmatmul.bf16.gmra.mxu0 %v818
    %v988 = vpop.f32.mrf.mxu0
    %v989 = vadd.f32 0.0, %v988
    %v990 = vpop.f32.mrf.mxu0
    %991 = vdwg.mxu0
    %992 = vmatpush.bf16.msra.mxu0 %v944
    %993 = vmatpush.bf16.msra.mxu0 %v940
    %994 = vmatpush.bf16.msra.mxu0 %v936
    %995 = vmatpush.bf16.msra.mxu0 %v932
    %996 = vmatpush.bf16.msra.mxu0 %v928
    %997 = vmatpush.bf16.msra.mxu0 %v924
    %998 = vmatpush.bf16.msra.mxu0 %v920
    %999 = vmatpush.bf16.msra.mxu0 %v916
    %1000 = vmatmul.bf16.gmra.mxu0 %v818
    %v1001 = vpop.f32.mrf.mxu0
    %v1002 = vadd.f32 0.0, %v1001
    %v1003 = vpop.f32.mrf.mxu0
    %1004 = vdwg.mxu0
    %1005 = vmatpush.bf16.msra.mxu0 %v945
    %1006 = vmatpush.bf16.msra.mxu0 %v941
    %1007 = vmatpush.bf16.msra.mxu0 %v937
    %1008 = vmatpush.bf16.msra.mxu0 %v933
    %1009 = vmatpush.bf16.msra.mxu0 %v929
    %1010 = vmatpush.bf16.msra.mxu0 %v925
    %1011 = vmatpush.bf16.msra.mxu0 %v921
    %1012 = vmatpush.bf16.msra.mxu0 %v917
    %1013 = vmatmul.bf16.gmra.mxu0 %v818
    %v1014 = vpop.f32.mrf.mxu0
    %v1015 = vadd.f32 0.0, %v1014
    %v1016 = vpop.f32.mrf.mxu0
    %1017 = vdwg.mxu0
    %1018 = vmatpush.bf16.msra.mxu0 %v946
    %1019 = vmatpush.bf16.msra.mxu0 %v942
    %1020 = vmatpush.bf16.msra.mxu0 %v938
    %1021 = vmatpush.bf16.msra.mxu0 %v934
    %1022 = vmatpush.bf16.msra.mxu0 %v930
    %1023 = vmatpush.bf16.msra.mxu0 %v926
    %1024 = vmatpush.bf16.msra.mxu0 %v922
    %1025 = vmatpush.bf16.msra.mxu0 %v918
    %1026 = vmatmul.bf16.gmra.mxu0 %v818
    %v1027 = vpop.f32.mrf.mxu0
    %v1028 = vadd.f32 0.0, %v1027
    %v1029 = vpop.f32.mrf.mxu0
    %1030 = vdwg.mxu0
    %v1063 = vunpack.c.l.b16 %v503
    %v1064 = vunpack.c.h.b16 %v503
    %v1065 = vunpack.c.l.b16 %v504
    %v1066 = vunpack.c.h.b16 %v504
    %v1067 = vunpack.c.l.b16 %v505
    %v1068 = vunpack.c.h.b16 %v505
    %v1069 = vunpack.c.l.b16 %v506
    %v1070 = vunpack.c.h.b16 %v506
    %v1071 = vunpack.c.l.b16 %v507
    %v1072 = vunpack.c.h.b16 %v507
    %v1073 = vunpack.c.l.b16 %v508
    %v1074 = vunpack.c.h.b16 %v508
    %v1075 = vunpack.c.l.b16 %v509
    %v1076 = vunpack.c.h.b16 %v509
    %v1077 = vunpack.c.l.b16 %v510
    %v1078 = vunpack.c.h.b16 %v510
    %v1079 = vunpack.c.l.b16 %v511
    %v1080 = vunpack.c.h.b16 %v511
    %v1081 = vunpack.c.l.b16 %v512
    %v1082 = vunpack.c.h.b16 %v512
    %v1083 = vunpack.c.l.b16 %v513
    %v1084 = vunpack.c.h.b16 %v513
    %v1085 = vunpack.c.l.b16 %v514
    %v1086 = vunpack.c.h.b16 %v514
    %v1087 = vunpack.c.l.b16 %v515
    %v1088 = vunpack.c.h.b16 %v515
    %v1089 = vunpack.c.l.b16 %v516
    %v1090 = vunpack.c.h.b16 %v516
    %v1091 = vunpack.c.l.b16 %v517
    %v1092 = vunpack.c.h.b16 %v517
    %v1093 = vunpack.c.l.b16 %v518
    %v1094 = vunpack.c.h.b16 %v518
    %v1095 = vunpack.c.l.b16 %v519
    %v1096 = vunpack.c.h.b16 %v519
    %v1097 = vunpack.c.l.b16 %v520
    %v1098 = vunpack.c.h.b16 %v520
    %v1099 = vunpack.c.l.b16 %v521
    %v1100 = vunpack.c.h.b16 %v521
    %v1101 = vunpack.c.l.b16 %v522
    %v1102 = vunpack.c.h.b16 %v522
    %v1103 = vunpack.c.l.b16 %v523
    %v1104 = vunpack.c.h.b16 %v523
    %v1105 = vunpack.c.l.b16 %v524
    %v1106 = vunpack.c.h.b16 %v524
    %v1107 = vunpack.c.l.b16 %v525
    %v1108 = vunpack.c.h.b16 %v525
    %v1109 = vunpack.c.l.b16 %v526
    %v1110 = vunpack.c.h.b16 %v526
    %v1111 = vunpack.c.l.b16 %v527
    %v1112 = vunpack.c.h.b16 %v527
    %v1113 = vunpack.c.l.b16 %v528
    %v1114 = vunpack.c.h.b16 %v528
    %v1115 = vunpack.c.l.b16 %v529
    %v1116 = vunpack.c.h.b16 %v529
    %v1117 = vunpack.c.l.b16 %v530
    %v1118 = vunpack.c.h.b16 %v530
    %v1119 = vunpack.c.l.b16 %v531
    %v1120 = vunpack.c.h.b16 %v531
    %v1121 = vunpack.c.l.b16 %v532
    %v1122 = vunpack.c.h.b16 %v532
    %v1123 = vunpack.c.l.b16 %v533
    %v1124 = vunpack.c.h.b16 %v533
    %v1125 = vunpack.c.l.b16 %v534
    %v1126 = vunpack.c.h.b16 %v534
    %v1127 = vpack.c.b16 %v1067, %v1063
    %v1128 = vpack.c.b16 %v1068, %v1064
    %v1129 = vpack.c.b16 %v1069, %v1065
    %v1130 = vpack.c.b16 %v1070, %v1066
    %v1131 = vpack.c.b16 %v1075, %v1071
    %v1132 = vpack.c.b16 %v1076, %v1072
    %v1133 = vpack.c.b16 %v1077, %v1073
    %v1134 = vpack.c.b16 %v1078, %v1074
    %v1135 = vpack.c.b16 %v1083, %v1079
    %v1136 = vpack.c.b16 %v1084, %v1080
    %v1137 = vpack.c.b16 %v1085, %v1081
    %v1138 = vpack.c.b16 %v1086, %v1082
    %v1139 = vpack.c.b16 %v1091, %v1087
    %v1140 = vpack.c.b16 %v1092, %v1088
    %v1141 = vpack.c.b16 %v1093, %v1089
    %v1142 = vpack.c.b16 %v1094, %v1090
    %v1143 = vpack.c.b16 %v1099, %v1095
    %v1144 = vpack.c.b16 %v1100, %v1096
    %v1145 = vpack.c.b16 %v1101, %v1097
    %v1146 = vpack.c.b16 %v1102, %v1098
    %v1147 = vpack.c.b16 %v1107, %v1103
    %v1148 = vpack.c.b16 %v1108, %v1104
    %v1149 = vpack.c.b16 %v1109, %v1105
    %v1150 = vpack.c.b16 %v1110, %v1106
    %v1151 = vpack.c.b16 %v1115, %v1111
    %v1152 = vpack.c.b16 %v1116, %v1112
    %v1153 = vpack.c.b16 %v1117, %v1113
    %v1154 = vpack.c.b16 %v1118, %v1114
    %v1155 = vpack.c.b16 %v1123, %v1119
    %v1156 = vpack.c.b16 %v1124, %v1120
    %v1157 = vpack.c.b16 %v1125, %v1121
    %v1158 = vpack.c.b16 %v1126, %v1122
    %1191 = vmatpush.bf16.msra.mxu0 %v1155
    %1192 = vmatpush.bf16.msra.mxu0 %v1151
    %1193 = vmatpush.bf16.msra.mxu0 %v1147
    %1194 = vmatpush.bf16.msra.mxu0 %v1143
    %1195 = vmatpush.bf16.msra.mxu0 %v1139
    %1196 = vmatpush.bf16.msra.mxu0 %v1135
    %1197 = vmatpush.bf16.msra.mxu0 %v1131
    %1198 = vmatpush.bf16.msra.mxu0 %v1127
    %1199 = vmatmul.bf16.gmra.mxu0 0
    %v1200 = vpop.f32.mrf.mxu0
    %v1201 = vadd.f32 %v989, %v1200
    %v1202 = vpop.f32.mrf.mxu0
    %1203 = vdwg.mxu0
    %1204 = vmatpush.bf16.msra.mxu0 %v1156
    %1205 = vmatpush.bf16.msra.mxu0 %v1152
    %1206 = vmatpush.bf16.msra.mxu0 %v1148
    %1207 = vmatpush.bf16.msra.mxu0 %v1144
    %1208 = vmatpush.bf16.msra.mxu0 %v1140
    %1209 = vmatpush.bf16.msra.mxu0 %v1136
    %1210 = vmatpush.bf16.msra.mxu0 %v1132
    %1211 = vmatpush.bf16.msra.mxu0 %v1128
    %1212 = vmatmul.bf16.gmra.mxu0 0
    %v1213 = vpop.f32.mrf.mxu0
    %v1214 = vadd.f32 %v1002, %v1213
    %v1215 = vpop.f32.mrf.mxu0
    %1216 = vdwg.mxu0
    %1217 = vmatpush.bf16.msra.mxu0 %v1157
    %1218 = vmatpush.bf16.msra.mxu0 %v1153
    %1219 = vmatpush.bf16.msra.mxu0 %v1149
    %1220 = vmatpush.bf16.msra.mxu0 %v1145
    %1221 = vmatpush.bf16.msra.mxu0 %v1141
    %1222 = vmatpush.bf16.msra.mxu0 %v1137
    %1223 = vmatpush.bf16.msra.mxu0 %v1133
    %1224 = vmatpush.bf16.msra.mxu0 %v1129
    %1225 = vmatmul.bf16.gmra.mxu0 0
    %v1226 = vpop.f32.mrf.mxu0
    %v1227 = vadd.f32 %v1015, %v1226
    %v1228 = vpop.f32.mrf.mxu0
    %1229 = vdwg.mxu0
    %1230 = vmatpush.bf16.msra.mxu0 %v1158
    %1231 = vmatpush.bf16.msra.mxu0 %v1154
    %1232 = vmatpush.bf16.msra.mxu0 %v1150
    %1233 = vmatpush.bf16.msra.mxu0 %v1146
    %1234 = vmatpush.bf16.msra.mxu0 %v1142
    %1235 = vmatpush.bf16.msra.mxu0 %v1138
    %1236 = vmatpush.bf16.msra.mxu0 %v1134
    %1237 = vmatpush.bf16.msra.mxu0 %v1130
    %1238 = vmatmul.bf16.gmra.mxu0 0
    %v1239 = vpop.f32.mrf.mxu0
    %v1240 = vadd.f32 %v1028, %v1239
    %v1241 = vpop.f32.mrf.mxu0
    %1242 = vdwg.mxu0
    %v1243 = vadd.f32 %v1201, %v424
    %v1244 = vadd.f32 %v1214, %v425
    %v1245 = vadd.f32 %v1227, %v426
    %v1246 = vadd.f32 %v1240, %v427
    %v1247 = vxor.u32 %v1243, 2147483648
    %v1248 = vxor.u32 %v1244, 2147483648
    %v1249 = vxor.u32 %v1245, 2147483648
    %v1250 = vmul.f32 %v1247, 1.442695
    %v1251 = vpow.pop %v1250
    %v1252 = vmul.f32 %v1248, 1.442695
    %v1253 = vpow.pop %v1252
    %v1254 = vmul.f32 %v1249, 1.442695
    %v1255 = vpow.pop %v1254
    %v1256 = vadd.f32 %v1251, 1.0
    %v1257 = vadd.f32 %v1253, 1.0
    %v1258 = vadd.f32 %v1255, 1.0
    %v1259 = vrcp.pop %v1256
    %v1260 = vmul.f32 %v1256, %v1259
    %v1261 = vsub.f32 1.0, %v1260
    %v1262 = vmul.f32 %v1259, %v1261
    %v1263 = vadd.f32 %v1259, %v1262
    %vm1264 = vweird.f32 %v1256
    %vm1265 = vweird.f32 %v1259
    %vm1266 = vmor %vm1264, %vm1265
    %v1267 = vsel %vm1266, %v1259, %v1263
    %v1268 = vand.u32 2147483647, %v1256
    %vm1269 = vcmp.eq.f32.partialorder %v1268, 8.507059e+37
    %v1270 = vand.u32 %v1256, 2147483648
    %v1271 = vor.u32 1.1754944e-38, %v1270
    %v1272 = vsel %vm1269, %v1271, %v1267
    %v1273 = vmul.f32 1.0, %v1272
    %v1274 = vrcp.pop %v1257
    %v1275 = vmul.f32 %v1257, %v1274
    %v1276 = vsub.f32 1.0, %v1275
    %v1277 = vmul.f32 %v1274, %v1276
    %v1278 = vadd.f32 %v1274, %v1277
    %vm1279 = vweird.f32 %v1257
    %vm1280 = vweird.f32 %v1274
    %vm1281 = vmor %vm1279, %vm1280
    %v1282 = vsel %vm1281, %v1274, %v1278
    %v1283 = vand.u32 2147483647, %v1257
    %vm1284 = vcmp.eq.f32.partialorder %v1283, 8.507059e+37
    %v1285 = vand.u32 %v1257, 2147483648
    %v1286 = vor.u32 1.1754944e-38, %v1285
    %v1287 = vsel %vm1284, %v1286, %v1282
    %v1288 = vmul.f32 1.0, %v1287
    %v1289 = vrcp.pop %v1258
    %v1290 = vmul.f32 %v1258, %v1289
    %v1291 = vsub.f32 1.0, %v1290
    %v1292 = vmul.f32 %v1289, %v1291
    %v1293 = vadd.f32 %v1289, %v1292
    %vm1294 = vweird.f32 %v1258
    %vm1295 = vweird.f32 %v1289
    %vm1296 = vmor %vm1294, %vm1295
    %v1297 = vsel %vm1296, %v1289, %v1293
    %v1298 = vand.u32 2147483647, %v1258
    %vm1299 = vcmp.eq.f32.partialorder %v1298, 8.507059e+37
    %v1300 = vand.u32 %v1258, 2147483648
    %v1301 = vor.u32 1.1754944e-38, %v1300
    %v1302 = vsel %vm1299, %v1301, %v1297
    %v1303 = vmul.f32 1.0, %v1302
    %v1304 = vtanh.pop %v1246
    %v1305 = vmul.f32 %v1288, 0.0
    %v1306 = vmul.f32 %v1273, %v1304
    %v1307 = vadd.f32 %v1305, %v1306
    %v1308 = vtanh.pop %v1307
    %v1309 = vmul.f32 %v1303, %v1308
    %v1310 = vpack.c.bf16 %v1309, %v1309
    %s1311 = scalar_lea.vmem [#allocation2], 32
    %v1312 = vld [vmem:[%s1311] sm:$0xff]
    %v1313 = vld [vmem:[%s1311 + $0x8] sm:$0xff]
    %v1314 = vld [vmem:[%s1311 + $0x10] sm:$0xff]
    %v1315 = vld [vmem:[%s1311 + $0x18] sm:$0xff]
    %1316 = vmatpush.bf16.msra.mxu0 %v663
    %1317 = vmatpush.bf16.msra.mxu0 %v659
    %1318 = vmatpush.bf16.msra.mxu0 %v655
    %1319 = vmatpush.bf16.msra.mxu0 %v651
    %1320 = vmatpush.bf16.msra.mxu0 %v647
    %1321 = vmatpush.bf16.msra.mxu0 %v643
    %1322 = vmatpush.bf16.msra.mxu0 %v639
    %1323 = vmatpush.bf16.msra.mxu0 %v635
    %1324 = vmatmul.bf16.gmra.mxu0 %v818
    %v1325 = vpop.f32.mrf.mxu0
    %v1326 = vadd.f32 0.0, %v1325
    %v1327 = vpop.f32.mrf.mxu0
    %1328 = vdwg.mxu0
    %1329 = vmatpush.bf16.msra.mxu0 %v664
    %1330 = vmatpush.bf16.msra.mxu0 %v660
    %1331 = vmatpush.bf16.msra.mxu0 %v656
    %1332 = vmatpush.bf16.msra.mxu0 %v652
    %1333 = vmatpush.bf16.msra.mxu0 %v648
    %1334 = vmatpush.bf16.msra.mxu0 %v644
    %1335 = vmatpush.bf16.msra.mxu0 %v640
    %1336 = vmatpush.bf16.msra.mxu0 %v636
    %1337 = vmatmul.bf16.gmra.mxu0 %v818
    %v1338 = vpop.f32.mrf.mxu0
    %v1339 = vadd.f32 0.0, %v1338
    %v1340 = vpop.f32.mrf.mxu0
    %1341 = vdwg.mxu0
    %1342 = vmatpush.bf16.msra.mxu0 %v665
    %1343 = vmatpush.bf16.msra.mxu0 %v661
    %1344 = vmatpush.bf16.msra.mxu0 %v657
    %1345 = vmatpush.bf16.msra.mxu0 %v653
    %1346 = vmatpush.bf16.msra.mxu0 %v649
    %1347 = vmatpush.bf16.msra.mxu0 %v645
    %1348 = vmatpush.bf16.msra.mxu0 %v641
    %1349 = vmatpush.bf16.msra.mxu0 %v637
    %1350 = vmatmul.bf16.gmra.mxu0 %v818
    %v1351 = vpop.f32.mrf.mxu0
    %v1352 = vadd.f32 0.0, %v1351
    %v1353 = vpop.f32.mrf.mxu0
    %1354 = vdwg.mxu0
    %1355 = vmatpush.bf16.msra.mxu0 %v666
    %1356 = vmatpush.bf16.msra.mxu0 %v662
    %1357 = vmatpush.bf16.msra.mxu0 %v658
    %1358 = vmatpush.bf16.msra.mxu0 %v654
    %1359 = vmatpush.bf16.msra.mxu0 %v650
    %1360 = vmatpush.bf16.msra.mxu0 %v646
    %1361 = vmatpush.bf16.msra.mxu0 %v642
    %1362 = vmatpush.bf16.msra.mxu0 %v638
    %1363 = vmatmul.bf16.gmra.mxu0 %v818
    %v1364 = vpop.f32.mrf.mxu0
    %v1365 = vadd.f32 0.0, %v1364
    %v1366 = vpop.f32.mrf.mxu0
    %1367 = vdwg.mxu0
    %v1368 = vadd.f32 %v1312, %v1326
    %v1369 = vadd.f32 %v1313, %v1339
    %v1370 = vadd.f32 %v1314, %v1352
    %v1371 = vadd.f32 %v1315, %v1365
    %v1372 = vxor.u32 %v1368, 2147483648
    %v1373 = vxor.u32 %v1369, 2147483648
    %v1374 = vxor.u32 %v1370, 2147483648
    %v1375 = vmul.f32 %v1372, 1.442695
    %v1376 = vpow.pop %v1375
    %v1377 = vmul.f32 %v1373, 1.442695
    %v1378 = vpow.pop %v1377
    %v1379 = vmul.f32 %v1374, 1.442695
    %v1380 = vpow.pop %v1379
    %v1381 = vadd.f32 %v1376, 1.0
    %v1382 = vadd.f32 %v1378, 1.0
    %v1383 = vadd.f32 %v1380, 1.0
    %v1384 = vrcp.pop %v1381
    %v1385 = vmul.f32 %v1381, %v1384
    %v1386 = vsub.f32 1.0, %v1385
    %v1387 = vmul.f32 %v1384, %v1386
    %v1388 = vadd.f32 %v1384, %v1387
    %vm1389 = vweird.f32 %v1381
    %vm1390 = vweird.f32 %v1384
    %vm1391 = vmor %vm1389, %vm1390
    %v1392 = vsel %vm1391, %v1384, %v1388
    %v1393 = vand.u32 2147483647, %v1381
    %vm1394 = vcmp.eq.f32.partialorder %v1393, 8.507059e+37
    %v1395 = vand.u32 %v1381, 2147483648
    %v1396 = vor.u32 1.1754944e-38, %v1395
    %v1397 = vsel %vm1394, %v1396, %v1392
    %v1398 = vmul.f32 1.0, %v1397
    %v1399 = vrcp.pop %v1382
    %v1400 = vmul.f32 %v1382, %v1399
    %v1401 = vsub.f32 1.0, %v1400
    %v1402 = vmul.f32 %v1399, %v1401
    %v1403 = vadd.f32 %v1399, %v1402
    %vm1404 = vweird.f32 %v1382
    %vm1405 = vweird.f32 %v1399
    %vm1406 = vmor %vm1404, %vm1405
    %v1407 = vsel %vm1406, %v1399, %v1403
    %v1408 = vand.u32 2147483647, %v1382
    %vm1409 = vcmp.eq.f32.partialorder %v1408, 8.507059e+37
    %v1410 = vand.u32 %v1382, 2147483648
    %v1411 = vor.u32 1.1754944e-38, %v1410
    %v1412 = vsel %vm1409, %v1411, %v1407
    %v1413 = vmul.f32 1.0, %v1412
    %v1414 = vrcp.pop %v1383
    %v1415 = vmul.f32 %v1383, %v1414
    %v1416 = vsub.f32 1.0, %v1415
    %v1417 = vmul.f32 %v1414, %v1416
    %v1418 = vadd.f32 %v1414, %v1417
    %vm1419 = vweird.f32 %v1383
    %vm1420 = vweird.f32 %v1414
    %vm1421 = vmor %vm1419, %vm1420
    %v1422 = vsel %vm1421, %v1414, %v1418
    %v1423 = vand.u32 2147483647, %v1383
    %vm1424 = vcmp.eq.f32.partialorder %v1423, 8.507059e+37
    %v1425 = vand.u32 %v1383, 2147483648
    %v1426 = vor.u32 1.1754944e-38, %v1425
    %v1427 = vsel %vm1424, %v1426, %v1422
    %v1428 = vmul.f32 1.0, %v1427
    %v1429 = vtanh.pop %v1371
    %v1430 = vmul.f32 %v1413, %v815
    %v1431 = vmul.f32 %v1398, %v1429
    %v1432 = vadd.f32 %v1430, %v1431
    %v1433 = vtanh.pop %v1432
    %v1434 = vmul.f32 %v1428, %v1433
    %v1435 = vpack.c.bf16 %v1434, %v1434
    %1436 = vmatpush.bf16.msra.mxu0 %v943
    %1437 = vmatpush.bf16.msra.mxu0 %v939
    %1438 = vmatpush.bf16.msra.mxu0 %v935
    %1439 = vmatpush.bf16.msra.mxu0 %v931
    %1440 = vmatpush.bf16.msra.mxu0 %v927
    %1441 = vmatpush.bf16.msra.mxu0 %v923
    %1442 = vmatpush.bf16.msra.mxu0 %v919
    %1443 = vmatpush.bf16.msra.mxu0 %v915
    %1444 = vmatmul.bf16.gmra.mxu0 %v1435
    %v1445 = vpop.f32.mrf.mxu0
    %v1446 = vadd.f32 0.0, %v1445
    %v1447 = vpop.f32.mrf.mxu0
    %1448 = vdwg.mxu0
    %1449 = vmatpush.bf16.msra.mxu0 %v944
    %1450 = vmatpush.bf16.msra.mxu0 %v940
    %1451 = vmatpush.bf16.msra.mxu0 %v936
    %1452 = vmatpush.bf16.msra.mxu0 %v932
    %1453 = vmatpush.bf16.msra.mxu0 %v928
    %1454 = vmatpush.bf16.msra.mxu0 %v924
    %1455 = vmatpush.bf16.msra.mxu0 %v920
    %1456 = vmatpush.bf16.msra.mxu0 %v916
    %1457 = vmatmul.bf16.gmra.mxu0 %v1435
    %v1458 = vpop.f32.mrf.mxu0
    %v1459 = vadd.f32 0.0, %v1458
    %v1460 = vpop.f32.mrf.mxu0
    %1461 = vdwg.mxu0
    %1462 = vmatpush.bf16.msra.mxu0 %v945
    %1463 = vmatpush.bf16.msra.mxu0 %v941
    %1464 = vmatpush.bf16.msra.mxu0 %v937
    %1465 = vmatpush.bf16.msra.mxu0 %v933
    %1466 = vmatpush.bf16.msra.mxu0 %v929
    %1467 = vmatpush.bf16.msra.mxu0 %v925
    %1468 = vmatpush.bf16.msra.mxu0 %v921
    %1469 = vmatpush.bf16.msra.mxu0 %v917
    %1470 = vmatmul.bf16.gmra.mxu0 %v1435
    %v1471 = vpop.f32.mrf.mxu0
    %v1472 = vadd.f32 0.0, %v1471
    %v1473 = vpop.f32.mrf.mxu0
    %1474 = vdwg.mxu0
    %1475 = vmatpush.bf16.msra.mxu0 %v946
    %1476 = vmatpush.bf16.msra.mxu0 %v942
    %1477 = vmatpush.bf16.msra.mxu0 %v938
    %1478 = vmatpush.bf16.msra.mxu0 %v934
    %1479 = vmatpush.bf16.msra.mxu0 %v930
    %1480 = vmatpush.bf16.msra.mxu0 %v926
    %1481 = vmatpush.bf16.msra.mxu0 %v922
    %1482 = vmatpush.bf16.msra.mxu0 %v918
    %1483 = vmatmul.bf16.gmra.mxu0 %v1435
    %v1484 = vpop.f32.mrf.mxu0
    %v1485 = vadd.f32 0.0, %v1484
    %v1486 = vpop.f32.mrf.mxu0
    %1487 = vdwg.mxu0
    %1488 = vmatpush.bf16.msra.mxu0 %v1155
    %1489 = vmatpush.bf16.msra.mxu0 %v1151
    %1490 = vmatpush.bf16.msra.mxu0 %v1147
    %1491 = vmatpush.bf16.msra.mxu0 %v1143
    %1492 = vmatpush.bf16.msra.mxu0 %v1139
    %1493 = vmatpush.bf16.msra.mxu0 %v1135
    %1494 = vmatpush.bf16.msra.mxu0 %v1131
    %1495 = vmatpush.bf16.msra.mxu0 %v1127
    %1496 = vmatmul.bf16.gmra.mxu0 %v1310
    %v1497 = vpop.f32.mrf.mxu0
    %v1498 = vadd.f32 %v1446, %v1497
    %v1499 = vpop.f32.mrf.mxu0
    %1500 = vdwg.mxu0
    %1501 = vmatpush.bf16.msra.mxu0 %v1156
    %1502 = vmatpush.bf16.msra.mxu0 %v1152
    %1503 = vmatpush.bf16.msra.mxu0 %v1148
    %1504 = vmatpush.bf16.msra.mxu0 %v1144
    %1505 = vmatpush.bf16.msra.mxu0 %v1140
    %1506 = vmatpush.bf16.msra.mxu0 %v1136
    %1507 = vmatpush.bf16.msra.mxu0 %v1132
    %1508 = vmatpush.bf16.msra.mxu0 %v1128
    %1509 = vmatmul.bf16.gmra.mxu0 %v1310
    %v1510 = vpop.f32.mrf.mxu0
    %v1511 = vadd.f32 %v1459, %v1510
    %v1512 = vpop.f32.mrf.mxu0
    %1513 = vdwg.mxu0
    %1514 = vmatpush.bf16.msra.mxu0 %v1157
    %1515 = vmatpush.bf16.msra.mxu0 %v1153
    %1516 = vmatpush.bf16.msra.mxu0 %v1149
    %1517 = vmatpush.bf16.msra.mxu0 %v1145
    %1518 = vmatpush.bf16.msra.mxu0 %v1141
    %1519 = vmatpush.bf16.msra.mxu0 %v1137
    %1520 = vmatpush.bf16.msra.mxu0 %v1133
    %1521 = vmatpush.bf16.msra.mxu0 %v1129
    %1522 = vmatmul.bf16.gmra.mxu0 %v1310
    %v1523 = vpop.f32.mrf.mxu0
    %v1524 = vadd.f32 %v1472, %v1523
    %v1525 = vpop.f32.mrf.mxu0
    %1526 = vdwg.mxu0
    %1527 = vmatpush.bf16.msra.mxu0 %v1158
    %1528 = vmatpush.bf16.msra.mxu0 %v1154
    %1529 = vmatpush.bf16.msra.mxu0 %v1150
    %1530 = vmatpush.bf16.msra.mxu0 %v1146
    %1531 = vmatpush.bf16.msra.mxu0 %v1142
    %1532 = vmatpush.bf16.msra.mxu0 %v1138
    %1533 = vmatpush.bf16.msra.mxu0 %v1134
    %1534 = vmatpush.bf16.msra.mxu0 %v1130
    %1535 = vmatmul.bf16.gmra.mxu0 %v1310
    %v1536 = vpop.f32.mrf.mxu0
    %v1537 = vadd.f32 %v1485, %v1536
    %v1538 = vpop.f32.mrf.mxu0
    %1539 = vdwg.mxu0
    %v1540 = vadd.f32 %v1498, %v424
    %v1541 = vadd.f32 %v1511, %v425
    %v1542 = vadd.f32 %v1524, %v426
    %v1543 = vadd.f32 %v1537, %v427
    %v1544 = vxor.u32 %v1540, 2147483648
    %v1545 = vxor.u32 %v1541, 2147483648
    %v1546 = vxor.u32 %v1542, 2147483648
    %v1547 = vmul.f32 %v1544, 1.442695
    %v1548 = vpow.pop %v1547
    %v1549 = vmul.f32 %v1545, 1.442695
    %v1550 = vpow.pop %v1549
    %v1551 = vmul.f32 %v1546, 1.442695
    %v1552 = vpow.pop %v1551
    %v1553 = vadd.f32 %v1548, 1.0
    %v1554 = vadd.f32 %v1550, 1.0
    %v1555 = vadd.f32 %v1552, 1.0
    %v1556 = vrcp.pop %v1553
    %v1557 = vmul.f32 %v1553, %v1556
    %v1558 = vsub.f32 1.0, %v1557
    %v1559 = vmul.f32 %v1556, %v1558
    %v1560 = vadd.f32 %v1556, %v1559
    %vm1561 = vweird.f32 %v1553
    %vm1562 = vweird.f32 %v1556
    %vm1563 = vmor %vm1561, %vm1562
    %v1564 = vsel %vm1563, %v1556, %v1560
    %v1565 = vand.u32 2147483647, %v1553
    %vm1566 = vcmp.eq.f32.partialorder %v1565, 8.507059e+37
    %v1567 = vand.u32 %v1553, 2147483648
    %v1568 = vor.u32 1.1754944e-38, %v1567
    %v1569 = vsel %vm1566, %v1568, %v1564
    %v1570 = vmul.f32 1.0, %v1569
    %v1571 = vrcp.pop %v1554
    %v1572 = vmul.f32 %v1554, %v1571
    %v1573 = vsub.f32 1.0, %v1572
    %v1574 = vmul.f32 %v1571, %v1573
    %v1575 = vadd.f32 %v1571, %v1574
    %vm1576 = vweird.f32 %v1554
    %vm1577 = vweird.f32 %v1571
    %vm1578 = vmor %vm1576, %vm1577
    %v1579 = vsel %vm1578, %v1571, %v1575
    %v1580 = vand.u32 2147483647, %v1554
    %vm1581 = vcmp.eq.f32.partialorder %v1580, 8.507059e+37
    %v1582 = vand.u32 %v1554, 2147483648
    %v1583 = vor.u32 1.1754944e-38, %v1582
    %v1584 = vsel %vm1581, %v1583, %v1579
    %v1585 = vmul.f32 1.0, %v1584
    %v1586 = vrcp.pop %v1555
    %v1587 = vmul.f32 %v1555, %v1586
    %v1588 = vsub.f32 1.0, %v1587
    %v1589 = vmul.f32 %v1586, %v1588
    %v1590 = vadd.f32 %v1586, %v1589
    %vm1591 = vweird.f32 %v1555
    %vm1592 = vweird.f32 %v1586
    %vm1593 = vmor %vm1591, %vm1592
    %v1594 = vsel %vm1593, %v1586, %v1590
    %v1595 = vand.u32 2147483647, %v1555
    %vm1596 = vcmp.eq.f32.partialorder %v1595, 8.507059e+37
    %v1597 = vand.u32 %v1555, 2147483648
    %v1598 = vor.u32 1.1754944e-38, %v1597
    %v1599 = vsel %vm1596, %v1598, %v1594
    %v1600 = vmul.f32 1.0, %v1599
    %v1601 = vtanh.pop %v1543
    %v1602 = vmul.f32 %v1585, %v1307
    %v1603 = vmul.f32 %v1570, %v1601
    %v1604 = vadd.f32 %v1602, %v1603
    %v1605 = vtanh.pop %v1604
    %v1606 = vmul.f32 %v1600, %v1605
    %v1607 = vpack.c.bf16 %v1606, %v1606
    %s1608 = scalar_lea.vmem [#allocation2], 64
    %v1609 = vld [vmem:[%s1608] sm:$0xff]
    %v1610 = vld [vmem:[%s1608 + $0x8] sm:$0xff]
    %v1611 = vld [vmem:[%s1608 + $0x10] sm:$0xff]
    %v1612 = vld [vmem:[%s1608 + $0x18] sm:$0xff]
    %1613 = vmatpush.bf16.msra.mxu0 %v663
    %1614 = vmatpush.bf16.msra.mxu0 %v659
    %1615 = vmatpush.bf16.msra.mxu0 %v655
    %1616 = vmatpush.bf16.msra.mxu0 %v651
    %1617 = vmatpush.bf16.msra.mxu0 %v647
    %1618 = vmatpush.bf16.msra.mxu0 %v643
    %1619 = vmatpush.bf16.msra.mxu0 %v639
    %1620 = vmatpush.bf16.msra.mxu0 %v635
    %1621 = vmatmul.bf16.gmra.mxu0 %v1435
    %v1622 = vpop.f32.mrf.mxu0
    %v1623 = vadd.f32 0.0, %v1622
    %v1624 = vpop.f32.mrf.mxu0
    %1625 = vdwg.mxu0
    %1626 = vmatpush.bf16.msra.mxu0 %v664
    %1627 = vmatpush.bf16.msra.mxu0 %v660
    %1628 = vmatpush.bf16.msra.mxu0 %v656
    %1629 = vmatpush.bf16.msra.mxu0 %v652
    %1630 = vmatpush.bf16.msra.mxu0 %v648
    %1631 = vmatpush.bf16.msra.mxu0 %v644
    %1632 = vmatpush.bf16.msra.mxu0 %v640
    %1633 = vmatpush.bf16.msra.mxu0 %v636
    %1634 = vmatmul.bf16.gmra.mxu0 %v1435
    %v1635 = vpop.f32.mrf.mxu0
    %v1636 = vadd.f32 0.0, %v1635
    %v1637 = vpop.f32.mrf.mxu0
    %1638 = vdwg.mxu0
    %1639 = vmatpush.bf16.msra.mxu0 %v665
    %1640 = vmatpush.bf16.msra.mxu0 %v661
    %1641 = vmatpush.bf16.msra.mxu0 %v657
    %1642 = vmatpush.bf16.msra.mxu0 %v653
    %1643 = vmatpush.bf16.msra.mxu0 %v649
    %1644 = vmatpush.bf16.msra.mxu0 %v645
    %1645 = vmatpush.bf16.msra.mxu0 %v641
    %1646 = vmatpush.bf16.msra.mxu0 %v637
    %1647 = vmatmul.bf16.gmra.mxu0 %v1435
    %v1648 = vpop.f32.mrf.mxu0
    %v1649 = vadd.f32 0.0, %v1648
    %v1650 = vpop.f32.mrf.mxu0
    %1651 = vdwg.mxu0
    %1652 = vmatpush.bf16.msra.mxu0 %v666
    %1653 = vmatpush.bf16.msra.mxu0 %v662
    %1654 = vmatpush.bf16.msra.mxu0 %v658
    %1655 = vmatpush.bf16.msra.mxu0 %v654
    %1656 = vmatpush.bf16.msra.mxu0 %v650
    %1657 = vmatpush.bf16.msra.mxu0 %v646
    %1658 = vmatpush.bf16.msra.mxu0 %v642
    %1659 = vmatpush.bf16.msra.mxu0 %v638
    %1660 = vmatmul.bf16.gmra.mxu0 %v1435
    %v1661 = vpop.f32.mrf.mxu0
    %v1662 = vadd.f32 0.0, %v1661
    %v1663 = vpop.f32.mrf.mxu0
    %1664 = vdwg.mxu0
    %v1665 = vadd.f32 %v1609, %v1623
    %v1666 = vadd.f32 %v1610, %v1636
    %v1667 = vadd.f32 %v1611, %v1649
    %v1668 = vadd.f32 %v1612, %v1662
    %v1669 = vxor.u32 %v1665, 2147483648
    %v1670 = vxor.u32 %v1666, 2147483648
    %v1671 = vxor.u32 %v1667, 2147483648
    %v1672 = vmul.f32 %v1669, 1.442695
    %v1673 = vpow.pop %v1672
    %v1674 = vmul.f32 %v1670, 1.442695
    %v1675 = vpow.pop %v1674
    %v1676 = vmul.f32 %v1671, 1.442695
    %v1677 = vpow.pop %v1676
    %v1678 = vadd.f32 %v1673, 1.0
    %v1679 = vadd.f32 %v1675, 1.0
    %v1680 = vadd.f32 %v1677, 1.0
    %v1681 = vrcp.pop %v1678
    %v1682 = vmul.f32 %v1678, %v1681
    %v1683 = vsub.f32 1.0, %v1682
    %v1684 = vmul.f32 %v1681, %v1683
    %v1685 = vadd.f32 %v1681, %v1684
    %vm1686 = vweird.f32 %v1678
    %vm1687 = vweird.f32 %v1681
    %vm1688 = vmor %vm1686, %vm1687
    %v1689 = vsel %vm1688, %v1681, %v1685
    %v1690 = vand.u32 2147483647, %v1678
    %vm1691 = vcmp.eq.f32.partialorder %v1690, 8.507059e+37
    %v1692 = vand.u32 %v1678, 2147483648
    %v1693 = vor.u32 1.1754944e-38, %v1692
    %v1694 = vsel %vm1691, %v1693, %v1689
    %v1695 = vmul.f32 1.0, %v1694
    %v1696 = vrcp.pop %v1679
    %v1697 = vmul.f32 %v1679, %v1696
    %v1698 = vsub.f32 1.0, %v1697
    %v1699 = vmul.f32 %v1696, %v1698
    %v1700 = vadd.f32 %v1696, %v1699
    %vm1701 = vweird.f32 %v1679
    %vm1702 = vweird.f32 %v1696
    %vm1703 = vmor %vm1701, %vm1702
    %v1704 = vsel %vm1703, %v1696, %v1700
    %v1705 = vand.u32 2147483647, %v1679
    %vm1706 = vcmp.eq.f32.partialorder %v1705, 8.507059e+37
    %v1707 = vand.u32 %v1679, 2147483648
    %v1708 = vor.u32 1.1754944e-38, %v1707
    %v1709 = vsel %vm1706, %v1708, %v1704
    %v1710 = vmul.f32 1.0, %v1709
    %v1711 = vrcp.pop %v1680
    %v1712 = vmul.f32 %v1680, %v1711
    %v1713 = vsub.f32 1.0, %v1712
    %v1714 = vmul.f32 %v1711, %v1713
    %v1715 = vadd.f32 %v1711, %v1714
    %vm1716 = vweird.f32 %v1680
    %vm1717 = vweird.f32 %v1711
    %vm1718 = vmor %vm1716, %vm1717
    %v1719 = vsel %vm1718, %v1711, %v1715
    %v1720 = vand.u32 2147483647, %v1680
    %vm1721 = vcmp.eq.f32.partialorder %v1720, 8.507059e+37
    %v1722 = vand.u32 %v1680, 2147483648
    %v1723 = vor.u32 1.1754944e-38, %v1722
    %v1724 = vsel %vm1721, %v1723, %v1719
    %v1725 = vmul.f32 1.0, %v1724
    %v1726 = vtanh.pop %v1668
    %v1727 = vmul.f32 %v1710, %v1432
    %v1728 = vmul.f32 %v1695, %v1726
    %v1729 = vadd.f32 %v1727, %v1728
    %v1730 = vtanh.pop %v1729
    %v1731 = vmul.f32 %v1725, %v1730
    %v1732 = vpack.c.bf16 %v1731, %v1731
    %1733 = vmatpush.bf16.msra.mxu0 %v943
    %1734 = vmatpush.bf16.msra.mxu0 %v939
    %1735 = vmatpush.bf16.msra.mxu0 %v935
    %1736 = vmatpush.bf16.msra.mxu0 %v931
    %1737 = vmatpush.bf16.msra.mxu0 %v927
    %1738 = vmatpush.bf16.msra.mxu0 %v923
    %1739 = vmatpush.bf16.msra.mxu0 %v919
    %1740 = vmatpush.bf16.msra.mxu0 %v915
    %1741 = vmatmul.bf16.gmra.mxu0 %v1732
    %v1742 = vpop.f32.mrf.mxu0
    %v1743 = vadd.f32 0.0, %v1742
    %v1744 = vpop.f32.mrf.mxu0
    %1745 = vdwg.mxu0
    %1746 = vmatpush.bf16.msra.mxu0 %v944
    %1747 = vmatpush.bf16.msra.mxu0 %v940
    %1748 = vmatpush.bf16.msra.mxu0 %v936
    %1749 = vmatpush.bf16.msra.mxu0 %v932
    %1750 = vmatpush.bf16.msra.mxu0 %v928
    %1751 = vmatpush.bf16.msra.mxu0 %v924
    %1752 = vmatpush.bf16.msra.mxu0 %v920
    %1753 = vmatpush.bf16.msra.mxu0 %v916
    %1754 = vmatmul.bf16.gmra.mxu0 %v1732
    %v1755 = vpop.f32.mrf.mxu0
    %v1756 = vadd.f32 0.0, %v1755
    %v1757 = vpop.f32.mrf.mxu0
    %1758 = vdwg.mxu0
    %1759 = vmatpush.bf16.msra.mxu0 %v945
    %1760 = vmatpush.bf16.msra.mxu0 %v941
    %1761 = vmatpush.bf16.msra.mxu0 %v937
    %1762 = vmatpush.bf16.msra.mxu0 %v933
    %1763 = vmatpush.bf16.msra.mxu0 %v929
    %1764 = vmatpush.bf16.msra.mxu0 %v925
    %1765 = vmatpush.bf16.msra.mxu0 %v921
    %1766 = vmatpush.bf16.msra.mxu0 %v917
    %1767 = vmatmul.bf16.gmra.mxu0 %v1732
    %v1768 = vpop.f32.mrf.mxu0
    %v1769 = vadd.f32 0.0, %v1768
    %v1770 = vpop.f32.mrf.mxu0
    %1771 = vdwg.mxu0
    %1772 = vmatpush.bf16.msra.mxu0 %v946
    %1773 = vmatpush.bf16.msra.mxu0 %v942
    %1774 = vmatpush.bf16.msra.mxu0 %v938
    %1775 = vmatpush.bf16.msra.mxu0 %v934
    %1776 = vmatpush.bf16.msra.mxu0 %v930
    %1777 = vmatpush.bf16.msra.mxu0 %v926
    %1778 = vmatpush.bf16.msra.mxu0 %v922
    %1779 = vmatpush.bf16.msra.mxu0 %v918
    %1780 = vmatmul.bf16.gmra.mxu0 %v1732
    %v1781 = vpop.f32.mrf.mxu0
    %v1782 = vadd.f32 0.0, %v1781
    %v1783 = vpop.f32.mrf.mxu0
    %1784 = vdwg.mxu0
    %1785 = vmatpush.bf16.msra.mxu0 %v1155
    %1786 = vmatpush.bf16.msra.mxu0 %v1151
    %1787 = vmatpush.bf16.msra.mxu0 %v1147
    %1788 = vmatpush.bf16.msra.mxu0 %v1143
    %1789 = vmatpush.bf16.msra.mxu0 %v1139
    %1790 = vmatpush.bf16.msra.mxu0 %v1135
    %1791 = vmatpush.bf16.msra.mxu0 %v1131
    %1792 = vmatpush.bf16.msra.mxu0 %v1127
    %1793 = vmatmul.bf16.gmra.mxu0 %v1607
    %v1794 = vpop.f32.mrf.mxu0
    %v1795 = vadd.f32 %v1743, %v1794
    %v1796 = vpop.f32.mrf.mxu0
    %1797 = vdwg.mxu0
    %1798 = vmatpush.bf16.msra.mxu0 %v1156
    %1799 = vmatpush.bf16.msra.mxu0 %v1152
    %1800 = vmatpush.bf16.msra.mxu0 %v1148
    %1801 = vmatpush.bf16.msra.mxu0 %v1144
    %1802 = vmatpush.bf16.msra.mxu0 %v1140
    %1803 = vmatpush.bf16.msra.mxu0 %v1136
    %1804 = vmatpush.bf16.msra.mxu0 %v1132
    %1805 = vmatpush.bf16.msra.mxu0 %v1128
    %1806 = vmatmul.bf16.gmra.mxu0 %v1607
    %v1807 = vpop.f32.mrf.mxu0
    %v1808 = vadd.f32 %v1756, %v1807
    %v1809 = vpop.f32.mrf.mxu0
    %1810 = vdwg.mxu0
    %1811 = vmatpush.bf16.msra.mxu0 %v1157
    %1812 = vmatpush.bf16.msra.mxu0 %v1153
    %1813 = vmatpush.bf16.msra.mxu0 %v1149
    %1814 = vmatpush.bf16.msra.mxu0 %v1145
    %1815 = vmatpush.bf16.msra.mxu0 %v1141
    %1816 = vmatpush.bf16.msra.mxu0 %v1137
    %1817 = vmatpush.bf16.msra.mxu0 %v1133
    %1818 = vmatpush.bf16.msra.mxu0 %v1129
    %1819 = vmatmul.bf16.gmra.mxu0 %v1607
    %v1820 = vpop.f32.mrf.mxu0
    %v1821 = vadd.f32 %v1769, %v1820
    %v1822 = vpop.f32.mrf.mxu0
    %1823 = vdwg.mxu0
    %1824 = vmatpush.bf16.msra.mxu0 %v1158
    %1825 = vmatpush.bf16.msra.mxu0 %v1154
    %1826 = vmatpush.bf16.msra.mxu0 %v1150
    %1827 = vmatpush.bf16.msra.mxu0 %v1146
    %1828 = vmatpush.bf16.msra.mxu0 %v1142
    %1829 = vmatpush.bf16.msra.mxu0 %v1138
    %1830 = vmatpush.bf16.msra.mxu0 %v1134
    %1831 = vmatpush.bf16.msra.mxu0 %v1130
    %1832 = vmatmul.bf16.gmra.mxu0 %v1607
    %v1833 = vpop.f32.mrf.mxu0
    %v1834 = vadd.f32 %v1782, %v1833
    %v1835 = vpop.f32.mrf.mxu0
    %1836 = vdwg.mxu0
    %v1837 = vadd.f32 %v1795, %v424
    %v1838 = vadd.f32 %v1808, %v425
    %v1839 = vadd.f32 %v1821, %v426
    %v1840 = vadd.f32 %v1834, %v427
    %v1841 = vxor.u32 %v1837, 2147483648
    %v1842 = vxor.u32 %v1838, 2147483648
    %v1843 = vxor.u32 %v1839, 2147483648
    %v1844 = vmul.f32 %v1841, 1.442695
    %v1845 = vpow.pop %v1844
    %v1846 = vmul.f32 %v1842, 1.442695
    %v1847 = vpow.pop %v1846
    %v1848 = vmul.f32 %v1843, 1.442695
    %v1849 = vpow.pop %v1848
    %v1850 = vadd.f32 %v1845, 1.0
    %v1851 = vadd.f32 %v1847, 1.0
    %v1852 = vadd.f32 %v1849, 1.0
    %v1853 = vrcp.pop %v1850
    %v1854 = vmul.f32 %v1850, %v1853
    %v1855 = vsub.f32 1.0, %v1854
    %v1856 = vmul.f32 %v1853, %v1855
    %v1857 = vadd.f32 %v1853, %v1856
    %vm1858 = vweird.f32 %v1850
    %vm1859 = vweird.f32 %v1853
    %vm1860 = vmor %vm1858, %vm1859
    %v1861 = vsel %vm1860, %v1853, %v1857
    %v1862 = vand.u32 2147483647, %v1850
    %vm1863 = vcmp.eq.f32.partialorder %v1862, 8.507059e+37
    %v1864 = vand.u32 %v1850, 2147483648
    %v1865 = vor.u32 1.1754944e-38, %v1864
    %v1866 = vsel %vm1863, %v1865, %v1861
    %v1867 = vmul.f32 1.0, %v1866
    %v1868 = vrcp.pop %v1851
    %v1869 = vmul.f32 %v1851, %v1868
    %v1870 = vsub.f32 1.0, %v1869
    %v1871 = vmul.f32 %v1868, %v1870
    %v1872 = vadd.f32 %v1868, %v1871
    %vm1873 = vweird.f32 %v1851
    %vm1874 = vweird.f32 %v1868
    %vm1875 = vmor %vm1873, %vm1874
    %v1876 = vsel %vm1875, %v1868, %v1872
    %v1877 = vand.u32 2147483647, %v1851
    %vm1878 = vcmp.eq.f32.partialorder %v1877, 8.507059e+37
    %v1879 = vand.u32 %v1851, 2147483648
    %v1880 = vor.u32 1.1754944e-38, %v1879
    %v1881 = vsel %vm1878, %v1880, %v1876
    %v1882 = vmul.f32 1.0, %v1881
    %v1883 = vrcp.pop %v1852
    %v1884 = vmul.f32 %v1852, %v1883
    %v1885 = vsub.f32 1.0, %v1884
    %v1886 = vmul.f32 %v1883, %v1885
    %v1887 = vadd.f32 %v1883, %v1886
    %vm1888 = vweird.f32 %v1852
    %vm1889 = vweird.f32 %v1883
    %vm1890 = vmor %vm1888, %vm1889
    %v1891 = vsel %vm1890, %v1883, %v1887
    %v1892 = vand.u32 2147483647, %v1852
    %vm1893 = vcmp.eq.f32.partialorder %v1892, 8.507059e+37
    %v1894 = vand.u32 %v1852, 2147483648
    %v1895 = vor.u32 1.1754944e-38, %v1894
    %v1896 = vsel %vm1893, %v1895, %v1891
    %v1897 = vmul.f32 1.0, %v1896
    %v1898 = vtanh.pop %v1840
    %v1899 = vmul.f32 %v1882, %v1604
    %v1900 = vmul.f32 %v1867, %v1898
    %v1901 = vadd.f32 %v1899, %v1900
    %v1902 = vtanh.pop %v1901
    %v1903 = vmul.f32 %v1897, %v1902
    %v1904 = vpack.c.bf16 %v1903, %v1903
    %s1905 = scalar_lea.vmem [#allocation2], 96
    %v1906 = vld [vmem:[%s1905] sm:$0xff]
    %v1907 = vld [vmem:[%s1905 + $0x8] sm:$0xff]
    %v1908 = vld [vmem:[%s1905 + $0x10] sm:$0xff]
    %v1909 = vld [vmem:[%s1905 + $0x18] sm:$0xff]
    %1910 = vmatpush.bf16.msra.mxu0 %v663
    %1911 = vmatpush.bf16.msra.mxu0 %v659
    %1912 = vmatpush.bf16.msra.mxu0 %v655
    %1913 = vmatpush.bf16.msra.mxu0 %v651
    %1914 = vmatpush.bf16.msra.mxu0 %v647
    %1915 = vmatpush.bf16.msra.mxu0 %v643
    %1916 = vmatpush.bf16.msra.mxu0 %v639
    %1917 = vmatpush.bf16.msra.mxu0 %v635
    %1918 = vmatmul.bf16.gmra.mxu0 %v1732
    %v1919 = vpop.f32.mrf.mxu0
    %v1920 = vadd.f32 0.0, %v1919
    %v1921 = vpop.f32.mrf.mxu0
    %1922 = vdwg.mxu0
    %1923 = vmatpush.bf16.msra.mxu0 %v664
    %1924 = vmatpush.bf16.msra.mxu0 %v660
    %1925 = vmatpush.bf16.msra.mxu0 %v656
    %1926 = vmatpush.bf16.msra.mxu0 %v652
    %1927 = vmatpush.bf16.msra.mxu0 %v648
    %1928 = vmatpush.bf16.msra.mxu0 %v644
    %1929 = vmatpush.bf16.msra.mxu0 %v640
    %1930 = vmatpush.bf16.msra.mxu0 %v636
    %1931 = vmatmul.bf16.gmra.mxu0 %v1732
    %v1932 = vpop.f32.mrf.mxu0
    %v1933 = vadd.f32 0.0, %v1932
    %v1934 = vpop.f32.mrf.mxu0
    %1935 = vdwg.mxu0
    %1936 = vmatpush.bf16.msra.mxu0 %v665
    %1937 = vmatpush.bf16.msra.mxu0 %v661
    %1938 = vmatpush.bf16.msra.mxu0 %v657
    %1939 = vmatpush.bf16.msra.mxu0 %v653
    %1940 = vmatpush.bf16.msra.mxu0 %v649
    %1941 = vmatpush.bf16.msra.mxu0 %v645
    %1942 = vmatpush.bf16.msra.mxu0 %v641
    %1943 = vmatpush.bf16.msra.mxu0 %v637
    %1944 = vmatmul.bf16.gmra.mxu0 %v1732
    %v1945 = vpop.f32.mrf.mxu0
    %v1946 = vadd.f32 0.0, %v1945
    %v1947 = vpop.f32.mrf.mxu0
    %1948 = vdwg.mxu0
    %1949 = vmatpush.bf16.msra.mxu0 %v666
    %1950 = vmatpush.bf16.msra.mxu0 %v662
    %1951 = vmatpush.bf16.msra.mxu0 %v658
    %1952 = vmatpush.bf16.msra.mxu0 %v654
    %1953 = vmatpush.bf16.msra.mxu0 %v650
    %1954 = vmatpush.bf16.msra.mxu0 %v646
    %1955 = vmatpush.bf16.msra.mxu0 %v642
    %1956 = vmatpush.bf16.msra.mxu0 %v638
    %1957 = vmatmul.bf16.gmra.mxu0 %v1732
    %v1958 = vpop.f32.mrf.mxu0
    %v1959 = vadd.f32 0.0, %v1958
    %v1960 = vpop.f32.mrf.mxu0
    %1961 = vdwg.mxu0
    %v1962 = vadd.f32 %v1906, %v1920
    %v1963 = vadd.f32 %v1907, %v1933
    %v1964 = vadd.f32 %v1908, %v1946
    %v1965 = vadd.f32 %v1909, %v1959
    %v1966 = vxor.u32 %v1962, 2147483648
    %v1967 = vxor.u32 %v1963, 2147483648
    %v1968 = vxor.u32 %v1964, 2147483648
    %v1969 = vmul.f32 %v1966, 1.442695
    %v1970 = vpow.pop %v1969
    %v1971 = vmul.f32 %v1967, 1.442695
    %v1972 = vpow.pop %v1971
    %v1973 = vmul.f32 %v1968, 1.442695
    %v1974 = vpow.pop %v1973
    %v1975 = vadd.f32 %v1970, 1.0
    %v1976 = vadd.f32 %v1972, 1.0
    %v1977 = vadd.f32 %v1974, 1.0
    %v1978 = vrcp.pop %v1975
    %v1979 = vmul.f32 %v1975, %v1978
    %v1980 = vsub.f32 1.0, %v1979
    %v1981 = vmul.f32 %v1978, %v1980
    %v1982 = vadd.f32 %v1978, %v1981
    %vm1983 = vweird.f32 %v1975
    %vm1984 = vweird.f32 %v1978
    %vm1985 = vmor %vm1983, %vm1984
    %v1986 = vsel %vm1985, %v1978, %v1982
    %v1987 = vand.u32 2147483647, %v1975
    %vm1988 = vcmp.eq.f32.partialorder %v1987, 8.507059e+37
    %v1989 = vand.u32 %v1975, 2147483648
    %v1990 = vor.u32 1.1754944e-38, %v1989
    %v1991 = vsel %vm1988, %v1990, %v1986
    %v1992 = vmul.f32 1.0, %v1991
    %v1993 = vrcp.pop %v1976
    %v1994 = vmul.f32 %v1976, %v1993
    %v1995 = vsub.f32 1.0, %v1994
    %v1996 = vmul.f32 %v1993, %v1995
    %v1997 = vadd.f32 %v1993, %v1996
    %vm1998 = vweird.f32 %v1976
    %vm1999 = vweird.f32 %v1993
    %vm2000 = vmor %vm1998, %vm1999
    %v2001 = vsel %vm2000, %v1993, %v1997
    %v2002 = vand.u32 2147483647, %v1976
    %vm2003 = vcmp.eq.f32.partialorder %v2002, 8.507059e+37
    %v2004 = vand.u32 %v1976, 2147483648
    %v2005 = vor.u32 1.1754944e-38, %v2004
    %v2006 = vsel %vm2003, %v2005, %v2001
    %v2007 = vmul.f32 1.0, %v2006
    %v2008 = vrcp.pop %v1977
    %v2009 = vmul.f32 %v1977, %v2008
    %v2010 = vsub.f32 1.0, %v2009
    %v2011 = vmul.f32 %v2008, %v2010
    %v2012 = vadd.f32 %v2008, %v2011
    %vm2013 = vweird.f32 %v1977
    %vm2014 = vweird.f32 %v2008
    %vm2015 = vmor %vm2013, %vm2014
    %v2016 = vsel %vm2015, %v2008, %v2012
    %v2017 = vand.u32 2147483647, %v1977
    %vm2018 = vcmp.eq.f32.partialorder %v2017, 8.507059e+37
    %v2019 = vand.u32 %v1977, 2147483648
    %v2020 = vor.u32 1.1754944e-38, %v2019
    %v2021 = vsel %vm2018, %v2020, %v2016
    %v2022 = vmul.f32 1.0, %v2021
    %v2023 = vtanh.pop %v1965
    %v2024 = vmul.f32 %v2007, %v1729
    %v2025 = vmul.f32 %v1992, %v2023
    %v2026 = vadd.f32 %v2024, %v2025
    %v2027 = vtanh.pop %v2026
    %v2028 = vmul.f32 %v2022, %v2027
    %v2029 = vpack.c.bf16 %v2028, %v2028
    %2030 = vmatpush.bf16.msra.mxu0 %v943
    %2031 = vmatpush.bf16.msra.mxu0 %v939
    %2032 = vmatpush.bf16.msra.mxu0 %v935
    %2033 = vmatpush.bf16.msra.mxu0 %v931
    %2034 = vmatpush.bf16.msra.mxu0 %v927
    %2035 = vmatpush.bf16.msra.mxu0 %v923
    %2036 = vmatpush.bf16.msra.mxu0 %v919
    %2037 = vmatpush.bf16.msra.mxu0 %v915
    %2038 = vmatmul.bf16.gmra.mxu0 %v2029
    %v2039 = vpop.f32.mrf.mxu0
    %v2040 = vadd.f32 0.0, %v2039
    %v2041 = vpop.f32.mrf.mxu0
    %2042 = vdwg.mxu0
    %2043 = vmatpush.bf16.msra.mxu0 %v944
    %2044 = vmatpush.bf16.msra.mxu0 %v940
    %2045 = vmatpush.bf16.msra.mxu0 %v936
    %2046 = vmatpush.bf16.msra.mxu0 %v932
    %2047 = vmatpush.bf16.msra.mxu0 %v928
    %2048 = vmatpush.bf16.msra.mxu0 %v924
    %2049 = vmatpush.bf16.msra.mxu0 %v920
    %2050 = vmatpush.bf16.msra.mxu0 %v916
    %2051 = vmatmul.bf16.gmra.mxu0 %v2029
    %v2052 = vpop.f32.mrf.mxu0
    %v2053 = vadd.f32 0.0, %v2052
    %v2054 = vpop.f32.mrf.mxu0
    %2055 = vdwg.mxu0
    %2056 = vmatpush.bf16.msra.mxu0 %v945
    %2057 = vmatpush.bf16.msra.mxu0 %v941
    %2058 = vmatpush.bf16.msra.mxu0 %v937
    %2059 = vmatpush.bf16.msra.mxu0 %v933
    %2060 = vmatpush.bf16.msra.mxu0 %v929
    %2061 = vmatpush.bf16.msra.mxu0 %v925
    %2062 = vmatpush.bf16.msra.mxu0 %v921
    %2063 = vmatpush.bf16.msra.mxu0 %v917
    %2064 = vmatmul.bf16.gmra.mxu0 %v2029
    %v2065 = vpop.f32.mrf.mxu0
    %v2066 = vadd.f32 0.0, %v2065
    %v2067 = vpop.f32.mrf.mxu0
    %2068 = vdwg.mxu0
    %2069 = vmatpush.bf16.msra.mxu0 %v946
    %2070 = vmatpush.bf16.msra.mxu0 %v942
    %2071 = vmatpush.bf16.msra.mxu0 %v938
    %2072 = vmatpush.bf16.msra.mxu0 %v934
    %2073 = vmatpush.bf16.msra.mxu0 %v930
    %2074 = vmatpush.bf16.msra.mxu0 %v926
    %2075 = vmatpush.bf16.msra.mxu0 %v922
    %2076 = vmatpush.bf16.msra.mxu0 %v918
    %2077 = vmatmul.bf16.gmra.mxu0 %v2029
    %v2078 = vpop.f32.mrf.mxu0
    %v2079 = vadd.f32 0.0, %v2078
    %v2080 = vpop.f32.mrf.mxu0
    %2081 = vdwg.mxu0
    %2082 = vmatpush.bf16.msra.mxu0 %v1155
    %2083 = vmatpush.bf16.msra.mxu0 %v1151
    %2084 = vmatpush.bf16.msra.mxu0 %v1147
    %2085 = vmatpush.bf16.msra.mxu0 %v1143
    %2086 = vmatpush.bf16.msra.mxu0 %v1139
    %2087 = vmatpush.bf16.msra.mxu0 %v1135
    %2088 = vmatpush.bf16.msra.mxu0 %v1131
    %2089 = vmatpush.bf16.msra.mxu0 %v1127
    %2090 = vmatmul.bf16.gmra.mxu0 %v1904
    %v2091 = vpop.f32.mrf.mxu0
    %v2092 = vadd.f32 %v2040, %v2091
    %v2093 = vpop.f32.mrf.mxu0
    %2094 = vdwg.mxu0
    %2095 = vmatpush.bf16.msra.mxu0 %v1156
    %2096 = vmatpush.bf16.msra.mxu0 %v1152
    %2097 = vmatpush.bf16.msra.mxu0 %v1148
    %2098 = vmatpush.bf16.msra.mxu0 %v1144
    %2099 = vmatpush.bf16.msra.mxu0 %v1140
    %2100 = vmatpush.bf16.msra.mxu0 %v1136
    %2101 = vmatpush.bf16.msra.mxu0 %v1132
    %2102 = vmatpush.bf16.msra.mxu0 %v1128
    %2103 = vmatmul.bf16.gmra.mxu0 %v1904
    %v2104 = vpop.f32.mrf.mxu0
    %v2105 = vadd.f32 %v2053, %v2104
    %v2106 = vpop.f32.mrf.mxu0
    %2107 = vdwg.mxu0
    %2108 = vmatpush.bf16.msra.mxu0 %v1157
    %2109 = vmatpush.bf16.msra.mxu0 %v1153
    %2110 = vmatpush.bf16.msra.mxu0 %v1149
    %2111 = vmatpush.bf16.msra.mxu0 %v1145
    %2112 = vmatpush.bf16.msra.mxu0 %v1141
    %2113 = vmatpush.bf16.msra.mxu0 %v1137
    %2114 = vmatpush.bf16.msra.mxu0 %v1133
    %2115 = vmatpush.bf16.msra.mxu0 %v1129
    %2116 = vmatmul.bf16.gmra.mxu0 %v1904
    %v2117 = vpop.f32.mrf.mxu0
    %v2118 = vadd.f32 %v2066, %v2117
    %v2119 = vpop.f32.mrf.mxu0
    %2120 = vdwg.mxu0
    %2121 = vmatpush.bf16.msra.mxu0 %v1158
    %2122 = vmatpush.bf16.msra.mxu0 %v1154
    %2123 = vmatpush.bf16.msra.mxu0 %v1150
    %2124 = vmatpush.bf16.msra.mxu0 %v1146
    %2125 = vmatpush.bf16.msra.mxu0 %v1142
    %2126 = vmatpush.bf16.msra.mxu0 %v1138
    %2127 = vmatpush.bf16.msra.mxu0 %v1134
    %2128 = vmatpush.bf16.msra.mxu0 %v1130
    %2129 = vmatmul.bf16.gmra.mxu0 %v1904
    %v2130 = vpop.f32.mrf.mxu0
    %v2131 = vadd.f32 %v2079, %v2130
    %v2132 = vpop.f32.mrf.mxu0
    %2133 = vdwg.mxu0
    %v2134 = vadd.f32 %v2092, %v424
    %v2135 = vadd.f32 %v2105, %v425
    %v2136 = vadd.f32 %v2118, %v426
    %v2137 = vadd.f32 %v2131, %v427
    %v2138 = vxor.u32 %v2134, 2147483648
    %v2139 = vxor.u32 %v2135, 2147483648
    %v2140 = vxor.u32 %v2136, 2147483648
    %v2141 = vmul.f32 %v2138, 1.442695
    %v2142 = vpow.pop %v2141
    %v2143 = vmul.f32 %v2139, 1.442695
    %v2144 = vpow.pop %v2143
    %v2145 = vmul.f32 %v2140, 1.442695
    %v2146 = vpow.pop %v2145
    %v2147 = vadd.f32 %v2142, 1.0
    %v2148 = vadd.f32 %v2144, 1.0
    %v2149 = vadd.f32 %v2146, 1.0
    %v2150 = vrcp.pop %v2147
    %v2151 = vmul.f32 %v2147, %v2150
    %v2152 = vsub.f32 1.0, %v2151
    %v2153 = vmul.f32 %v2150, %v2152
    %v2154 = vadd.f32 %v2150, %v2153
    %vm2155 = vweird.f32 %v2147
    %vm2156 = vweird.f32 %v2150
    %vm2157 = vmor %vm2155, %vm2156
    %v2158 = vsel %vm2157, %v2150, %v2154
    %v2159 = vand.u32 2147483647, %v2147
    %vm2160 = vcmp.eq.f32.partialorder %v2159, 8.507059e+37
    %v2161 = vand.u32 %v2147, 2147483648
    %v2162 = vor.u32 1.1754944e-38, %v2161
    %v2163 = vsel %vm2160, %v2162, %v2158
    %v2164 = vmul.f32 1.0, %v2163
    %v2165 = vrcp.pop %v2148
    %v2166 = vmul.f32 %v2148, %v2165
    %v2167 = vsub.f32 1.0, %v2166
    %v2168 = vmul.f32 %v2165, %v2167
    %v2169 = vadd.f32 %v2165, %v2168
    %vm2170 = vweird.f32 %v2148
    %vm2171 = vweird.f32 %v2165
    %vm2172 = vmor %vm2170, %vm2171
    %v2173 = vsel %vm2172, %v2165, %v2169
    %v2174 = vand.u32 2147483647, %v2148
    %vm2175 = vcmp.eq.f32.partialorder %v2174, 8.507059e+37
    %v2176 = vand.u32 %v2148, 2147483648
    %v2177 = vor.u32 1.1754944e-38, %v2176
    %v2178 = vsel %vm2175, %v2177, %v2173
    %v2179 = vmul.f32 1.0, %v2178
    %v2180 = vrcp.pop %v2149
    %v2181 = vmul.f32 %v2149, %v2180
    %v2182 = vsub.f32 1.0, %v2181
    %v2183 = vmul.f32 %v2180, %v2182
    %v2184 = vadd.f32 %v2180, %v2183
    %vm2185 = vweird.f32 %v2149
    %vm2186 = vweird.f32 %v2180
    %vm2187 = vmor %vm2185, %vm2186
    %v2188 = vsel %vm2187, %v2180, %v2184
    %v2189 = vand.u32 2147483647, %v2149
    %vm2190 = vcmp.eq.f32.partialorder %v2189, 8.507059e+37
    %v2191 = vand.u32 %v2149, 2147483648
    %v2192 = vor.u32 1.1754944e-38, %v2191
    %v2193 = vsel %vm2190, %v2192, %v2188
    %v2194 = vmul.f32 1.0, %v2193
    %v2195 = vtanh.pop %v2137
    %v2196 = vmul.f32 %v2179, %v1901
    %v2197 = vmul.f32 %v2164, %v2195
    %v2198 = vadd.f32 %v2196, %v2197
    %v2199 = vtanh.pop %v2198
    %v2200 = vmul.f32 %v2194, %v2199
    %v2201 = vpack.c.bf16 %v2200, %v2200
    %s2202 = scalar_lea.vmem [#allocation2], 128
    %v2203 = vld [vmem:[%s2202] sm:$0xff]
    %v2204 = vld [vmem:[%s2202 + $0x8] sm:$0xff]
    %v2205 = vld [vmem:[%s2202 + $0x10] sm:$0xff]
    %v2206 = vld [vmem:[%s2202 + $0x18] sm:$0xff]
    %2207 = vmatpush.bf16.msra.mxu0 %v663
    %2208 = vmatpush.bf16.msra.mxu0 %v659
    %2209 = vmatpush.bf16.msra.mxu0 %v655
    %2210 = vmatpush.bf16.msra.mxu0 %v651
    %2211 = vmatpush.bf16.msra.mxu0 %v647
    %2212 = vmatpush.bf16.msra.mxu0 %v643
    %2213 = vmatpush.bf16.msra.mxu0 %v639
    %2214 = vmatpush.bf16.msra.mxu0 %v635
    %2215 = vmatmul.bf16.gmra.mxu0 %v2029
    %v2216 = vpop.f32.mrf.mxu0
    %v2217 = vadd.f32 0.0, %v2216
    %v2218 = vpop.f32.mrf.mxu0
    %2219 = vdwg.mxu0
    %2220 = vmatpush.bf16.msra.mxu0 %v664
    %2221 = vmatpush.bf16.msra.mxu0 %v660
    %2222 = vmatpush.bf16.msra.mxu0 %v656
    %2223 = vmatpush.bf16.msra.mxu0 %v652
    %2224 = vmatpush.bf16.msra.mxu0 %v648
    %2225 = vmatpush.bf16.msra.mxu0 %v644
    %2226 = vmatpush.bf16.msra.mxu0 %v640
    %2227 = vmatpush.bf16.msra.mxu0 %v636
    %2228 = vmatmul.bf16.gmra.mxu0 %v2029
    %v2229 = vpop.f32.mrf.mxu0
    %v2230 = vadd.f32 0.0, %v2229
    %v2231 = vpop.f32.mrf.mxu0
    %2232 = vdwg.mxu0
    %2233 = vmatpush.bf16.msra.mxu0 %v665
    %2234 = vmatpush.bf16.msra.mxu0 %v661
    %2235 = vmatpush.bf16.msra.mxu0 %v657
    %2236 = vmatpush.bf16.msra.mxu0 %v653
    %2237 = vmatpush.bf16.msra.mxu0 %v649
    %2238 = vmatpush.bf16.msra.mxu0 %v645
    %2239 = vmatpush.bf16.msra.mxu0 %v641
    %2240 = vmatpush.bf16.msra.mxu0 %v637
    %2241 = vmatmul.bf16.gmra.mxu0 %v2029
    %v2242 = vpop.f32.mrf.mxu0
    %v2243 = vadd.f32 0.0, %v2242
    %v2244 = vpop.f32.mrf.mxu0
    %2245 = vdwg.mxu0
    %2246 = vmatpush.bf16.msra.mxu0 %v666
    %2247 = vmatpush.bf16.msra.mxu0 %v662
    %2248 = vmatpush.bf16.msra.mxu0 %v658
    %2249 = vmatpush.bf16.msra.mxu0 %v654
    %2250 = vmatpush.bf16.msra.mxu0 %v650
    %2251 = vmatpush.bf16.msra.mxu0 %v646
    %2252 = vmatpush.bf16.msra.mxu0 %v642
    %2253 = vmatpush.bf16.msra.mxu0 %v638
    %2254 = vmatmul.bf16.gmra.mxu0 %v2029
    %v2255 = vpop.f32.mrf.mxu0
    %v2256 = vadd.f32 0.0, %v2255
    %v2257 = vpop.f32.mrf.mxu0
    %2258 = vdwg.mxu0
    %v2259 = vadd.f32 %v2203, %v2217
    %v2260 = vadd.f32 %v2204, %v2230
    %v2261 = vadd.f32 %v2205, %v2243
    %v2262 = vadd.f32 %v2206, %v2256
    %v2263 = vxor.u32 %v2259, 2147483648
    %v2264 = vxor.u32 %v2260, 2147483648
    %v2265 = vxor.u32 %v2261, 2147483648
    %v2266 = vmul.f32 %v2263, 1.442695
    %v2267 = vpow.pop %v2266
    %v2268 = vmul.f32 %v2264, 1.442695
    %v2269 = vpow.pop %v2268
    %v2270 = vmul.f32 %v2265, 1.442695
    %v2271 = vpow.pop %v2270
    %v2272 = vadd.f32 %v2267, 1.0
    %v2273 = vadd.f32 %v2269, 1.0
    %v2274 = vadd.f32 %v2271, 1.0
    %v2275 = vrcp.pop %v2272
    %v2276 = vmul.f32 %v2272, %v2275
    %v2277 = vsub.f32 1.0, %v2276
    %v2278 = vmul.f32 %v2275, %v2277
    %v2279 = vadd.f32 %v2275, %v2278
    %vm2280 = vweird.f32 %v2272
    %vm2281 = vweird.f32 %v2275
    %vm2282 = vmor %vm2280, %vm2281
    %v2283 = vsel %vm2282, %v2275, %v2279
    %v2284 = vand.u32 2147483647, %v2272
    %vm2285 = vcmp.eq.f32.partialorder %v2284, 8.507059e+37
    %v2286 = vand.u32 %v2272, 2147483648
    %v2287 = vor.u32 1.1754944e-38, %v2286
    %v2288 = vsel %vm2285, %v2287, %v2283
    %v2289 = vmul.f32 1.0, %v2288
    %v2290 = vrcp.pop %v2273
    %v2291 = vmul.f32 %v2273, %v2290
    %v2292 = vsub.f32 1.0, %v2291
    %v2293 = vmul.f32 %v2290, %v2292
    %v2294 = vadd.f32 %v2290, %v2293
    %vm2295 = vweird.f32 %v2273
    %vm2296 = vweird.f32 %v2290
    %vm2297 = vmor %vm2295, %vm2296
    %v2298 = vsel %vm2297, %v2290, %v2294
    %v2299 = vand.u32 2147483647, %v2273
    %vm2300 = vcmp.eq.f32.partialorder %v2299, 8.507059e+37
    %v2301 = vand.u32 %v2273, 2147483648
    %v2302 = vor.u32 1.1754944e-38, %v2301
    %v2303 = vsel %vm2300, %v2302, %v2298
    %v2304 = vmul.f32 1.0, %v2303
    %v2305 = vrcp.pop %v2274
    %v2306 = vmul.f32 %v2274, %v2305
    %v2307 = vsub.f32 1.0, %v2306
    %v2308 = vmul.f32 %v2305, %v2307
    %v2309 = vadd.f32 %v2305, %v2308
    %vm2310 = vweird.f32 %v2274
    %vm2311 = vweird.f32 %v2305
    %vm2312 = vmor %vm2310, %vm2311
    %v2313 = vsel %vm2312, %v2305, %v2309
    %v2314 = vand.u32 2147483647, %v2274
    %vm2315 = vcmp.eq.f32.partialorder %v2314, 8.507059e+37
    %v2316 = vand.u32 %v2274, 2147483648
    %v2317 = vor.u32 1.1754944e-38, %v2316
    %v2318 = vsel %vm2315, %v2317, %v2313
    %v2319 = vmul.f32 1.0, %v2318
    %v2320 = vtanh.pop %v2262
    %v2321 = vmul.f32 %v2304, %v2026
    %v2322 = vmul.f32 %v2289, %v2320
    %v2323 = vadd.f32 %v2321, %v2322
    %v2324 = vtanh.pop %v2323
    %v2325 = vmul.f32 %v2319, %v2324
    %v2326 = vpack.c.bf16 %v2325, %v2325
    %2327 = vmatpush.bf16.msra.mxu0 %v943
    %2328 = vmatpush.bf16.msra.mxu0 %v939
    %2329 = vmatpush.bf16.msra.mxu0 %v935
    %2330 = vmatpush.bf16.msra.mxu0 %v931
    %2331 = vmatpush.bf16.msra.mxu0 %v927
    %2332 = vmatpush.bf16.msra.mxu0 %v923
    %2333 = vmatpush.bf16.msra.mxu0 %v919
    %2334 = vmatpush.bf16.msra.mxu0 %v915
    %2335 = vmatmul.bf16.gmra.mxu0 %v2326
    %v2336 = vpop.f32.mrf.mxu0
    %v2337 = vadd.f32 0.0, %v2336
    %v2338 = vpop.f32.mrf.mxu0
    %2339 = vdwg.mxu0
    %2340 = vmatpush.bf16.msra.mxu0 %v944
    %2341 = vmatpush.bf16.msra.mxu0 %v940
    %2342 = vmatpush.bf16.msra.mxu0 %v936
    %2343 = vmatpush.bf16.msra.mxu0 %v932
    %2344 = vmatpush.bf16.msra.mxu0 %v928
    %2345 = vmatpush.bf16.msra.mxu0 %v924
    %2346 = vmatpush.bf16.msra.mxu0 %v920
    %2347 = vmatpush.bf16.msra.mxu0 %v916
    %2348 = vmatmul.bf16.gmra.mxu0 %v2326
    %v2349 = vpop.f32.mrf.mxu0
    %v2350 = vadd.f32 0.0, %v2349
    %v2351 = vpop.f32.mrf.mxu0
    %2352 = vdwg.mxu0
    %2353 = vmatpush.bf16.msra.mxu0 %v945
    %2354 = vmatpush.bf16.msra.mxu0 %v941
    %2355 = vmatpush.bf16.msra.mxu0 %v937
    %2356 = vmatpush.bf16.msra.mxu0 %v933
    %2357 = vmatpush.bf16.msra.mxu0 %v929
    %2358 = vmatpush.bf16.msra.mxu0 %v925
    %2359 = vmatpush.bf16.msra.mxu0 %v921
    %2360 = vmatpush.bf16.msra.mxu0 %v917
    %2361 = vmatmul.bf16.gmra.mxu0 %v2326
    %v2362 = vpop.f32.mrf.mxu0
    %v2363 = vadd.f32 0.0, %v2362
    %v2364 = vpop.f32.mrf.mxu0
    %2365 = vdwg.mxu0
    %2366 = vmatpush.bf16.msra.mxu0 %v946
    %2367 = vmatpush.bf16.msra.mxu0 %v942
    %2368 = vmatpush.bf16.msra.mxu0 %v938
    %2369 = vmatpush.bf16.msra.mxu0 %v934
    %2370 = vmatpush.bf16.msra.mxu0 %v930
    %2371 = vmatpush.bf16.msra.mxu0 %v926
    %2372 = vmatpush.bf16.msra.mxu0 %v922
    %2373 = vmatpush.bf16.msra.mxu0 %v918
    %2374 = vmatmul.bf16.gmra.mxu0 %v2326
    %v2375 = vpop.f32.mrf.mxu0
    %v2376 = vadd.f32 0.0, %v2375
    %v2377 = vpop.f32.mrf.mxu0
    %2378 = vdwg.mxu0
    %2379 = vmatpush.bf16.msra.mxu0 %v1155
    %2380 = vmatpush.bf16.msra.mxu0 %v1151
    %2381 = vmatpush.bf16.msra.mxu0 %v1147
    %2382 = vmatpush.bf16.msra.mxu0 %v1143
    %2383 = vmatpush.bf16.msra.mxu0 %v1139
    %2384 = vmatpush.bf16.msra.mxu0 %v1135
    %2385 = vmatpush.bf16.msra.mxu0 %v1131
    %2386 = vmatpush.bf16.msra.mxu0 %v1127
    %2387 = vmatmul.bf16.gmra.mxu0 %v2201
    %v2388 = vpop.f32.mrf.mxu0
    %v2389 = vadd.f32 %v2337, %v2388
    %v2390 = vpop.f32.mrf.mxu0
    %2391 = vdwg.mxu0
    %2392 = vmatpush.bf16.msra.mxu0 %v1156
    %2393 = vmatpush.bf16.msra.mxu0 %v1152
    %2394 = vmatpush.bf16.msra.mxu0 %v1148
    %2395 = vmatpush.bf16.msra.mxu0 %v1144
    %2396 = vmatpush.bf16.msra.mxu0 %v1140
    %2397 = vmatpush.bf16.msra.mxu0 %v1136
    %2398 = vmatpush.bf16.msra.mxu0 %v1132
    %2399 = vmatpush.bf16.msra.mxu0 %v1128
    %2400 = vmatmul.bf16.gmra.mxu0 %v2201
    %v2401 = vpop.f32.mrf.mxu0
    %v2402 = vadd.f32 %v2350, %v2401
    %v2403 = vpop.f32.mrf.mxu0
    %2404 = vdwg.mxu0
    %2405 = vmatpush.bf16.msra.mxu0 %v1157
    %2406 = vmatpush.bf16.msra.mxu0 %v1153
    %2407 = vmatpush.bf16.msra.mxu0 %v1149
    %2408 = vmatpush.bf16.msra.mxu0 %v1145
    %2409 = vmatpush.bf16.msra.mxu0 %v1141
    %2410 = vmatpush.bf16.msra.mxu0 %v1137
    %2411 = vmatpush.bf16.msra.mxu0 %v1133
    %2412 = vmatpush.bf16.msra.mxu0 %v1129
    %2413 = vmatmul.bf16.gmra.mxu0 %v2201
    %v2414 = vpop.f32.mrf.mxu0
    %v2415 = vadd.f32 %v2363, %v2414
    %v2416 = vpop.f32.mrf.mxu0
    %2417 = vdwg.mxu0
    %2418 = vmatpush.bf16.msra.mxu0 %v1158
    %2419 = vmatpush.bf16.msra.mxu0 %v1154
    %2420 = vmatpush.bf16.msra.mxu0 %v1150
    %2421 = vmatpush.bf16.msra.mxu0 %v1146
    %2422 = vmatpush.bf16.msra.mxu0 %v1142
    %2423 = vmatpush.bf16.msra.mxu0 %v1138
    %2424 = vmatpush.bf16.msra.mxu0 %v1134
    %2425 = vmatpush.bf16.msra.mxu0 %v1130
    %2426 = vmatmul.bf16.gmra.mxu0 %v2201
    %v2427 = vpop.f32.mrf.mxu0
    %v2428 = vadd.f32 %v2376, %v2427
    %v2429 = vpop.f32.mrf.mxu0
    %2430 = vdwg.mxu0
    %v2431 = vadd.f32 %v2389, %v424
    %v2432 = vadd.f32 %v2402, %v425
    %v2433 = vadd.f32 %v2415, %v426
    %v2434 = vadd.f32 %v2428, %v427
    %v2435 = vxor.u32 %v2431, 2147483648
    %v2436 = vxor.u32 %v2432, 2147483648
    %v2437 = vxor.u32 %v2433, 2147483648
    %v2438 = vmul.f32 %v2435, 1.442695
    %v2439 = vpow.pop %v2438
    %v2440 = vmul.f32 %v2436, 1.442695
    %v2441 = vpow.pop %v2440
    %v2442 = vmul.f32 %v2437, 1.442695
    %v2443 = vpow.pop %v2442
    %v2444 = vadd.f32 %v2439, 1.0
    %v2445 = vadd.f32 %v2441, 1.0
    %v2446 = vadd.f32 %v2443, 1.0
    %v2447 = vrcp.pop %v2444
    %v2448 = vmul.f32 %v2444, %v2447
    %v2449 = vsub.f32 1.0, %v2448
    %v2450 = vmul.f32 %v2447, %v2449
    %v2451 = vadd.f32 %v2447, %v2450
    %vm2452 = vweird.f32 %v2444
    %vm2453 = vweird.f32 %v2447
    %vm2454 = vmor %vm2452, %vm2453
    %v2455 = vsel %vm2454, %v2447, %v2451
    %v2456 = vand.u32 2147483647, %v2444
    %vm2457 = vcmp.eq.f32.partialorder %v2456, 8.507059e+37
    %v2458 = vand.u32 %v2444, 2147483648
    %v2459 = vor.u32 1.1754944e-38, %v2458
    %v2460 = vsel %vm2457, %v2459, %v2455
    %v2461 = vmul.f32 1.0, %v2460
    %v2462 = vrcp.pop %v2445
    %v2463 = vmul.f32 %v2445, %v2462
    %v2464 = vsub.f32 1.0, %v2463
    %v2465 = vmul.f32 %v2462, %v2464
    %v2466 = vadd.f32 %v2462, %v2465
    %vm2467 = vweird.f32 %v2445
    %vm2468 = vweird.f32 %v2462
    %vm2469 = vmor %vm2467, %vm2468
    %v2470 = vsel %vm2469, %v2462, %v2466
    %v2471 = vand.u32 2147483647, %v2445
    %vm2472 = vcmp.eq.f32.partialorder %v2471, 8.507059e+37
    %v2473 = vand.u32 %v2445, 2147483648
    %v2474 = vor.u32 1.1754944e-38, %v2473
    %v2475 = vsel %vm2472, %v2474, %v2470
    %v2476 = vmul.f32 1.0, %v2475
    %v2477 = vrcp.pop %v2446
    %v2478 = vmul.f32 %v2446, %v2477
    %v2479 = vsub.f32 1.0, %v2478
    %v2480 = vmul.f32 %v2477, %v2479
    %v2481 = vadd.f32 %v2477, %v2480
    %vm2482 = vweird.f32 %v2446
    %vm2483 = vweird.f32 %v2477
    %vm2484 = vmor %vm2482, %vm2483
    %v2485 = vsel %vm2484, %v2477, %v2481
    %v2486 = vand.u32 2147483647, %v2446
    %vm2487 = vcmp.eq.f32.partialorder %v2486, 8.507059e+37
    %v2488 = vand.u32 %v2446, 2147483648
    %v2489 = vor.u32 1.1754944e-38, %v2488
    %v2490 = vsel %vm2487, %v2489, %v2485
    %v2491 = vmul.f32 1.0, %v2490
    %v2492 = vtanh.pop %v2434
    %v2493 = vmul.f32 %v2476, %v2198
    %v2494 = vmul.f32 %v2461, %v2492
    %v2495 = vadd.f32 %v2493, %v2494
    %v2496 = vtanh.pop %v2495
    %v2497 = vmul.f32 %v2491, %v2496
    %v2498 = vpack.c.bf16 %v2497, %v2497
    %s2499 = scalar_lea.vmem [#allocation2], 160
    %v2500 = vld [vmem:[%s2499] sm:$0xff]
    %v2501 = vld [vmem:[%s2499 + $0x8] sm:$0xff]
    %v2502 = vld [vmem:[%s2499 + $0x10] sm:$0xff]
    %v2503 = vld [vmem:[%s2499 + $0x18] sm:$0xff]
    %2504 = vmatpush.bf16.msra.mxu0 %v663
    %2505 = vmatpush.bf16.msra.mxu0 %v659
    %2506 = vmatpush.bf16.msra.mxu0 %v655
    %2507 = vmatpush.bf16.msra.mxu0 %v651
    %2508 = vmatpush.bf16.msra.mxu0 %v647
    %2509 = vmatpush.bf16.msra.mxu0 %v643
    %2510 = vmatpush.bf16.msra.mxu0 %v639
    %2511 = vmatpush.bf16.msra.mxu0 %v635
    %2512 = vmatmul.bf16.gmra.mxu0 %v2326
    %v2513 = vpop.f32.mrf.mxu0
    %v2514 = vadd.f32 0.0, %v2513
    %v2515 = vpop.f32.mrf.mxu0
    %2516 = vdwg.mxu0
    %2517 = vmatpush.bf16.msra.mxu0 %v664
    %2518 = vmatpush.bf16.msra.mxu0 %v660
    %2519 = vmatpush.bf16.msra.mxu0 %v656
    %2520 = vmatpush.bf16.msra.mxu0 %v652
    %2521 = vmatpush.bf16.msra.mxu0 %v648
    %2522 = vmatpush.bf16.msra.mxu0 %v644
    %2523 = vmatpush.bf16.msra.mxu0 %v640
    %2524 = vmatpush.bf16.msra.mxu0 %v636
    %2525 = vmatmul.bf16.gmra.mxu0 %v2326
    %v2526 = vpop.f32.mrf.mxu0
    %v2527 = vadd.f32 0.0, %v2526
    %v2528 = vpop.f32.mrf.mxu0
    %2529 = vdwg.mxu0
    %2530 = vmatpush.bf16.msra.mxu0 %v665
    %2531 = vmatpush.bf16.msra.mxu0 %v661
    %2532 = vmatpush.bf16.msra.mxu0 %v657
    %2533 = vmatpush.bf16.msra.mxu0 %v653
    %2534 = vmatpush.bf16.msra.mxu0 %v649
    %2535 = vmatpush.bf16.msra.mxu0 %v645
    %2536 = vmatpush.bf16.msra.mxu0 %v641
    %2537 = vmatpush.bf16.msra.mxu0 %v637
    %2538 = vmatmul.bf16.gmra.mxu0 %v2326
    %v2539 = vpop.f32.mrf.mxu0
    %v2540 = vadd.f32 0.0, %v2539
    %v2541 = vpop.f32.mrf.mxu0
    %2542 = vdwg.mxu0
    %2543 = vmatpush.bf16.msra.mxu0 %v666
    %2544 = vmatpush.bf16.msra.mxu0 %v662
    %2545 = vmatpush.bf16.msra.mxu0 %v658
    %2546 = vmatpush.bf16.msra.mxu0 %v654
    %2547 = vmatpush.bf16.msra.mxu0 %v650
    %2548 = vmatpush.bf16.msra.mxu0 %v646
    %2549 = vmatpush.bf16.msra.mxu0 %v642
    %2550 = vmatpush.bf16.msra.mxu0 %v638
    %2551 = vmatmul.bf16.gmra.mxu0 %v2326
    %v2552 = vpop.f32.mrf.mxu0
    %v2553 = vadd.f32 0.0, %v2552
    %v2554 = vpop.f32.mrf.mxu0
    %2555 = vdwg.mxu0
    %v2556 = vadd.f32 %v2500, %v2514
    %v2557 = vadd.f32 %v2501, %v2527
    %v2558 = vadd.f32 %v2502, %v2540
    %v2559 = vadd.f32 %v2503, %v2553
    %v2560 = vxor.u32 %v2556, 2147483648
    %v2561 = vxor.u32 %v2557, 2147483648
    %v2562 = vxor.u32 %v2558, 2147483648
    %v2563 = vmul.f32 %v2560, 1.442695
    %v2564 = vpow.pop %v2563
    %v2565 = vmul.f32 %v2561, 1.442695
    %v2566 = vpow.pop %v2565
    %v2567 = vmul.f32 %v2562, 1.442695
    %v2568 = vpow.pop %v2567
    %v2569 = vadd.f32 %v2564, 1.0
    %v2570 = vadd.f32 %v2566, 1.0
    %v2571 = vadd.f32 %v2568, 1.0
    %v2572 = vrcp.pop %v2569
    %v2573 = vmul.f32 %v2569, %v2572
    %v2574 = vsub.f32 1.0, %v2573
    %v2575 = vmul.f32 %v2572, %v2574
    %v2576 = vadd.f32 %v2572, %v2575
    %vm2577 = vweird.f32 %v2569
    %vm2578 = vweird.f32 %v2572
    %vm2579 = vmor %vm2577, %vm2578
    %v2580 = vsel %vm2579, %v2572, %v2576
    %v2581 = vand.u32 2147483647, %v2569
    %vm2582 = vcmp.eq.f32.partialorder %v2581, 8.507059e+37
    %v2583 = vand.u32 %v2569, 2147483648
    %v2584 = vor.u32 1.1754944e-38, %v2583
    %v2585 = vsel %vm2582, %v2584, %v2580
    %v2586 = vmul.f32 1.0, %v2585
    %v2587 = vrcp.pop %v2570
    %v2588 = vmul.f32 %v2570, %v2587
    %v2589 = vsub.f32 1.0, %v2588
    %v2590 = vmul.f32 %v2587, %v2589
    %v2591 = vadd.f32 %v2587, %v2590
    %vm2592 = vweird.f32 %v2570
    %vm2593 = vweird.f32 %v2587
    %vm2594 = vmor %vm2592, %vm2593
    %v2595 = vsel %vm2594, %v2587, %v2591
    %v2596 = vand.u32 2147483647, %v2570
    %vm2597 = vcmp.eq.f32.partialorder %v2596, 8.507059e+37
    %v2598 = vand.u32 %v2570, 2147483648
    %v2599 = vor.u32 1.1754944e-38, %v2598
    %v2600 = vsel %vm2597, %v2599, %v2595
    %v2601 = vmul.f32 1.0, %v2600
    %v2602 = vrcp.pop %v2571
    %v2603 = vmul.f32 %v2571, %v2602
    %v2604 = vsub.f32 1.0, %v2603
    %v2605 = vmul.f32 %v2602, %v2604
    %v2606 = vadd.f32 %v2602, %v2605
    %vm2607 = vweird.f32 %v2571
    %vm2608 = vweird.f32 %v2602
    %vm2609 = vmor %vm2607, %vm2608
    %v2610 = vsel %vm2609, %v2602, %v2606
    %v2611 = vand.u32 2147483647, %v2571
    %vm2612 = vcmp.eq.f32.partialorder %v2611, 8.507059e+37
    %v2613 = vand.u32 %v2571, 2147483648
    %v2614 = vor.u32 1.1754944e-38, %v2613
    %v2615 = vsel %vm2612, %v2614, %v2610
    %v2616 = vmul.f32 1.0, %v2615
    %v2617 = vtanh.pop %v2559
    %v2618 = vmul.f32 %v2601, %v2323
    %v2619 = vmul.f32 %v2586, %v2617
    %v2620 = vadd.f32 %v2618, %v2619
    %v2621 = vtanh.pop %v2620
    %v2622 = vmul.f32 %v2616, %v2621
    %v2623 = vpack.c.bf16 %v2622, %v2622
    %2624 = vmatpush.bf16.msra.mxu0 %v943
    %2625 = vmatpush.bf16.msra.mxu0 %v939
    %2626 = vmatpush.bf16.msra.mxu0 %v935
    %2627 = vmatpush.bf16.msra.mxu0 %v931
    %2628 = vmatpush.bf16.msra.mxu0 %v927
    %2629 = vmatpush.bf16.msra.mxu0 %v923
    %2630 = vmatpush.bf16.msra.mxu0 %v919
    %2631 = vmatpush.bf16.msra.mxu0 %v915
    %2632 = vmatmul.bf16.gmra.mxu0 %v2623
    %v2633 = vpop.f32.mrf.mxu0
    %v2634 = vadd.f32 0.0, %v2633
    %v2635 = vpop.f32.mrf.mxu0
    %2636 = vdwg.mxu0
    %2637 = vmatpush.bf16.msra.mxu0 %v944
    %2638 = vmatpush.bf16.msra.mxu0 %v940
    %2639 = vmatpush.bf16.msra.mxu0 %v936
    %2640 = vmatpush.bf16.msra.mxu0 %v932
    %2641 = vmatpush.bf16.msra.mxu0 %v928
    %2642 = vmatpush.bf16.msra.mxu0 %v924
    %2643 = vmatpush.bf16.msra.mxu0 %v920
    %2644 = vmatpush.bf16.msra.mxu0 %v916
    %2645 = vmatmul.bf16.gmra.mxu0 %v2623
    %v2646 = vpop.f32.mrf.mxu0
    %v2647 = vadd.f32 0.0, %v2646
    %v2648 = vpop.f32.mrf.mxu0
    %2649 = vdwg.mxu0
    %2650 = vmatpush.bf16.msra.mxu0 %v945
    %2651 = vmatpush.bf16.msra.mxu0 %v941
    %2652 = vmatpush.bf16.msra.mxu0 %v937
    %2653 = vmatpush.bf16.msra.mxu0 %v933
    %2654 = vmatpush.bf16.msra.mxu0 %v929
    %2655 = vmatpush.bf16.msra.mxu0 %v925
    %2656 = vmatpush.bf16.msra.mxu0 %v921
    %2657 = vmatpush.bf16.msra.mxu0 %v917
    %2658 = vmatmul.bf16.gmra.mxu0 %v2623
    %v2659 = vpop.f32.mrf.mxu0
    %v2660 = vadd.f32 0.0, %v2659
    %v2661 = vpop.f32.mrf.mxu0
    %2662 = vdwg.mxu0
    %2663 = vmatpush.bf16.msra.mxu0 %v946
    %2664 = vmatpush.bf16.msra.mxu0 %v942
    %2665 = vmatpush.bf16.msra.mxu0 %v938
    %2666 = vmatpush.bf16.msra.mxu0 %v934
    %2667 = vmatpush.bf16.msra.mxu0 %v930
    %2668 = vmatpush.bf16.msra.mxu0 %v926
    %2669 = vmatpush.bf16.msra.mxu0 %v922
    %2670 = vmatpush.bf16.msra.mxu0 %v918
    %2671 = vmatmul.bf16.gmra.mxu0 %v2623
    %v2672 = vpop.f32.mrf.mxu0
    %v2673 = vadd.f32 0.0, %v2672
    %v2674 = vpop.f32.mrf.mxu0
    %2675 = vdwg.mxu0
    %2676 = vmatpush.bf16.msra.mxu0 %v1155
    %2677 = vmatpush.bf16.msra.mxu0 %v1151
    %2678 = vmatpush.bf16.msra.mxu0 %v1147
    %2679 = vmatpush.bf16.msra.mxu0 %v1143
    %2680 = vmatpush.bf16.msra.mxu0 %v1139
    %2681 = vmatpush.bf16.msra.mxu0 %v1135
    %2682 = vmatpush.bf16.msra.mxu0 %v1131
    %2683 = vmatpush.bf16.msra.mxu0 %v1127
    %2684 = vmatmul.bf16.gmra.mxu0 %v2498
    %v2685 = vpop.f32.mrf.mxu0
    %v2686 = vadd.f32 %v2634, %v2685
    %v2687 = vpop.f32.mrf.mxu0
    %2688 = vdwg.mxu0
    %2689 = vmatpush.bf16.msra.mxu0 %v1156
    %2690 = vmatpush.bf16.msra.mxu0 %v1152
    %2691 = vmatpush.bf16.msra.mxu0 %v1148
    %2692 = vmatpush.bf16.msra.mxu0 %v1144
    %2693 = vmatpush.bf16.msra.mxu0 %v1140
    %2694 = vmatpush.bf16.msra.mxu0 %v1136
    %2695 = vmatpush.bf16.msra.mxu0 %v1132
    %2696 = vmatpush.bf16.msra.mxu0 %v1128
    %2697 = vmatmul.bf16.gmra.mxu0 %v2498
    %v2698 = vpop.f32.mrf.mxu0
    %v2699 = vadd.f32 %v2647, %v2698
    %v2700 = vpop.f32.mrf.mxu0
    %2701 = vdwg.mxu0
    %2702 = vmatpush.bf16.msra.mxu0 %v1157
    %2703 = vmatpush.bf16.msra.mxu0 %v1153
    %2704 = vmatpush.bf16.msra.mxu0 %v1149
    %2705 = vmatpush.bf16.msra.mxu0 %v1145
    %2706 = vmatpush.bf16.msra.mxu0 %v1141
    %2707 = vmatpush.bf16.msra.mxu0 %v1137
    %2708 = vmatpush.bf16.msra.mxu0 %v1133
    %2709 = vmatpush.bf16.msra.mxu0 %v1129
    %2710 = vmatmul.bf16.gmra.mxu0 %v2498
    %v2711 = vpop.f32.mrf.mxu0
    %v2712 = vadd.f32 %v2660, %v2711
    %v2713 = vpop.f32.mrf.mxu0
    %2714 = vdwg.mxu0
    %2715 = vmatpush.bf16.msra.mxu0 %v1158
    %2716 = vmatpush.bf16.msra.mxu0 %v1154
    %2717 = vmatpush.bf16.msra.mxu0 %v1150
    %2718 = vmatpush.bf16.msra.mxu0 %v1146
    %2719 = vmatpush.bf16.msra.mxu0 %v1142
    %2720 = vmatpush.bf16.msra.mxu0 %v1138
    %2721 = vmatpush.bf16.msra.mxu0 %v1134
    %2722 = vmatpush.bf16.msra.mxu0 %v1130
    %2723 = vmatmul.bf16.gmra.mxu0 %v2498
    %v2724 = vpop.f32.mrf.mxu0
    %v2725 = vadd.f32 %v2673, %v2724
    %v2726 = vpop.f32.mrf.mxu0
    %2727 = vdwg.mxu0
    %v2728 = vadd.f32 %v2686, %v424
    %v2729 = vadd.f32 %v2699, %v425
    %v2730 = vadd.f32 %v2712, %v426
    %v2731 = vadd.f32 %v2725, %v427
    %v2732 = vxor.u32 %v2728, 2147483648
    %v2733 = vxor.u32 %v2729, 2147483648
    %v2734 = vxor.u32 %v2730, 2147483648
    %v2735 = vmul.f32 %v2732, 1.442695
    %v2736 = vpow.pop %v2735
    %v2737 = vmul.f32 %v2733, 1.442695
    %v2738 = vpow.pop %v2737
    %v2739 = vmul.f32 %v2734, 1.442695
    %v2740 = vpow.pop %v2739
    %v2741 = vadd.f32 %v2736, 1.0
    %v2742 = vadd.f32 %v2738, 1.0
    %v2743 = vadd.f32 %v2740, 1.0
    %v2744 = vrcp.pop %v2741
    %v2745 = vmul.f32 %v2741, %v2744
    %v2746 = vsub.f32 1.0, %v2745
    %v2747 = vmul.f32 %v2744, %v2746
    %v2748 = vadd.f32 %v2744, %v2747
    %vm2749 = vweird.f32 %v2741
    %vm2750 = vweird.f32 %v2744
    %vm2751 = vmor %vm2749, %vm2750
    %v2752 = vsel %vm2751, %v2744, %v2748
    %v2753 = vand.u32 2147483647, %v2741
    %vm2754 = vcmp.eq.f32.partialorder %v2753, 8.507059e+37
    %v2755 = vand.u32 %v2741, 2147483648
    %v2756 = vor.u32 1.1754944e-38, %v2755
    %v2757 = vsel %vm2754, %v2756, %v2752
    %v2758 = vmul.f32 1.0, %v2757
    %v2759 = vrcp.pop %v2742
    %v2760 = vmul.f32 %v2742, %v2759
    %v2761 = vsub.f32 1.0, %v2760
    %v2762 = vmul.f32 %v2759, %v2761
    %v2763 = vadd.f32 %v2759, %v2762
    %vm2764 = vweird.f32 %v2742
    %vm2765 = vweird.f32 %v2759
    %vm2766 = vmor %vm2764, %vm2765
    %v2767 = vsel %vm2766, %v2759, %v2763
    %v2768 = vand.u32 2147483647, %v2742
    %vm2769 = vcmp.eq.f32.partialorder %v2768, 8.507059e+37
    %v2770 = vand.u32 %v2742, 2147483648
    %v2771 = vor.u32 1.1754944e-38, %v2770
    %v2772 = vsel %vm2769, %v2771, %v2767
    %v2773 = vmul.f32 1.0, %v2772
    %v2774 = vrcp.pop %v2743
    %v2775 = vmul.f32 %v2743, %v2774
    %v2776 = vsub.f32 1.0, %v2775
    %v2777 = vmul.f32 %v2774, %v2776
    %v2778 = vadd.f32 %v2774, %v2777
    %vm2779 = vweird.f32 %v2743
    %vm2780 = vweird.f32 %v2774
    %vm2781 = vmor %vm2779, %vm2780
    %v2782 = vsel %vm2781, %v2774, %v2778
    %v2783 = vand.u32 2147483647, %v2743
    %vm2784 = vcmp.eq.f32.partialorder %v2783, 8.507059e+37
    %v2785 = vand.u32 %v2743, 2147483648
    %v2786 = vor.u32 1.1754944e-38, %v2785
    %v2787 = vsel %vm2784, %v2786, %v2782
    %v2788 = vmul.f32 1.0, %v2787
    %v2789 = vtanh.pop %v2731
    %v2790 = vmul.f32 %v2773, %v2495
    %v2791 = vmul.f32 %v2758, %v2789
    %v2792 = vadd.f32 %v2790, %v2791
    %v2793 = vtanh.pop %v2792
    %v2794 = vmul.f32 %v2788, %v2793
    %v2795 = vpack.c.bf16 %v2794, %v2794
    %s2796 = scalar_lea.vmem [#allocation2], 192
    %v2797 = vld [vmem:[%s2796] sm:$0xff]
    %v2798 = vld [vmem:[%s2796 + $0x8] sm:$0xff]
    %v2799 = vld [vmem:[%s2796 + $0x10] sm:$0xff]
    %v2800 = vld [vmem:[%s2796 + $0x18] sm:$0xff]
    %2801 = vmatpush.bf16.msra.mxu0 %v663
    %2802 = vmatpush.bf16.msra.mxu0 %v659
    %2803 = vmatpush.bf16.msra.mxu0 %v655
    %2804 = vmatpush.bf16.msra.mxu0 %v651
    %2805 = vmatpush.bf16.msra.mxu0 %v647
    %2806 = vmatpush.bf16.msra.mxu0 %v643
    %2807 = vmatpush.bf16.msra.mxu0 %v639
    %2808 = vmatpush.bf16.msra.mxu0 %v635
    %2809 = vmatmul.bf16.gmra.mxu0 %v2623
    %v2810 = vpop.f32.mrf.mxu0
    %v2811 = vadd.f32 0.0, %v2810
    %v2812 = vpop.f32.mrf.mxu0
    %2813 = vdwg.mxu0
    %2814 = vmatpush.bf16.msra.mxu0 %v664
    %2815 = vmatpush.bf16.msra.mxu0 %v660
    %2816 = vmatpush.bf16.msra.mxu0 %v656
    %2817 = vmatpush.bf16.msra.mxu0 %v652
    %2818 = vmatpush.bf16.msra.mxu0 %v648
    %2819 = vmatpush.bf16.msra.mxu0 %v644
    %2820 = vmatpush.bf16.msra.mxu0 %v640
    %2821 = vmatpush.bf16.msra.mxu0 %v636
    %2822 = vmatmul.bf16.gmra.mxu0 %v2623
    %v2823 = vpop.f32.mrf.mxu0
    %v2824 = vadd.f32 0.0, %v2823
    %v2825 = vpop.f32.mrf.mxu0
    %2826 = vdwg.mxu0
    %2827 = vmatpush.bf16.msra.mxu0 %v665
    %2828 = vmatpush.bf16.msra.mxu0 %v661
    %2829 = vmatpush.bf16.msra.mxu0 %v657
    %2830 = vmatpush.bf16.msra.mxu0 %v653
    %2831 = vmatpush.bf16.msra.mxu0 %v649
    %2832 = vmatpush.bf16.msra.mxu0 %v645
    %2833 = vmatpush.bf16.msra.mxu0 %v641
    %2834 = vmatpush.bf16.msra.mxu0 %v637
    %2835 = vmatmul.bf16.gmra.mxu0 %v2623
    %v2836 = vpop.f32.mrf.mxu0
    %v2837 = vadd.f32 0.0, %v2836
    %v2838 = vpop.f32.mrf.mxu0
    %2839 = vdwg.mxu0
    %2840 = vmatpush.bf16.msra.mxu0 %v666
    %2841 = vmatpush.bf16.msra.mxu0 %v662
    %2842 = vmatpush.bf16.msra.mxu0 %v658
    %2843 = vmatpush.bf16.msra.mxu0 %v654
    %2844 = vmatpush.bf16.msra.mxu0 %v650
    %2845 = vmatpush.bf16.msra.mxu0 %v646
    %2846 = vmatpush.bf16.msra.mxu0 %v642
    %2847 = vmatpush.bf16.msra.mxu0 %v638
    %2848 = vmatmul.bf16.gmra.mxu0 %v2623
    %v2849 = vpop.f32.mrf.mxu0
    %v2850 = vadd.f32 0.0, %v2849
    %v2851 = vpop.f32.mrf.mxu0
    %2852 = vdwg.mxu0
    %v2853 = vadd.f32 %v2797, %v2811
    %v2854 = vadd.f32 %v2798, %v2824
    %v2855 = vadd.f32 %v2799, %v2837
    %v2856 = vadd.f32 %v2800, %v2850
    %v2857 = vxor.u32 %v2853, 2147483648
    %v2858 = vxor.u32 %v2854, 2147483648
    %v2859 = vxor.u32 %v2855, 2147483648
    %v2860 = vmul.f32 %v2857, 1.442695
    %v2861 = vpow.pop %v2860
    %v2862 = vmul.f32 %v2858, 1.442695
    %v2863 = vpow.pop %v2862
    %v2864 = vmul.f32 %v2859, 1.442695
    %v2865 = vpow.pop %v2864
    %v2866 = vadd.f32 %v2861, 1.0
    %v2867 = vadd.f32 %v2863, 1.0
    %v2868 = vadd.f32 %v2865, 1.0
    %v2869 = vrcp.pop %v2866
    %v2870 = vmul.f32 %v2866, %v2869
    %v2871 = vsub.f32 1.0, %v2870
    %v2872 = vmul.f32 %v2869, %v2871
    %v2873 = vadd.f32 %v2869, %v2872
    %vm2874 = vweird.f32 %v2866
    %vm2875 = vweird.f32 %v2869
    %vm2876 = vmor %vm2874, %vm2875
    %v2877 = vsel %vm2876, %v2869, %v2873
    %v2878 = vand.u32 2147483647, %v2866
    %vm2879 = vcmp.eq.f32.partialorder %v2878, 8.507059e+37
    %v2880 = vand.u32 %v2866, 2147483648
    %v2881 = vor.u32 1.1754944e-38, %v2880
    %v2882 = vsel %vm2879, %v2881, %v2877
    %v2883 = vmul.f32 1.0, %v2882
    %v2884 = vrcp.pop %v2867
    %v2885 = vmul.f32 %v2867, %v2884
    %v2886 = vsub.f32 1.0, %v2885
    %v2887 = vmul.f32 %v2884, %v2886
    %v2888 = vadd.f32 %v2884, %v2887
    %vm2889 = vweird.f32 %v2867
    %vm2890 = vweird.f32 %v2884
    %vm2891 = vmor %vm2889, %vm2890
    %v2892 = vsel %vm2891, %v2884, %v2888
    %v2893 = vand.u32 2147483647, %v2867
    %vm2894 = vcmp.eq.f32.partialorder %v2893, 8.507059e+37
    %v2895 = vand.u32 %v2867, 2147483648
    %v2896 = vor.u32 1.1754944e-38, %v2895
    %v2897 = vsel %vm2894, %v2896, %v2892
    %v2898 = vmul.f32 1.0, %v2897
    %v2899 = vrcp.pop %v2868
    %v2900 = vmul.f32 %v2868, %v2899
    %v2901 = vsub.f32 1.0, %v2900
    %v2902 = vmul.f32 %v2899, %v2901
    %v2903 = vadd.f32 %v2899, %v2902
    %vm2904 = vweird.f32 %v2868
    %vm2905 = vweird.f32 %v2899
    %vm2906 = vmor %vm2904, %vm2905
    %v2907 = vsel %vm2906, %v2899, %v2903
    %v2908 = vand.u32 2147483647, %v2868
    %vm2909 = vcmp.eq.f32.partialorder %v2908, 8.507059e+37
    %v2910 = vand.u32 %v2868, 2147483648
    %v2911 = vor.u32 1.1754944e-38, %v2910
    %v2912 = vsel %vm2909, %v2911, %v2907
    %v2913 = vmul.f32 1.0, %v2912
    %v2914 = vtanh.pop %v2856
    %v2915 = vmul.f32 %v2898, %v2620
    %v2916 = vmul.f32 %v2883, %v2914
    %v2917 = vadd.f32 %v2915, %v2916
    %v2918 = vtanh.pop %v2917
    %v2919 = vmul.f32 %v2913, %v2918
    %v2920 = vpack.c.bf16 %v2919, %v2919
    %2921 = vmatpush.bf16.msra.mxu0 %v943
    %2922 = vmatpush.bf16.msra.mxu0 %v939
    %2923 = vmatpush.bf16.msra.mxu0 %v935
    %2924 = vmatpush.bf16.msra.mxu0 %v931
    %2925 = vmatpush.bf16.msra.mxu0 %v927
    %2926 = vmatpush.bf16.msra.mxu0 %v923
    %2927 = vmatpush.bf16.msra.mxu0 %v919
    %2928 = vmatpush.bf16.msra.mxu0 %v915
    %2929 = vmatmul.bf16.gmra.mxu0 %v2920
    %v2930 = vpop.f32.mrf.mxu0
    %v2931 = vadd.f32 0.0, %v2930
    %v2932 = vpop.f32.mrf.mxu0
    %2933 = vdwg.mxu0
    %2934 = vmatpush.bf16.msra.mxu0 %v944
    %2935 = vmatpush.bf16.msra.mxu0 %v940
    %2936 = vmatpush.bf16.msra.mxu0 %v936
    %2937 = vmatpush.bf16.msra.mxu0 %v932
    %2938 = vmatpush.bf16.msra.mxu0 %v928
    %2939 = vmatpush.bf16.msra.mxu0 %v924
    %2940 = vmatpush.bf16.msra.mxu0 %v920
    %2941 = vmatpush.bf16.msra.mxu0 %v916
    %2942 = vmatmul.bf16.gmra.mxu0 %v2920
    %v2943 = vpop.f32.mrf.mxu0
    %v2944 = vadd.f32 0.0, %v2943
    %v2945 = vpop.f32.mrf.mxu0
    %2946 = vdwg.mxu0
    %2947 = vmatpush.bf16.msra.mxu0 %v945
    %2948 = vmatpush.bf16.msra.mxu0 %v941
    %2949 = vmatpush.bf16.msra.mxu0 %v937
    %2950 = vmatpush.bf16.msra.mxu0 %v933
    %2951 = vmatpush.bf16.msra.mxu0 %v929
    %2952 = vmatpush.bf16.msra.mxu0 %v925
    %2953 = vmatpush.bf16.msra.mxu0 %v921
    %2954 = vmatpush.bf16.msra.mxu0 %v917
    %2955 = vmatmul.bf16.gmra.mxu0 %v2920
    %v2956 = vpop.f32.mrf.mxu0
    %v2957 = vadd.f32 0.0, %v2956
    %v2958 = vpop.f32.mrf.mxu0
    %2959 = vdwg.mxu0
    %2960 = vmatpush.bf16.msra.mxu0 %v946
    %2961 = vmatpush.bf16.msra.mxu0 %v942
    %2962 = vmatpush.bf16.msra.mxu0 %v938
    %2963 = vmatpush.bf16.msra.mxu0 %v934
    %2964 = vmatpush.bf16.msra.mxu0 %v930
    %2965 = vmatpush.bf16.msra.mxu0 %v926
    %2966 = vmatpush.bf16.msra.mxu0 %v922
    %2967 = vmatpush.bf16.msra.mxu0 %v918
    %2968 = vmatmul.bf16.gmra.mxu0 %v2920
    %v2969 = vpop.f32.mrf.mxu0
    %v2970 = vadd.f32 0.0, %v2969
    %v2971 = vpop.f32.mrf.mxu0
    %2972 = vdwg.mxu0
    %2973 = vmatpush.bf16.msra.mxu0 %v1155
    %2974 = vmatpush.bf16.msra.mxu0 %v1151
    %2975 = vmatpush.bf16.msra.mxu0 %v1147
    %2976 = vmatpush.bf16.msra.mxu0 %v1143
    %2977 = vmatpush.bf16.msra.mxu0 %v1139
    %2978 = vmatpush.bf16.msra.mxu0 %v1135
    %2979 = vmatpush.bf16.msra.mxu0 %v1131
    %2980 = vmatpush.bf16.msra.mxu0 %v1127
    %2981 = vmatmul.bf16.gmra.mxu0 %v2795
    %v2982 = vpop.f32.mrf.mxu0
    %v2983 = vadd.f32 %v2931, %v2982
    %v2984 = vpop.f32.mrf.mxu0
    %2985 = vdwg.mxu0
    %2986 = vmatpush.bf16.msra.mxu0 %v1156
    %2987 = vmatpush.bf16.msra.mxu0 %v1152
    %2988 = vmatpush.bf16.msra.mxu0 %v1148
    %2989 = vmatpush.bf16.msra.mxu0 %v1144
    %2990 = vmatpush.bf16.msra.mxu0 %v1140
    %2991 = vmatpush.bf16.msra.mxu0 %v1136
    %2992 = vmatpush.bf16.msra.mxu0 %v1132
    %2993 = vmatpush.bf16.msra.mxu0 %v1128
    %2994 = vmatmul.bf16.gmra.mxu0 %v2795
    %v2995 = vpop.f32.mrf.mxu0
    %v2996 = vadd.f32 %v2944, %v2995
    %v2997 = vpop.f32.mrf.mxu0
    %2998 = vdwg.mxu0
    %2999 = vmatpush.bf16.msra.mxu0 %v1157
    %3000 = vmatpush.bf16.msra.mxu0 %v1153
    %3001 = vmatpush.bf16.msra.mxu0 %v1149
    %3002 = vmatpush.bf16.msra.mxu0 %v1145
    %3003 = vmatpush.bf16.msra.mxu0 %v1141
    %3004 = vmatpush.bf16.msra.mxu0 %v1137
    %3005 = vmatpush.bf16.msra.mxu0 %v1133
    %3006 = vmatpush.bf16.msra.mxu0 %v1129
    %3007 = vmatmul.bf16.gmra.mxu0 %v2795
    %v3008 = vpop.f32.mrf.mxu0
    %v3009 = vadd.f32 %v2957, %v3008
    %v3010 = vpop.f32.mrf.mxu0
    %3011 = vdwg.mxu0
    %3012 = vmatpush.bf16.msra.mxu0 %v1158
    %3013 = vmatpush.bf16.msra.mxu0 %v1154
    %3014 = vmatpush.bf16.msra.mxu0 %v1150
    %3015 = vmatpush.bf16.msra.mxu0 %v1146
    %3016 = vmatpush.bf16.msra.mxu0 %v1142
    %3017 = vmatpush.bf16.msra.mxu0 %v1138
    %3018 = vmatpush.bf16.msra.mxu0 %v1134
    %3019 = vmatpush.bf16.msra.mxu0 %v1130
    %3020 = vmatmul.bf16.gmra.mxu0 %v2795
    %v3021 = vpop.f32.mrf.mxu0
    %v3022 = vadd.f32 %v2970, %v3021
    %v3023 = vpop.f32.mrf.mxu0
    %3024 = vdwg.mxu0
    %v3025 = vadd.f32 %v2983, %v424
    %v3026 = vadd.f32 %v2996, %v425
    %v3027 = vadd.f32 %v3009, %v426
    %v3028 = vadd.f32 %v3022, %v427
    %v3029 = vxor.u32 %v3025, 2147483648
    %v3030 = vxor.u32 %v3026, 2147483648
    %v3031 = vxor.u32 %v3027, 2147483648
    %v3032 = vmul.f32 %v3029, 1.442695
    %v3033 = vpow.pop %v3032
    %v3034 = vmul.f32 %v3030, 1.442695
    %v3035 = vpow.pop %v3034
    %v3036 = vmul.f32 %v3031, 1.442695
    %v3037 = vpow.pop %v3036
    %v3038 = vadd.f32 %v3033, 1.0
    %v3039 = vadd.f32 %v3035, 1.0
    %v3040 = vadd.f32 %v3037, 1.0
    %v3041 = vrcp.pop %v3038
    %v3042 = vmul.f32 %v3038, %v3041
    %v3043 = vsub.f32 1.0, %v3042
    %v3044 = vmul.f32 %v3041, %v3043
    %v3045 = vadd.f32 %v3041, %v3044
    %vm3046 = vweird.f32 %v3038
    %vm3047 = vweird.f32 %v3041
    %vm3048 = vmor %vm3046, %vm3047
    %v3049 = vsel %vm3048, %v3041, %v3045
    %v3050 = vand.u32 2147483647, %v3038
    %vm3051 = vcmp.eq.f32.partialorder %v3050, 8.507059e+37
    %v3052 = vand.u32 %v3038, 2147483648
    %v3053 = vor.u32 1.1754944e-38, %v3052
    %v3054 = vsel %vm3051, %v3053, %v3049
    %v3055 = vmul.f32 1.0, %v3054
    %v3056 = vrcp.pop %v3039
    %v3057 = vmul.f32 %v3039, %v3056
    %v3058 = vsub.f32 1.0, %v3057
    %v3059 = vmul.f32 %v3056, %v3058
    %v3060 = vadd.f32 %v3056, %v3059
    %vm3061 = vweird.f32 %v3039
    %vm3062 = vweird.f32 %v3056
    %vm3063 = vmor %vm3061, %vm3062
    %v3064 = vsel %vm3063, %v3056, %v3060
    %v3065 = vand.u32 2147483647, %v3039
    %vm3066 = vcmp.eq.f32.partialorder %v3065, 8.507059e+37
    %v3067 = vand.u32 %v3039, 2147483648
    %v3068 = vor.u32 1.1754944e-38, %v3067
    %v3069 = vsel %vm3066, %v3068, %v3064
    %v3070 = vmul.f32 1.0, %v3069
    %v3071 = vrcp.pop %v3040
    %v3072 = vmul.f32 %v3040, %v3071
    %v3073 = vsub.f32 1.0, %v3072
    %v3074 = vmul.f32 %v3071, %v3073
    %v3075 = vadd.f32 %v3071, %v3074
    %vm3076 = vweird.f32 %v3040
    %vm3077 = vweird.f32 %v3071
    %vm3078 = vmor %vm3076, %vm3077
    %v3079 = vsel %vm3078, %v3071, %v3075
    %v3080 = vand.u32 2147483647, %v3040
    %vm3081 = vcmp.eq.f32.partialorder %v3080, 8.507059e+37
    %v3082 = vand.u32 %v3040, 2147483648
    %v3083 = vor.u32 1.1754944e-38, %v3082
    %v3084 = vsel %vm3081, %v3083, %v3079
    %v3085 = vmul.f32 1.0, %v3084
    %v3086 = vtanh.pop %v3028
    %v3087 = vmul.f32 %v3070, %v2792
    %v3088 = vmul.f32 %v3055, %v3086
    %v3089 = vadd.f32 %v3087, %v3088
    %v3090 = vtanh.pop %v3089
    %v3091 = vmul.f32 %v3085, %v3090
    %v3092 = vpack.c.bf16 %v3091, %v3091
    %s3093 = scalar_lea.vmem [#allocation2], 224
    %v3094 = vld [vmem:[%s3093] sm:$0xff]
    %v3095 = vld [vmem:[%s3093 + $0x8] sm:$0xff]
    %v3096 = vld [vmem:[%s3093 + $0x10] sm:$0xff]
    %v3097 = vld [vmem:[%s3093 + $0x18] sm:$0xff]
    %3098 = vmatpush.bf16.msra.mxu0 %v663
    %3099 = vmatpush.bf16.msra.mxu0 %v659
    %3100 = vmatpush.bf16.msra.mxu0 %v655
    %3101 = vmatpush.bf16.msra.mxu0 %v651
    %3102 = vmatpush.bf16.msra.mxu0 %v647
    %3103 = vmatpush.bf16.msra.mxu0 %v643
    %3104 = vmatpush.bf16.msra.mxu0 %v639
    %3105 = vmatpush.bf16.msra.mxu0 %v635
    %3106 = vmatmul.bf16.gmra.mxu0 %v2920
    %v3107 = vpop.f32.mrf.mxu0
    %v3108 = vadd.f32 0.0, %v3107
    %v3109 = vpop.f32.mrf.mxu0
    %3110 = vdwg.mxu0
    %3111 = vmatpush.bf16.msra.mxu0 %v664
    %3112 = vmatpush.bf16.msra.mxu0 %v660
    %3113 = vmatpush.bf16.msra.mxu0 %v656
    %3114 = vmatpush.bf16.msra.mxu0 %v652
    %3115 = vmatpush.bf16.msra.mxu0 %v648
    %3116 = vmatpush.bf16.msra.mxu0 %v644
    %3117 = vmatpush.bf16.msra.mxu0 %v640
    %3118 = vmatpush.bf16.msra.mxu0 %v636
    %3119 = vmatmul.bf16.gmra.mxu0 %v2920
    %v3120 = vpop.f32.mrf.mxu0
    %v3121 = vadd.f32 0.0, %v3120
    %v3122 = vpop.f32.mrf.mxu0
    %3123 = vdwg.mxu0
    %3124 = vmatpush.bf16.msra.mxu0 %v665
    %3125 = vmatpush.bf16.msra.mxu0 %v661
    %3126 = vmatpush.bf16.msra.mxu0 %v657
    %3127 = vmatpush.bf16.msra.mxu0 %v653
    %3128 = vmatpush.bf16.msra.mxu0 %v649
    %3129 = vmatpush.bf16.msra.mxu0 %v645
    %3130 = vmatpush.bf16.msra.mxu0 %v641
    %3131 = vmatpush.bf16.msra.mxu0 %v637
    %3132 = vmatmul.bf16.gmra.mxu0 %v2920
    %v3133 = vpop.f32.mrf.mxu0
    %v3134 = vadd.f32 0.0, %v3133
    %v3135 = vpop.f32.mrf.mxu0
    %3136 = vdwg.mxu0
    %3137 = vmatpush.bf16.msra.mxu0 %v666
    %3138 = vmatpush.bf16.msra.mxu0 %v662
    %3139 = vmatpush.bf16.msra.mxu0 %v658
    %3140 = vmatpush.bf16.msra.mxu0 %v654
    %3141 = vmatpush.bf16.msra.mxu0 %v650
    %3142 = vmatpush.bf16.msra.mxu0 %v646
    %3143 = vmatpush.bf16.msra.mxu0 %v642
    %3144 = vmatpush.bf16.msra.mxu0 %v638
    %3145 = vmatmul.bf16.gmra.mxu0 %v2920
    %v3146 = vpop.f32.mrf.mxu0
    %v3147 = vadd.f32 0.0, %v3146
    %v3148 = vpop.f32.mrf.mxu0
    %3149 = vdwg.mxu0
    %v3150 = vadd.f32 %v3094, %v3108
    %v3151 = vadd.f32 %v3095, %v3121
    %v3152 = vadd.f32 %v3096, %v3134
    %v3153 = vadd.f32 %v3097, %v3147
    %v3154 = vxor.u32 %v3150, 2147483648
    %v3155 = vxor.u32 %v3151, 2147483648
    %v3156 = vxor.u32 %v3152, 2147483648
    %v3157 = vmul.f32 %v3154, 1.442695
    %v3158 = vpow.pop %v3157
    %v3159 = vmul.f32 %v3155, 1.442695
    %v3160 = vpow.pop %v3159
    %v3161 = vmul.f32 %v3156, 1.442695
    %v3162 = vpow.pop %v3161
    %v3163 = vadd.f32 %v3158, 1.0
    %v3164 = vadd.f32 %v3160, 1.0
    %v3165 = vadd.f32 %v3162, 1.0
    %v3166 = vrcp.pop %v3163
    %v3167 = vmul.f32 %v3163, %v3166
    %v3168 = vsub.f32 1.0, %v3167
    %v3169 = vmul.f32 %v3166, %v3168
    %v3170 = vadd.f32 %v3166, %v3169
    %vm3171 = vweird.f32 %v3163
    %vm3172 = vweird.f32 %v3166
    %vm3173 = vmor %vm3171, %vm3172
    %v3174 = vsel %vm3173, %v3166, %v3170
    %v3175 = vand.u32 2147483647, %v3163
    %vm3176 = vcmp.eq.f32.partialorder %v3175, 8.507059e+37
    %v3177 = vand.u32 %v3163, 2147483648
    %v3178 = vor.u32 1.1754944e-38, %v3177
    %v3179 = vsel %vm3176, %v3178, %v3174
    %v3180 = vmul.f32 1.0, %v3179
    %v3181 = vrcp.pop %v3164
    %v3182 = vmul.f32 %v3164, %v3181
    %v3183 = vsub.f32 1.0, %v3182
    %v3184 = vmul.f32 %v3181, %v3183
    %v3185 = vadd.f32 %v3181, %v3184
    %vm3186 = vweird.f32 %v3164
    %vm3187 = vweird.f32 %v3181
    %vm3188 = vmor %vm3186, %vm3187
    %v3189 = vsel %vm3188, %v3181, %v3185
    %v3190 = vand.u32 2147483647, %v3164
    %vm3191 = vcmp.eq.f32.partialorder %v3190, 8.507059e+37
    %v3192 = vand.u32 %v3164, 2147483648
    %v3193 = vor.u32 1.1754944e-38, %v3192
    %v3194 = vsel %vm3191, %v3193, %v3189
    %v3195 = vmul.f32 1.0, %v3194
    %v3196 = vrcp.pop %v3165
    %v3197 = vmul.f32 %v3165, %v3196
    %v3198 = vsub.f32 1.0, %v3197
    %v3199 = vmul.f32 %v3196, %v3198
    %v3200 = vadd.f32 %v3196, %v3199
    %vm3201 = vweird.f32 %v3165
    %vm3202 = vweird.f32 %v3196
    %vm3203 = vmor %vm3201, %vm3202
    %v3204 = vsel %vm3203, %v3196, %v3200
    %v3205 = vand.u32 2147483647, %v3165
    %vm3206 = vcmp.eq.f32.partialorder %v3205, 8.507059e+37
    %v3207 = vand.u32 %v3165, 2147483648
    %v3208 = vor.u32 1.1754944e-38, %v3207
    %v3209 = vsel %vm3206, %v3208, %v3204
    %v3210 = vmul.f32 1.0, %v3209
    %v3211 = vtanh.pop %v3153
    %v3212 = vmul.f32 %v3195, %v2917
    %v3213 = vmul.f32 %v3180, %v3211
    %v3214 = vadd.f32 %v3212, %v3213
    %v3215 = vtanh.pop %v3214
    %v3216 = vmul.f32 %v3210, %v3215
    %v3217 = vpack.c.bf16 %v3216, %v3216
    %3218 = vmatpush.bf16.msra.mxu0 %v943
    %3219 = vmatpush.bf16.msra.mxu0 %v939
    %3220 = vmatpush.bf16.msra.mxu0 %v935
    %3221 = vmatpush.bf16.msra.mxu0 %v931
    %3222 = vmatpush.bf16.msra.mxu0 %v927
    %3223 = vmatpush.bf16.msra.mxu0 %v923
    %3224 = vmatpush.bf16.msra.mxu0 %v919
    %3225 = vmatpush.bf16.msra.mxu0 %v915
    %3226 = vmatmul.bf16.gmra.mxu0 %v3217
    %v3227 = vpop.f32.mrf.mxu0
    %v3228 = vadd.f32 0.0, %v3227
    %v3229 = vpop.f32.mrf.mxu0
    %3230 = vdwg.mxu0
    %3231 = vmatpush.bf16.msra.mxu0 %v944
    %3232 = vmatpush.bf16.msra.mxu0 %v940
    %3233 = vmatpush.bf16.msra.mxu0 %v936
    %3234 = vmatpush.bf16.msra.mxu0 %v932
    %3235 = vmatpush.bf16.msra.mxu0 %v928
    %3236 = vmatpush.bf16.msra.mxu0 %v924
    %3237 = vmatpush.bf16.msra.mxu0 %v920
    %3238 = vmatpush.bf16.msra.mxu0 %v916
    %3239 = vmatmul.bf16.gmra.mxu0 %v3217
    %v3240 = vpop.f32.mrf.mxu0
    %v3241 = vadd.f32 0.0, %v3240
    %v3242 = vpop.f32.mrf.mxu0
    %3243 = vdwg.mxu0
    %3244 = vmatpush.bf16.msra.mxu0 %v945
    %3245 = vmatpush.bf16.msra.mxu0 %v941
    %3246 = vmatpush.bf16.msra.mxu0 %v937
    %3247 = vmatpush.bf16.msra.mxu0 %v933
    %3248 = vmatpush.bf16.msra.mxu0 %v929
    %3249 = vmatpush.bf16.msra.mxu0 %v925
    %3250 = vmatpush.bf16.msra.mxu0 %v921
    %3251 = vmatpush.bf16.msra.mxu0 %v917
    %3252 = vmatmul.bf16.gmra.mxu0 %v3217
    %v3253 = vpop.f32.mrf.mxu0
    %v3254 = vadd.f32 0.0, %v3253
    %v3255 = vpop.f32.mrf.mxu0
    %3256 = vdwg.mxu0
    %3257 = vmatpush.bf16.msra.mxu0 %v946
    %3258 = vmatpush.bf16.msra.mxu0 %v942
    %3259 = vmatpush.bf16.msra.mxu0 %v938
    %3260 = vmatpush.bf16.msra.mxu0 %v934
    %3261 = vmatpush.bf16.msra.mxu0 %v930
    %3262 = vmatpush.bf16.msra.mxu0 %v926
    %3263 = vmatpush.bf16.msra.mxu0 %v922
    %3264 = vmatpush.bf16.msra.mxu0 %v918
    %3265 = vmatmul.bf16.gmra.mxu0 %v3217
    %v3266 = vpop.f32.mrf.mxu0
    %v3267 = vadd.f32 0.0, %v3266
    %v3268 = vpop.f32.mrf.mxu0
    %3269 = vdwg.mxu0
    %3270 = vmatpush.bf16.msra.mxu0 %v1155
    %3271 = vmatpush.bf16.msra.mxu0 %v1151
    %3272 = vmatpush.bf16.msra.mxu0 %v1147
    %3273 = vmatpush.bf16.msra.mxu0 %v1143
    %3274 = vmatpush.bf16.msra.mxu0 %v1139
    %3275 = vmatpush.bf16.msra.mxu0 %v1135
    %3276 = vmatpush.bf16.msra.mxu0 %v1131
    %3277 = vmatpush.bf16.msra.mxu0 %v1127
    %3278 = vmatmul.bf16.gmra.mxu0 %v3092
    %v3279 = vpop.f32.mrf.mxu0
    %v3280 = vadd.f32 %v3228, %v3279
    %v3281 = vpop.f32.mrf.mxu0
    %3282 = vdwg.mxu0
    %3283 = vmatpush.bf16.msra.mxu0 %v1156
    %3284 = vmatpush.bf16.msra.mxu0 %v1152
    %3285 = vmatpush.bf16.msra.mxu0 %v1148
    %3286 = vmatpush.bf16.msra.mxu0 %v1144
    %3287 = vmatpush.bf16.msra.mxu0 %v1140
    %3288 = vmatpush.bf16.msra.mxu0 %v1136
    %3289 = vmatpush.bf16.msra.mxu0 %v1132
    %3290 = vmatpush.bf16.msra.mxu0 %v1128
    %3291 = vmatmul.bf16.gmra.mxu0 %v3092
    %v3292 = vpop.f32.mrf.mxu0
    %v3293 = vadd.f32 %v3241, %v3292
    %v3294 = vpop.f32.mrf.mxu0
    %3295 = vdwg.mxu0
    %3296 = vmatpush.bf16.msra.mxu0 %v1157
    %3297 = vmatpush.bf16.msra.mxu0 %v1153
    %3298 = vmatpush.bf16.msra.mxu0 %v1149
    %3299 = vmatpush.bf16.msra.mxu0 %v1145
    %3300 = vmatpush.bf16.msra.mxu0 %v1141
    %3301 = vmatpush.bf16.msra.mxu0 %v1137
    %3302 = vmatpush.bf16.msra.mxu0 %v1133
    %3303 = vmatpush.bf16.msra.mxu0 %v1129
    %3304 = vmatmul.bf16.gmra.mxu0 %v3092
    %v3305 = vpop.f32.mrf.mxu0
    %v3306 = vadd.f32 %v3254, %v3305
    %v3307 = vpop.f32.mrf.mxu0
    %3308 = vdwg.mxu0
    %3309 = vmatpush.bf16.msra.mxu0 %v1158
    %3310 = vmatpush.bf16.msra.mxu0 %v1154
    %3311 = vmatpush.bf16.msra.mxu0 %v1150
    %3312 = vmatpush.bf16.msra.mxu0 %v1146
    %3313 = vmatpush.bf16.msra.mxu0 %v1142
    %3314 = vmatpush.bf16.msra.mxu0 %v1138
    %3315 = vmatpush.bf16.msra.mxu0 %v1134
    %3316 = vmatpush.bf16.msra.mxu0 %v1130
    %3317 = vmatmul.bf16.gmra.mxu0 %v3092
    %v3318 = vpop.f32.mrf.mxu0
    %v3319 = vadd.f32 %v3267, %v3318
    %v3320 = vpop.f32.mrf.mxu0
    %3321 = vdwg.mxu0
    %v3322 = vadd.f32 %v3280, %v424
    %v3323 = vadd.f32 %v3293, %v425
    %v3324 = vadd.f32 %v3306, %v426
    %v3325 = vadd.f32 %v3319, %v427
    %v3326 = vxor.u32 %v3322, 2147483648
    %v3327 = vxor.u32 %v3323, 2147483648
    %v3328 = vxor.u32 %v3324, 2147483648
    %v3329 = vmul.f32 %v3326, 1.442695
    %v3330 = vpow.pop %v3329
    %v3331 = vmul.f32 %v3327, 1.442695
    %v3332 = vpow.pop %v3331
    %v3333 = vmul.f32 %v3328, 1.442695
    %v3334 = vpow.pop %v3333
    %v3335 = vadd.f32 %v3330, 1.0
    %v3336 = vadd.f32 %v3332, 1.0
    %v3337 = vadd.f32 %v3334, 1.0
    %v3338 = vrcp.pop %v3335
    %v3339 = vmul.f32 %v3335, %v3338
    %v3340 = vsub.f32 1.0, %v3339
    %v3341 = vmul.f32 %v3338, %v3340
    %v3342 = vadd.f32 %v3338, %v3341
    %vm3343 = vweird.f32 %v3335
    %vm3344 = vweird.f32 %v3338
    %vm3345 = vmor %vm3343, %vm3344
    %v3346 = vsel %vm3345, %v3338, %v3342
    %v3347 = vand.u32 2147483647, %v3335
    %vm3348 = vcmp.eq.f32.partialorder %v3347, 8.507059e+37
    %v3349 = vand.u32 %v3335, 2147483648
    %v3350 = vor.u32 1.1754944e-38, %v3349
    %v3351 = vsel %vm3348, %v3350, %v3346
    %v3352 = vmul.f32 1.0, %v3351
    %v3353 = vrcp.pop %v3336
    %v3354 = vmul.f32 %v3336, %v3353
    %v3355 = vsub.f32 1.0, %v3354
    %v3356 = vmul.f32 %v3353, %v3355
    %v3357 = vadd.f32 %v3353, %v3356
    %vm3358 = vweird.f32 %v3336
    %vm3359 = vweird.f32 %v3353
    %vm3360 = vmor %vm3358, %vm3359
    %v3361 = vsel %vm3360, %v3353, %v3357
    %v3362 = vand.u32 2147483647, %v3336
    %vm3363 = vcmp.eq.f32.partialorder %v3362, 8.507059e+37
    %v3364 = vand.u32 %v3336, 2147483648
    %v3365 = vor.u32 1.1754944e-38, %v3364
    %v3366 = vsel %vm3363, %v3365, %v3361
    %v3367 = vmul.f32 1.0, %v3366
    %v3368 = vrcp.pop %v3337
    %v3369 = vmul.f32 %v3337, %v3368
    %v3370 = vsub.f32 1.0, %v3369
    %v3371 = vmul.f32 %v3368, %v3370
    %v3372 = vadd.f32 %v3368, %v3371
    %vm3373 = vweird.f32 %v3337
    %vm3374 = vweird.f32 %v3368
    %vm3375 = vmor %vm3373, %vm3374
    %v3376 = vsel %vm3375, %v3368, %v3372
    %v3377 = vand.u32 2147483647, %v3337
    %vm3378 = vcmp.eq.f32.partialorder %v3377, 8.507059e+37
    %v3379 = vand.u32 %v3337, 2147483648
    %v3380 = vor.u32 1.1754944e-38, %v3379
    %v3381 = vsel %vm3378, %v3380, %v3376
    %v3382 = vmul.f32 1.0, %v3381
    %v3383 = vtanh.pop %v3325
    %v3384 = vmul.f32 %v3367, %v3089
    %v3385 = vmul.f32 %v3352, %v3383
    %v3386 = vadd.f32 %v3384, %v3385
    %v3387 = vtanh.pop %v3386
    %v3388 = vmul.f32 %v3382, %v3387
    %v3389 = vpack.c.bf16 %v3388, %v3388
    %v3390 = vld [vmem:[%s5] sm:$0xf]
    %v3391 = vld [vmem:[%s5 + $0x4] sm:$0xf]
    %v3392 = vld [vmem:[%s5 + $0x8] sm:$0xf]
    %v3393 = vld [vmem:[%s5 + $0xc] sm:$0xf]
    %v3394 = vld [vmem:[%s5 + $0x10] sm:$0xf]
    %v3395 = vld [vmem:[%s5 + $0x14] sm:$0xf]
    %v3396 = vld [vmem:[%s5 + $0x18] sm:$0xf]
    %v3397 = vld [vmem:[%s5 + $0x1c] sm:$0xf]
    %v3398 = vld [vmem:[%s5 + $0x20] sm:$0xf]
    %v3399 = vld [vmem:[%s5 + $0x24] sm:$0xf]
    %v3400 = vld [vmem:[%s5 + $0x28] sm:$0xf]
    %v3401 = vld [vmem:[%s5 + $0x2c] sm:$0xf]
    %v3402 = vld [vmem:[%s5 + $0x30] sm:$0xf]
    %v3403 = vld [vmem:[%s5 + $0x34] sm:$0xf]
    %v3404 = vld [vmem:[%s5 + $0x38] sm:$0xf]
    %v3405 = vld [vmem:[%s5 + $0x3c] sm:$0xf]
    %v3406 = vld [vmem:[%s6] sm:$0x1]
    %v3408 = vperm.slane %v3406, 0
    %v3426 = vunpack.c.l.b16 %v3390
    %v3427 = vunpack.c.l.b16 %v3391
    %v3428 = vunpack.c.l.b16 %v3392
    %v3429 = vunpack.c.l.b16 %v3393
    %v3430 = vunpack.c.l.b16 %v3394
    %v3431 = vunpack.c.l.b16 %v3395
    %v3432 = vunpack.c.l.b16 %v3396
    %v3433 = vunpack.c.l.b16 %v3397
    %v3434 = vunpack.c.l.b16 %v3398
    %v3435 = vunpack.c.l.b16 %v3399
    %v3436 = vunpack.c.l.b16 %v3400
    %v3437 = vunpack.c.l.b16 %v3401
    %v3438 = vunpack.c.l.b16 %v3402
    %v3439 = vunpack.c.l.b16 %v3403
    %v3440 = vunpack.c.l.b16 %v3404
    %v3441 = vunpack.c.l.b16 %v3405
    %v3442 = vpack.c.b16 %v3427, %v3426
    %v3443 = vpack.c.b16 %v3429, %v3428
    %v3444 = vpack.c.b16 %v3431, %v3430
    %v3445 = vpack.c.b16 %v3433, %v3432
    %v3446 = vpack.c.b16 %v3435, %v3434
    %v3447 = vpack.c.b16 %v3437, %v3436
    %v3448 = vpack.c.b16 %v3439, %v3438
    %v3449 = vpack.c.b16 %v3441, %v3440
    %3458 = vmatpush.bf16.msra.mxu0 %v3449
    %3459 = vmatpush.bf16.msra.mxu0 %v3448
    %3460 = vmatpush.bf16.msra.mxu0 %v3447
    %3461 = vmatpush.bf16.msra.mxu0 %v3446
    %3462 = vmatpush.bf16.msra.mxu0 %v3445
    %3463 = vmatpush.bf16.msra.mxu0 %v3444
    %3464 = vmatpush.bf16.msra.mxu0 %v3443
    %3465 = vmatpush.bf16.msra.mxu0 %v3442
    %3466 = vmatmul.bf16.gmra.mxu0 %v3389
    %v3467 = vpop.f32.mrf.mxu0
    %v3468 = vadd.f32 %v3408, %v3467
    %v3469 = vpop.f32.mrf.mxu0
    %3470 = vdwg.mxu0
    %v3471 = vmax.f32 %v3468, 0.0
    %v3472 = vpack.c.bf16 %v3471, %v3471
    %v3473 = vld [vmem:[%s7] sm:$0xf]
    %v3474 = vld [vmem:[%s7 + $0x4] sm:$0xf]
    %v3475 = vld [vmem:[%s7 + $0x8] sm:$0xf]
    %v3476 = vld [vmem:[%s7 + $0xc] sm:$0xf]
    %v3477 = vld [vmem:[%s7 + $0x10] sm:$0xf]
    %v3478 = vld [vmem:[%s7 + $0x14] sm:$0xf]
    %v3479 = vld [vmem:[%s7 + $0x18] sm:$0xf]
    %v3480 = vld [vmem:[%s7 + $0x1c] sm:$0xf]
    %v3481 = vld [vmem:[%s8] sm:$0x1]
    %v3483 = vperm.slane %v3481, 0
    %v3493 = vunpack.c.l.b16 %v3473
    %v3494 = vunpack.c.l.b16 %v3474
    %v3495 = vunpack.c.l.b16 %v3475
    %v3496 = vunpack.c.l.b16 %v3476
    %v3497 = vunpack.c.l.b16 %v3477
    %v3498 = vunpack.c.l.b16 %v3478
    %v3499 = vunpack.c.l.b16 %v3479
    %v3500 = vunpack.c.l.b16 %v3480
    %v3501 = vpack.c.b16 %v3494, %v3493
    %v3502 = vpack.c.b16 %v3496, %v3495
    %v3503 = vpack.c.b16 %v3498, %v3497
    %v3504 = vpack.c.b16 %v3500, %v3499
    %vm3509 = vcmask 523264
    %v3511 = vsel %vm3509, %v3472, 0
    %3513 = vmatpush.bf16.msra.mxu0 0
    %3514 = vmatpush.bf16.msra.mxu0 0
    %3515 = vmatpush.bf16.msra.mxu0 0
    %3516 = vmatpush.bf16.msra.mxu0 0
    %3517 = vmatpush.bf16.msra.mxu0 %v3504
    %3518 = vmatpush.bf16.msra.mxu0 %v3503
    %3519 = vmatpush.bf16.msra.mxu0 %v3502
    %3520 = vmatpush.bf16.msra.mxu0 %v3501
    %3521 = vmatmul.bf16.gmra.mxu0 %v3511
    %v3522 = vpop.f32.mrf.mxu0
    %v3523 = vadd.f32 %v3483, %v3522
    %v3524 = vpop.f32.mrf.mxu0
    %3525 = vdwg.mxu0
    %3526 = vst [vmem:[%s9] sm:$0xff] %v3523
    // Predicated region
    $region42: #{_forward_impl.1} parent=1 // pred_check
      _
    $region43: #{_forward_impl.1} parent=1 // pred_check_branch
      %3528 = sbr.rel (0) target = $region45
    $region44: #{_forward_impl.1} parent=1 // pred_region
      _
    $region45: #{_forward_impl.1} parent=1 // pred_fallthru
      _
    // Predicated region
    $region46: #{_forward_impl.1} parent=1 // pred_check
      _
    $region47: #{_forward_impl.1} parent=1 // pred_check_branch
      %3530 = sbr.rel (0) target = $region49
    $region48: #{_forward_impl.1} parent=1 // pred_region
      _
    $region49: #{_forward_impl.1} parent=1 // pred_fallthru
      _
    %3531 = vsyncpa [#allocation6], 1
  %3532 = vsyncmov [#allocation4]
  %s3533 = vpop.sfrf %3532
  %p3534 = scmp.eq.s32.totalorder %s3533, 0
  %p3535 = pneg %p3534
  %3537 = shalt.err (%p3535)

</llo_original>
